<compile_context>
chip_gen: v7x
topology: tpu7x:2x2x1
jax: 0.10.0
libtpu: 0.0.40
codegen_flags: <defaults>
</compile_context>

<pallas_src>
import jax
import jax.numpy as jnp
from jax.experimental import pallas as pl
from jax.experimental.pallas import tpu as pltpu

# ----------------------------- configuration -------------------------------
IN_CH      = 4     # input image channels
IN_CH_PAD  = 8     # zero-padded input channels (clean sublane tiling)
FEAT       = 32    # level_1_config['channel'] (shared feature width)
KPTS       = 8     # keypoints_num
LEVEL_NUM  = 2     # part_group_config['level_num']  (kernel assumes 2)
L1_PARTS   = 4     # level-1 parts_num (each predicts KPTS // L1_PARTS kpts)
L2_PARTS   = 2     # level-2 parts_num (each predicts KPTS // L2_PARTS kpts)
NUM_PREDS  = 1 + 3 * LEVEL_NUM          # origin + 3 passes * level_num = 7
OUT_CH     = NUM_PREDS * KPTS           # 56 channels in the stacked output
F128       = L1_PARTS * FEAT            # 128 level-1 feature channels
G64        = L2_PARTS * FEAT            # 64 level-2 feature channels
MAX_TILE_HW = 4096                      # pixels per grid step (VMEM-sized)

assert LEVEL_NUM == 2, "fused kernel is specialized for level_num == 2"


# ------------------------------ Pallas kernel -------------------------------
def _fused_network_kernel(x_ref,
                          wb_ref, bb_ref,       # backbone          (32, 8)
                          wA_ref, bAf_ref, bAp_ref,   # fused A     (136, 32)
                          wB_ref, bBf_ref, bBp_ref,   # fused B     (72, 128)
                          wg1_ref, bg1_ref,           # gl1 blocks  (64, 64)
                          wC_ref, bCp_ref,            # fused C     (136, 64)
                          o_ref):
    """Whole-network forward for one (channels, tile_hw) pixel tile."""
    f32 = jnp.float32
    bf16 = jnp.bfloat16

    def feat(acc, b):
        # f32 bias + ReLU epilogue, bf16 handoff to the next MXU matmul.
        return jnp.maximum(acc + b, 0.0).astype(bf16)

    x = x_ref[0]                                                   # (8, T) bf16
    shared = feat(jnp.dot(wb_ref[...], x, preferred_element_type=f32),
                  bb_ref[...])                                     # (32, T)

    # fused A: [4x gl0 part blocks (128) | origin head (8)] from shared.
    a = jnp.dot(wA_ref[...], shared, preferred_element_type=f32)   # (136, T)
    o_ref[0, 0:KPTS, :] = a[F128:F128 + KPTS] + bAp_ref[...]       # origin pred
    f128 = feat(a[0:F128], bAf_ref[...])                           # (128, T)

    # Three stacked passes; passes 2/3 restart group_level[0] from feats[0]
    # (channels 0:32 of f64) via the zero-padded rows of fused C, exactly as
    # in the source.  Weights are shared across passes (deepcopies).
    for p in range(3):
        r0 = KPTS + 2 * KPTS * p        # gl0 prediction rows of this pass
        r1 = r0 + KPTS                  # gl1 prediction rows of this pass

        # fused B: [2x grouping convs (64) | 4x gl0 pred heads (8)] from f128.
        b = jnp.dot(wB_ref[...], f128, preferred_element_type=f32)  # (72, T)
        o_ref[0, r0:r0 + KPTS, :] = b[G64:G64 + KPTS] + bBp_ref[...]
        g64 = feat(b[0:G64], bBf_ref[...])                          # (64, T)

        # group-level-2 part blocks (block-diagonal).
        f64 = feat(jnp.dot(wg1_ref[...], g64, preferred_element_type=f32),
                   bg1_ref[...])                                    # (64, T)

        if p < 2:
            # fused C: [gl0 restart blocks (128) | 2x gl1 pred heads (8)].
            c = jnp.dot(wC_ref[...], f64, preferred_element_type=f32)  # (136,T)
            o_ref[0, r1:r1 + KPTS, :] = c[F128:F128 + KPTS] + bCp_ref[...]
            # restart feature for the next pass shares the gl0 block bias.
            f128 = feat(c[0:F128], bAf_ref[...])
        else:
            # Last pass needs only the gl1 prediction rows of fused C.
            w_pred = wC_ref[pl.ds(F128, KPTS), :]                   # (8, 64)
            c = jnp.dot(w_pred, f64, preferred_element_type=f32)    # (8, T)
            o_ref[0, r1:r1 + KPTS, :] = c + bCp_ref[...]


# ------------------------------ parameters ----------------------------------
def _winit(key, cin, cout, scale=0.1):
    return scale * jax.random.normal(key, (cin, cout), dtype=jnp.float32)


def init_params(key):
    """Per-part (unfused) parameters, mirroring the module structure."""
    keys = iter(jax.random.split(key, 64))
    p = {}
    p["backbone_w"] = _winit(next(keys), IN_CH, FEAT)
    p["backbone_b"] = jnp.zeros((FEAT,), jnp.float32)
    p["origin_w"] = _winit(next(keys), FEAT, KPTS)          # relu=False head
    p["origin_b"] = jnp.zeros((KPTS,), jnp.float32)
    k1 = KPTS // L1_PARTS
    p["gl0_block_w"] = [_winit(next(keys), FEAT, FEAT) for _ in range(L1_PARTS)]
    p["gl0_block_b"] = [jnp.zeros((FEAT,), jnp.float32) for _ in range(L1_PARTS)]
    p["gl0_pred_w"] = [_winit(next(keys), FEAT, k1) for _ in range(L1_PARTS)]
    p["gl0_pred_b"] = [jnp.zeros((k1,), jnp.float32) for _ in range(L1_PARTS)]
    p["grp_w"] = [_winit(next(keys), 2 * FEAT, FEAT) for _ in range(L2_PARTS)]
    p["grp_b"] = [jnp.zeros((FEAT,), jnp.float32) for _ in range(L2_PARTS)]
    k2 = KPTS // L2_PARTS
    p["gl1_block_w"] = [_winit(next(keys), FEAT, FEAT) for _ in range(L2_PARTS)]
    p["gl1_block_b"] = [jnp.zeros((FEAT,), jnp.float32) for _ in range(L2_PARTS)]
    p["gl1_pred_w"] = [_winit(next(keys), FEAT, k2) for _ in range(L2_PARTS)]
    p["gl1_pred_b"] = [jnp.zeros((k2,), jnp.float32) for _ in range(L2_PARTS)]
    return p


_ARG_ORDER = ("wb", "bb", "wA", "bAf", "bAp", "wB", "bBf", "bBp",
              "wg1", "bg1", "wC", "bCp")


def _block_diag(blocks, cin, cout):
    n = len(blocks)
    w = jnp.zeros((n * cin, n * cout), jnp.float32)
    for i, blk in enumerate(blocks):
        w = w.at[i * cin:(i + 1) * cin, i * cout:(i + 1) * cout].set(blk)
    return w


def pack_params(p):
    """Pack per-part weights into transposed, head-fused (Cout, Cin) matrices."""
    bf16 = jnp.bfloat16
    k1 = KPTS // L1_PARTS
    k2 = KPTS // L2_PARTS

    wg0b = jnp.concatenate(p["gl0_block_w"], axis=1)            # (32, 128)
    bg0b = jnp.concatenate(p["gl0_block_b"], axis=0)            # (128,)
    wg0p = _block_diag(p["gl0_pred_w"], FEAT, k1)               # (128, 8)
    bg0p = jnp.concatenate(p["gl0_pred_b"], axis=0)             # (8,)
    wgrp = _block_diag(p["grp_w"], 2 * FEAT, FEAT)              # (128, 64)
    bgrp = jnp.concatenate(p["grp_b"], axis=0)                  # (64,)
    wg1b = _block_diag(p["gl1_block_w"], FEAT, FEAT)            # (64, 64)
    bg1b = jnp.concatenate(p["gl1_block_b"], axis=0)            # (64,)
    wg1p = _block_diag(p["gl1_pred_w"], FEAT, k2)               # (64, 8)
    bg1p = jnp.concatenate(p["gl1_pred_b"], axis=0)             # (8,)

    # backbone zero-padded to 8 input channels (extra rows are exact zeros).
    wb_rm = jnp.zeros((IN_CH_PAD, FEAT), jnp.float32).at[:IN_CH].set(
        p["backbone_w"])

    # fused A: shared(32) -> [f128 (128) | origin preds (8)]
    wA_rm = jnp.concatenate([wg0b, p["origin_w"]], axis=1)      # (32, 136)
    # fused B: f128(128) -> [g64 (64) | gl0 preds (8)]
    wB_rm = jnp.concatenate([wgrp, wg0p], axis=1)               # (128, 72)
    # fused C: f64(64) -> [restart f128 (128) | gl1 preds (8)]; the restart
    # reads only feats[0] = f64 channels 0:32, so rows 32:64 are exact zeros.
    wg0b_restart = jnp.concatenate(
        [wg0b, jnp.zeros((FEAT, F128), jnp.float32)], axis=0)   # (64, 128)
    wC_rm = jnp.concatenate([wg0b_restart, wg1p], axis=1)       # (64, 136)

    def col(v):
        return v.reshape(-1, 1).astype(jnp.float32)             # (Cout, 1) f32

    return dict(
        wb=wb_rm.T.astype(bf16),          # (32, 8)
        bb=col(p["backbone_b"]),
        wA=wA_rm.T.astype(bf16),          # (136, 32)
        bAf=col(bg0b),                    # (128, 1)  gl0 block bias (+ restart)
        bAp=col(p["origin_b"]),           # (8, 1)
        wB=wB_rm.T.astype(bf16),          # (72, 128)
        bBf=col(bgrp),                    # (64, 1)
        bBp=col(bg0p),                    # (8, 1)
        wg1=wg1b.T.astype(bf16),          # (64, 64)
        bg1=col(bg1b),                    # (64, 1)
        wC=wC_rm.T.astype(bf16),          # (136, 64)
        bCp=col(bg1p),                    # (8, 1)
    )


# ------------------------------ forward pass ---------------------------------
def _round_up(v, m):
    return (v + m - 1) // m * m


def stacked_group_network_forward(packed, x_nchw):
    B, C, H, W = x_nchw.shape
    hw = H * W

    # Tile sizing: as large as VMEM comfortably allows, but force >= 2 total
    # grid steps when possible so the "parallel" axes shard across both
    # TensorCores on v7x (no effect on v5e/v6e).
    n_hw_tiles = max(pl.cdiv(hw, MAX_TILE_HW), 1)
    if B * n_hw_tiles < 2 and hw > 128:
        n_hw_tiles = 2
    tile_hw = _round_up(pl.cdiv(hw, n_hw_tiles), 128)
    n_hw_tiles = pl.cdiv(hw, tile_hw)
    hw_pad = n_hw_tiles * tile_hw

    # NCHW -> (B, Cin_pad, hw_pad): pure reshape + zero pad, NO transpose.
    x3 = x_nchw.reshape(B, C, hw)
    x3 = jnp.pad(x3, ((0, 0), (0, IN_CH_PAD - C), (0, hw_pad - hw)))
    x3 = x3.astype(jnp.bfloat16)

    w_args = [packed[k] for k in _ARG_ORDER]
    w_specs = [pl.BlockSpec(a.shape, lambda b, t: (0, 0)) for a in w_args]

    macs_per_px = (IN_CH_PAD * FEAT + FEAT * (F128 + KPTS)
                   + 3 * (F128 * (G64 + KPTS) + G64 * G64)
                   + 2 * (G64 * (F128 + KPTS)) + G64 * KPTS)
    m_total = B * hw_pad
    cost = pl.CostEstimate(
        flops=2 * macs_per_px * m_total,
        transcendentals=0,
        bytes_accessed=m_total * (IN_CH_PAD * 2 + OUT_CH * 4)
        + sum(int(a.size) * a.dtype.itemsize for a in w_args))

    out3 = pl.pallas_call(
        _fused_network_kernel,
        out_shape=jax.ShapeDtypeStruct((B, OUT_CH, hw_pad), jnp.float32),
        grid_spec=pltpu.PrefetchScalarGridSpec(
            num_scalar_prefetch=0,
            grid=(B, n_hw_tiles),
            in_specs=[pl.BlockSpec((1, IN_CH_PAD, tile_hw),
                                   lambda b, t: (b, 0, t))] + w_specs,
            out_specs=pl.BlockSpec((1, OUT_CH, tile_hw),
                                   lambda b, t: (b, 0, t)),
        ),
        compiler_params=pltpu.CompilerParams(
            dimension_semantics=("parallel", "parallel"),
            vmem_limit_bytes=48 * 1024 * 1024),
        cost_estimate=cost,
    )(x3, *w_args)

    out3 = out3[:, :, :hw]
    # (B, 56, H*W) -> (B, NUM_PREDS, KPTS, H, W): pure reshape, NO transpose —
    # matches torch.stack(all_level_predictions, 1) on NCHW predictions.
    return out3.reshape(B, NUM_PREDS, KPTS, H, W)


# -------------------- pure-JAX per-part reference (check) --------------------
def _reference_forward(p, x_nchw):
    """Unfused per-part reference mirroring the kernel's cast points."""
    bf16 = jnp.bfloat16

    def mat(x_bf16, w):
        return jnp.dot(x_bf16, w.astype(bf16), preferred_element_type=jnp.float32)

    def conv_feat(x_bf16, w, b):
        return jnp.maximum(mat(x_bf16, w) + b, 0.0).astype(bf16)

    def conv_pred(x_bf16, w, b):
        return mat(x_bf16, w) + b

    B, C, H, W = x_nchw.shape
    x = jnp.transpose(x_nchw, (0, 2, 3, 1)).reshape(B * H * W, C).astype(bf16)
    shared = conv_feat(x, p["backbone_w"], p["backbone_b"])
    preds = [conv_pred(shared, p["origin_w"], p["origin_b"])]

    def group_level0(feat):
        fs, ps = [], []
        for i in range(L1_PARTS):
            f = conv_feat(feat, p["gl0_block_w"][i], p["gl0_block_b"][i])
            fs.append(f)
            ps.append(conv_pred(f, p["gl0_pred_w"][i], p["gl0_pred_b"][i]))
        return jnp.concatenate(ps, -1), fs

    def grouping0(fs):
        return [conv_feat(jnp.concatenate([fs[2 * g], fs[2 * g + 1]], -1),
                          p["grp_w"][g], p["grp_b"][g]) for g in range(L2_PARTS)]

    def group_level1(fs):
        nfs, ps = [], []
        for i in range(L2_PARTS):
            f = conv_feat(fs[i], p["gl1_block_w"][i], p["gl1_block_b"][i])
            nfs.append(f)
            ps.append(conv_pred(f, p["gl1_pred_w"][i], p["gl1_pred_b"][i]))
        return jnp.concatenate(ps, -1), nfs

    pred, feats = group_level0(shared)
    preds.append(pred)
    for _ in range(1, LEVEL_NUM):
        feats = grouping0(feats)
        pred, feats = group_level1(feats)
        preds.append(pred)
    for _ in range(2):                       # passes 2 and 3
        pred, feats = group_level0(feats[0])
        preds.append(pred)
        for _ in range(1, LEVEL_NUM):
            feats = grouping0(feats)
            pred, feats = group_level1(feats)
            preds.append(pred)

    out = jnp.concatenate(preds, -1).reshape(B, H, W, NUM_PREDS, KPTS)
    return jnp.transpose(out, (0, 3, 4, 1, 2))


# ---------------------------------- main -------------------------------------
if __name__ == "__main__":
    key = jax.random.PRNGKey(0)
    pkey, xkey = jax.random.split(key)
    params = init_params(pkey)
    packed = pack_params(params)

    B, H, W = 2, 16, 16
    x = jax.random.normal(xkey, (B, IN_CH, H, W), dtype=jnp.float32)

    fwd = jax.jit(stacked_group_network_forward)
    out = fwd(packed, x)
    jax.block_until_ready(out)

    expected = (B, NUM_PREDS, KPTS, H, W)
    assert out.shape == expected, (out.shape, expected)

    # Validate the fused / block-diagonal / transposed packing against the
    # per-part math (kernel and reference share the same bf16 cast points;
    # residual error comes only from MXU accumulation order).
    ref = _reference_forward(params, x)
    max_err = float(jnp.max(jnp.abs(out - ref)))
    assert jnp.allclose(out, ref, atol=1e-2, rtol=5e-2), max_err

    print("KERNEL_OK")
</pallas_src>

<mosaic_0001>
module attributes {stable_mosaic.version = 11 : i64} {
  func.func @_fused_network_kernel(%arg0: i32, %arg1: i32, %arg2: memref<1x8x256xbf16, #tpu.memory_space<vmem>>, %arg3: memref<32x8xbf16, #tpu.memory_space<vmem>>, %arg4: memref<32x1xf32, #tpu.memory_space<vmem>>, %arg5: memref<136x32xbf16, #tpu.memory_space<vmem>>, %arg6: memref<128x1xf32, #tpu.memory_space<vmem>>, %arg7: memref<8x1xf32, #tpu.memory_space<vmem>>, %arg8: memref<72x128xbf16, #tpu.memory_space<vmem>>, %arg9: memref<64x1xf32, #tpu.memory_space<vmem>>, %arg10: memref<8x1xf32, #tpu.memory_space<vmem>>, %arg11: memref<64x64xbf16, #tpu.memory_space<vmem>>, %arg12: memref<64x1xf32, #tpu.memory_space<vmem>>, %arg13: memref<136x64xbf16, #tpu.memory_space<vmem>>, %arg14: memref<8x1xf32, #tpu.memory_space<vmem>>, %arg15: memref<1x56x256xf32, #tpu.memory_space<vmem>>) attributes {dimension_semantics = [#tpu.dimension_semantics<parallel>, #tpu.dimension_semantics<parallel>], iteration_bounds = array<i64: 2, 1>, scalar_prefetch = 0 : i64, scratch_operands = 0 : i64, tpu.core_type = #tpu.core_type<tc>, window_params = [{transform_indices = @transform_0, window_bounds = array<i64: 1, 8, 256>}, {pipeline_mode = #tpu.pipeline_mode<synchronous>, transform_indices = @transform_1, window_bounds = array<i64: 32, 8>}, {pipeline_mode = #tpu.pipeline_mode<synchronous>, transform_indices = @transform_2, window_bounds = array<i64: 32, 1>}, {pipeline_mode = #tpu.pipeline_mode<synchronous>, transform_indices = @transform_3, window_bounds = array<i64: 136, 32>}, {pipeline_mode = #tpu.pipeline_mode<synchronous>, transform_indices = @transform_4, window_bounds = array<i64: 128, 1>}, {pipeline_mode = #tpu.pipeline_mode<synchronous>, transform_indices = @transform_5, window_bounds = array<i64: 8, 1>}, {pipeline_mode = #tpu.pipeline_mode<synchronous>, transform_indices = @transform_6, window_bounds = array<i64: 72, 128>}, {pipeline_mode = #tpu.pipeline_mode<synchronous>, transform_indices = @transform_7, window_bounds = array<i64: 64, 1>}, {pipeline_mode = #tpu.pipeline_mode<synchronous>, transform_indices = @transform_8, window_bounds = array<i64: 8, 1>}, {pipeline_mode = #tpu.pipeline_mode<synchronous>, transform_indices = @transform_9, window_bounds = array<i64: 64, 64>}, {pipeline_mode = #tpu.pipeline_mode<synchronous>, transform_indices = @transform_10, window_bounds = array<i64: 64, 1>}, {pipeline_mode = #tpu.pipeline_mode<synchronous>, transform_indices = @transform_11, window_bounds = array<i64: 136, 64>}, {pipeline_mode = #tpu.pipeline_mode<synchronous>, transform_indices = @transform_12, window_bounds = array<i64: 8, 1>}, {transform_indices = @transform_13, window_bounds = array<i64: 1, 56, 256>}]} {
    %c0 = arith.constant 0 : index
    %c0_0 = arith.constant 0 : index
    %c0_1 = arith.constant 0 : index
    %0 = vector.load %arg2[%c0, %c0_0, %c0_1] : memref<1x8x256xbf16, #tpu.memory_space<vmem>>, vector<1x8x256xbf16>
    %1 = vector.shape_cast %0 : vector<1x8x256xbf16> to vector<8x256xbf16>
    %c0_2 = arith.constant 0 : index
    %c0_3 = arith.constant 0 : index
    %2 = vector.load %arg3[%c0_2, %c0_3] : memref<32x8xbf16, #tpu.memory_space<vmem>>, vector<32x8xbf16>
    %cst = arith.constant dense<0.000000e+00> : vector<32x256xf32>
    %3 = tpu.matmul %2, %1, %cst {dimension_numbers = #tpu.dot_dimension_numbers<[1], [0], [0], [1], [0, 0, 1, 1], [], []>} : vector<32x8xbf16>, vector<8x256xbf16>, vector<32x256xf32> -> vector<32x256xf32>
    %c0_4 = arith.constant 0 : index
    %c0_5 = arith.constant 0 : index
    %4 = vector.load %arg4[%c0_4, %c0_5] : memref<32x1xf32, #tpu.memory_space<vmem>>, vector<32x1xf32>
    %5 = vector.broadcast %4 : vector<32x1xf32> to vector<32x256xf32>
    %6 = arith.addf %3, %5 : vector<32x256xf32>
    %cst_6 = arith.constant 0.000000e+00 : f32
    %7 = vector.broadcast %cst_6 : f32 to vector<32x256xf32>
    %8 = arith.maximumf %6, %7 : vector<32x256xf32>
    %9 = arith.truncf %8 : vector<32x256xf32> to vector<32x256xbf16>
    %c0_7 = arith.constant 0 : index
    %c0_8 = arith.constant 0 : index
    %10 = vector.load %arg5[%c0_7, %c0_8] : memref<136x32xbf16, #tpu.memory_space<vmem>>, vector<136x32xbf16>
    %cst_9 = arith.constant dense<0.000000e+00> : vector<136x256xf32>
    %11 = tpu.matmul %10, %9, %cst_9 {dimension_numbers = #tpu.dot_dimension_numbers<[1], [0], [0], [1], [0, 0, 1, 1], [], []>} : vector<136x32xbf16>, vector<32x256xbf16>, vector<136x256xf32> -> vector<136x256xf32>
    %12 = vector.extract_strided_slice %11 {offsets = [128, 0], sizes = [8, 256], strides = [1, 1]} : vector<136x256xf32> to vector<8x256xf32>
    %c0_10 = arith.constant 0 : index
    %c0_11 = arith.constant 0 : index
    %13 = vector.load %arg7[%c0_10, %c0_11] : memref<8x1xf32, #tpu.memory_space<vmem>>, vector<8x1xf32>
    %14 = vector.broadcast %13 : vector<8x1xf32> to vector<8x256xf32>
    %15 = arith.addf %12, %14 : vector<8x256xf32>
    %c0_12 = arith.constant 0 : index
    %c0_13 = arith.constant 0 : index
    %c0_14 = arith.constant 0 : index
    %16 = vector.load %arg15[%c0_12, %c0_13, %c0_14] : memref<1x56x256xf32, #tpu.memory_space<vmem>>, vector<1x8x256xf32>
    %17 = vector.shape_cast %16 : vector<1x8x256xf32> to vector<8x256xf32>
    %18 = vector.shape_cast %15 : vector<8x256xf32> to vector<1x8x256xf32>
    tpu.vector_store %arg15[%c0_12, %c0_13, %c0_14], %18 {strides = array<i32>} : memref<1x56x256xf32, #tpu.memory_space<vmem>>, vector<1x8x256xf32>,
    %19 = vector.extract_strided_slice %11 {offsets = [0, 0], sizes = [128, 256], strides = [1, 1]} : vector<136x256xf32> to vector<128x256xf32>
    %c0_15 = arith.constant 0 : index
    %c0_16 = arith.constant 0 : index
    %20 = vector.load %arg6[%c0_15, %c0_16] : memref<128x1xf32, #tpu.memory_space<vmem>>, vector<128x1xf32>
    %21 = vector.broadcast %20 : vector<128x1xf32> to vector<128x256xf32>
    %22 = arith.addf %19, %21 : vector<128x256xf32>
    %cst_17 = arith.constant 0.000000e+00 : f32
    %23 = vector.broadcast %cst_17 : f32 to vector<128x256xf32>
    %24 = arith.maximumf %22, %23 : vector<128x256xf32>
    %25 = arith.truncf %24 : vector<128x256xf32> to vector<128x256xbf16>
    %c0_18 = arith.constant 0 : index
    %c0_19 = arith.constant 0 : index
    %26 = vector.load %arg8[%c0_18, %c0_19] : memref<72x128xbf16, #tpu.memory_space<vmem>>, vector<72x128xbf16>
    %cst_20 = arith.constant dense<0.000000e+00> : vector<72x256xf32>
    %27 = tpu.matmul %26, %25, %cst_20 {dimension_numbers = #tpu.dot_dimension_numbers<[1], [0], [0], [1], [0, 0, 1, 1], [], []>} : vector<72x128xbf16>, vector<128x256xbf16>, vector<72x256xf32> -> vector<72x256xf32>
    %28 = vector.extract_strided_slice %27 {offsets = [64, 0], sizes = [8, 256], strides = [1, 1]} : vector<72x256xf32> to vector<8x256xf32>
    %c0_21 = arith.constant 0 : index
    %c0_22 = arith.constant 0 : index
    %29 = vector.load %arg10[%c0_21, %c0_22] : memref<8x1xf32, #tpu.memory_space<vmem>>, vector<8x1xf32>
    %30 = vector.broadcast %29 : vector<8x1xf32> to vector<8x256xf32>
    %31 = arith.addf %28, %30 : vector<8x256xf32>
    %c0_23 = arith.constant 0 : index
    %c8 = arith.constant 8 : index
    %c0_24 = arith.constant 0 : index
    %32 = vector.load %arg15[%c0_23, %c8, %c0_24] : memref<1x56x256xf32, #tpu.memory_space<vmem>>, vector<1x8x256xf32>
    %33 = vector.shape_cast %32 : vector<1x8x256xf32> to vector<8x256xf32>
    %34 = vector.shape_cast %31 : vector<8x256xf32> to vector<1x8x256xf32>
    tpu.vector_store %arg15[%c0_23, %c8, %c0_24], %34 {strides = array<i32>} : memref<1x56x256xf32, #tpu.memory_space<vmem>>, vector<1x8x256xf32>,
    %35 = vector.extract_strided_slice %27 {offsets = [0, 0], sizes = [64, 256], strides = [1, 1]} : vector<72x256xf32> to vector<64x256xf32>
    %c0_25 = arith.constant 0 : index
    %c0_26 = arith.constant 0 : index
    %36 = vector.load %arg9[%c0_25, %c0_26] : memref<64x1xf32, #tpu.memory_space<vmem>>, vector<64x1xf32>
    %37 = vector.broadcast %36 : vector<64x1xf32> to vector<64x256xf32>
    %38 = arith.addf %35, %37 : vector<64x256xf32>
    %cst_27 = arith.constant 0.000000e+00 : f32
    %39 = vector.broadcast %cst_27 : f32 to vector<64x256xf32>
    %40 = arith.maximumf %38, %39 : vector<64x256xf32>
    %41 = arith.truncf %40 : vector<64x256xf32> to vector<64x256xbf16>
    %c0_28 = arith.constant 0 : index
    %c0_29 = arith.constant 0 : index
    %42 = vector.load %arg11[%c0_28, %c0_29] : memref<64x64xbf16, #tpu.memory_space<vmem>>, vector<64x64xbf16>
    %cst_30 = arith.constant dense<0.000000e+00> : vector<64x256xf32>
    %43 = tpu.matmul %42, %41, %cst_30 {dimension_numbers = #tpu.dot_dimension_numbers<[1], [0], [0], [1], [0, 0, 1, 1], [], []>} : vector<64x64xbf16>, vector<64x256xbf16>, vector<64x256xf32> -> vector<64x256xf32>
    %c0_31 = arith.constant 0 : index
    %c0_32 = arith.constant 0 : index
    %44 = vector.load %arg12[%c0_31, %c0_32] : memref<64x1xf32, #tpu.memory_space<vmem>>, vector<64x1xf32>
    %45 = vector.broadcast %44 : vector<64x1xf32> to vector<64x256xf32>
    %46 = arith.addf %43, %45 : vector<64x256xf32>
    %cst_33 = arith.constant 0.000000e+00 : f32
    %47 = vector.broadcast %cst_33 : f32 to vector<64x256xf32>
    %48 = arith.maximumf %46, %47 : vector<64x256xf32>
    %49 = arith.truncf %48 : vector<64x256xf32> to vector<64x256xbf16>
    %c0_34 = arith.constant 0 : index
    %c0_35 = arith.constant 0 : index
    %50 = vector.load %arg13[%c0_34, %c0_35] : memref<136x64xbf16, #tpu.memory_space<vmem>>, vector<136x64xbf16>
    %cst_36 = arith.constant dense<0.000000e+00> : vector<136x256xf32>
    %51 = tpu.matmul %50, %49, %cst_36 {dimension_numbers = #tpu.dot_dimension_numbers<[1], [0], [0], [1], [0, 0, 1, 1], [], []>} : vector<136x64xbf16>, vector<64x256xbf16>, vector<136x256xf32> -> vector<136x256xf32>
    %52 = vector.extract_strided_slice %51 {offsets = [128, 0], sizes = [8, 256], strides = [1, 1]} : vector<136x256xf32> to vector<8x256xf32>
    %c0_37 = arith.constant 0 : index
    %c0_38 = arith.constant 0 : index
    %53 = vector.load %arg14[%c0_37, %c0_38] : memref<8x1xf32, #tpu.memory_space<vmem>>, vector<8x1xf32>
    %54 = vector.broadcast %53 : vector<8x1xf32> to vector<8x256xf32>
    %55 = arith.addf %52, %54 : vector<8x256xf32>
    %c0_39 = arith.constant 0 : index
    %c16 = arith.constant 16 : index
    %c0_40 = arith.constant 0 : index
    %56 = vector.load %arg15[%c0_39, %c16, %c0_40] : memref<1x56x256xf32, #tpu.memory_space<vmem>>, vector<1x8x256xf32>
    %57 = vector.shape_cast %56 : vector<1x8x256xf32> to vector<8x256xf32>
    %58 = vector.shape_cast %55 : vector<8x256xf32> to vector<1x8x256xf32>
    tpu.vector_store %arg15[%c0_39, %c16, %c0_40], %58 {strides = array<i32>} : memref<1x56x256xf32, #tpu.memory_space<vmem>>, vector<1x8x256xf32>,
    %59 = vector.extract_strided_slice %51 {offsets = [0, 0], sizes = [128, 256], strides = [1, 1]} : vector<136x256xf32> to vector<128x256xf32>
    %c0_41 = arith.constant 0 : index
    %c0_42 = arith.constant 0 : index
    %60 = vector.load %arg6[%c0_41, %c0_42] : memref<128x1xf32, #tpu.memory_space<vmem>>, vector<128x1xf32>
    %61 = vector.broadcast %60 : vector<128x1xf32> to vector<128x256xf32>
    %62 = arith.addf %59, %61 : vector<128x256xf32>
    %cst_43 = arith.constant 0.000000e+00 : f32
    %63 = vector.broadcast %cst_43 : f32 to vector<128x256xf32>
    %64 = arith.maximumf %62, %63 : vector<128x256xf32>
    %65 = arith.truncf %64 : vector<128x256xf32> to vector<128x256xbf16>
    %c0_44 = arith.constant 0 : index
    %c0_45 = arith.constant 0 : index
    %66 = vector.load %arg8[%c0_44, %c0_45] : memref<72x128xbf16, #tpu.memory_space<vmem>>, vector<72x128xbf16>
    %cst_46 = arith.constant dense<0.000000e+00> : vector<72x256xf32>
    %67 = tpu.matmul %66, %65, %cst_46 {dimension_numbers = #tpu.dot_dimension_numbers<[1], [0], [0], [1], [0, 0, 1, 1], [], []>} : vector<72x128xbf16>, vector<128x256xbf16>, vector<72x256xf32> -> vector<72x256xf32>
    %68 = vector.extract_strided_slice %67 {offsets = [64, 0], sizes = [8, 256], strides = [1, 1]} : vector<72x256xf32> to vector<8x256xf32>
    %c0_47 = arith.constant 0 : index
    %c0_48 = arith.constant 0 : index
    %69 = vector.load %arg10[%c0_47, %c0_48] : memref<8x1xf32, #tpu.memory_space<vmem>>, vector<8x1xf32>
    %70 = vector.broadcast %69 : vector<8x1xf32> to vector<8x256xf32>
    %71 = arith.addf %68, %70 : vector<8x256xf32>
    %c0_49 = arith.constant 0 : index
    %c24 = arith.constant 24 : index
    %c0_50 = arith.constant 0 : index
    %72 = vector.load %arg15[%c0_49, %c24, %c0_50] : memref<1x56x256xf32, #tpu.memory_space<vmem>>, vector<1x8x256xf32>
    %73 = vector.shape_cast %72 : vector<1x8x256xf32> to vector<8x256xf32>
    %74 = vector.shape_cast %71 : vector<8x256xf32> to vector<1x8x256xf32>
    tpu.vector_store %arg15[%c0_49, %c24, %c0_50], %74 {strides = array<i32>} : memref<1x56x256xf32, #tpu.memory_space<vmem>>, vector<1x8x256xf32>,
    %75 = vector.extract_strided_slice %67 {offsets = [0, 0], sizes = [64, 256], strides = [1, 1]} : vector<72x256xf32> to vector<64x256xf32>
    %c0_51 = arith.constant 0 : index
    %c0_52 = arith.constant 0 : index
    %76 = vector.load %arg9[%c0_51, %c0_52] : memref<64x1xf32, #tpu.memory_space<vmem>>, vector<64x1xf32>
    %77 = vector.broadcast %76 : vector<64x1xf32> to vector<64x256xf32>
    %78 = arith.addf %75, %77 : vector<64x256xf32>
    %cst_53 = arith.constant 0.000000e+00 : f32
    %79 = vector.broadcast %cst_53 : f32 to vector<64x256xf32>
    %80 = arith.maximumf %78, %79 : vector<64x256xf32>
    %81 = arith.truncf %80 : vector<64x256xf32> to vector<64x256xbf16>
    %c0_54 = arith.constant 0 : index
    %c0_55 = arith.constant 0 : index
    %82 = vector.load %arg11[%c0_54, %c0_55] : memref<64x64xbf16, #tpu.memory_space<vmem>>, vector<64x64xbf16>
    %cst_56 = arith.constant dense<0.000000e+00> : vector<64x256xf32>
    %83 = tpu.matmul %82, %81, %cst_56 {dimension_numbers = #tpu.dot_dimension_numbers<[1], [0], [0], [1], [0, 0, 1, 1], [], []>} : vector<64x64xbf16>, vector<64x256xbf16>, vector<64x256xf32> -> vector<64x256xf32>
    %c0_57 = arith.constant 0 : index
    %c0_58 = arith.constant 0 : index
    %84 = vector.load %arg12[%c0_57, %c0_58] : memref<64x1xf32, #tpu.memory_space<vmem>>, vector<64x1xf32>
    %85 = vector.broadcast %84 : vector<64x1xf32> to vector<64x256xf32>
    %86 = arith.addf %83, %85 : vector<64x256xf32>
    %cst_59 = arith.constant 0.000000e+00 : f32
    %87 = vector.broadcast %cst_59 : f32 to vector<64x256xf32>
    %88 = arith.maximumf %86, %87 : vector<64x256xf32>
    %89 = arith.truncf %88 : vector<64x256xf32> to vector<64x256xbf16>
    %c0_60 = arith.constant 0 : index
    %c0_61 = arith.constant 0 : index
    %90 = vector.load %arg13[%c0_60, %c0_61] : memref<136x64xbf16, #tpu.memory_space<vmem>>, vector<136x64xbf16>
    %cst_62 = arith.constant dense<0.000000e+00> : vector<136x256xf32>
    %91 = tpu.matmul %90, %89, %cst_62 {dimension_numbers = #tpu.dot_dimension_numbers<[1], [0], [0], [1], [0, 0, 1, 1], [], []>} : vector<136x64xbf16>, vector<64x256xbf16>, vector<136x256xf32> -> vector<136x256xf32>
    %92 = vector.extract_strided_slice %91 {offsets = [128, 0], sizes = [8, 256], strides = [1, 1]} : vector<136x256xf32> to vector<8x256xf32>
    %c0_63 = arith.constant 0 : index
    %c0_64 = arith.constant 0 : index
    %93 = vector.load %arg14[%c0_63, %c0_64] : memref<8x1xf32, #tpu.memory_space<vmem>>, vector<8x1xf32>
    %94 = vector.broadcast %93 : vector<8x1xf32> to vector<8x256xf32>
    %95 = arith.addf %92, %94 : vector<8x256xf32>
    %c0_65 = arith.constant 0 : index
    %c32 = arith.constant 32 : index
    %c0_66 = arith.constant 0 : index
    %96 = vector.load %arg15[%c0_65, %c32, %c0_66] : memref<1x56x256xf32, #tpu.memory_space<vmem>>, vector<1x8x256xf32>
    %97 = vector.shape_cast %96 : vector<1x8x256xf32> to vector<8x256xf32>
    %98 = vector.shape_cast %95 : vector<8x256xf32> to vector<1x8x256xf32>
    tpu.vector_store %arg15[%c0_65, %c32, %c0_66], %98 {strides = array<i32>} : memref<1x56x256xf32, #tpu.memory_space<vmem>>, vector<1x8x256xf32>,
    %99 = vector.extract_strided_slice %91 {offsets = [0, 0], sizes = [128, 256], strides = [1, 1]} : vector<136x256xf32> to vector<128x256xf32>
    %c0_67 = arith.constant 0 : index
    %c0_68 = arith.constant 0 : index
    %100 = vector.load %arg6[%c0_67, %c0_68] : memref<128x1xf32, #tpu.memory_space<vmem>>, vector<128x1xf32>
    %101 = vector.broadcast %100 : vector<128x1xf32> to vector<128x256xf32>
    %102 = arith.addf %99, %101 : vector<128x256xf32>
    %cst_69 = arith.constant 0.000000e+00 : f32
    %103 = vector.broadcast %cst_69 : f32 to vector<128x256xf32>
    %104 = arith.maximumf %102, %103 : vector<128x256xf32>
    %105 = arith.truncf %104 : vector<128x256xf32> to vector<128x256xbf16>
    %c0_70 = arith.constant 0 : index
    %c0_71 = arith.constant 0 : index
    %106 = vector.load %arg8[%c0_70, %c0_71] : memref<72x128xbf16, #tpu.memory_space<vmem>>, vector<72x128xbf16>
    %cst_72 = arith.constant dense<0.000000e+00> : vector<72x256xf32>
    %107 = tpu.matmul %106, %105, %cst_72 {dimension_numbers = #tpu.dot_dimension_numbers<[1], [0], [0], [1], [0, 0, 1, 1], [], []>} : vector<72x128xbf16>, vector<128x256xbf16>, vector<72x256xf32> -> vector<72x256xf32>
    %108 = vector.extract_strided_slice %107 {offsets = [64, 0], sizes = [8, 256], strides = [1, 1]} : vector<72x256xf32> to vector<8x256xf32>
    %c0_73 = arith.constant 0 : index
    %c0_74 = arith.constant 0 : index
    %109 = vector.load %arg10[%c0_73, %c0_74] : memref<8x1xf32, #tpu.memory_space<vmem>>, vector<8x1xf32>
    %110 = vector.broadcast %109 : vector<8x1xf32> to vector<8x256xf32>
    %111 = arith.addf %108, %110 : vector<8x256xf32>
    %c0_75 = arith.constant 0 : index
    %c40 = arith.constant 40 : index
    %c0_76 = arith.constant 0 : index
    %112 = vector.load %arg15[%c0_75, %c40, %c0_76] : memref<1x56x256xf32, #tpu.memory_space<vmem>>, vector<1x8x256xf32>
    %113 = vector.shape_cast %112 : vector<1x8x256xf32> to vector<8x256xf32>
    %114 = vector.shape_cast %111 : vector<8x256xf32> to vector<1x8x256xf32>
    tpu.vector_store %arg15[%c0_75, %c40, %c0_76], %114 {strides = array<i32>} : memref<1x56x256xf32, #tpu.memory_space<vmem>>, vector<1x8x256xf32>,
    %115 = vector.extract_strided_slice %107 {offsets = [0, 0], sizes = [64, 256], strides = [1, 1]} : vector<72x256xf32> to vector<64x256xf32>
    %c0_77 = arith.constant 0 : index
    %c0_78 = arith.constant 0 : index
    %116 = vector.load %arg9[%c0_77, %c0_78] : memref<64x1xf32, #tpu.memory_space<vmem>>, vector<64x1xf32>
    %117 = vector.broadcast %116 : vector<64x1xf32> to vector<64x256xf32>
    %118 = arith.addf %115, %117 : vector<64x256xf32>
    %cst_79 = arith.constant 0.000000e+00 : f32
    %119 = vector.broadcast %cst_79 : f32 to vector<64x256xf32>
    %120 = arith.maximumf %118, %119 : vector<64x256xf32>
    %121 = arith.truncf %120 : vector<64x256xf32> to vector<64x256xbf16>
    %c0_80 = arith.constant 0 : index
    %c0_81 = arith.constant 0 : index
    %122 = vector.load %arg11[%c0_80, %c0_81] : memref<64x64xbf16, #tpu.memory_space<vmem>>, vector<64x64xbf16>
    %cst_82 = arith.constant dense<0.000000e+00> : vector<64x256xf32>
    %123 = tpu.matmul %122, %121, %cst_82 {dimension_numbers = #tpu.dot_dimension_numbers<[1], [0], [0], [1], [0, 0, 1, 1], [], []>} : vector<64x64xbf16>, vector<64x256xbf16>, vector<64x256xf32> -> vector<64x256xf32>
    %c0_83 = arith.constant 0 : index
    %c0_84 = arith.constant 0 : index
    %124 = vector.load %arg12[%c0_83, %c0_84] : memref<64x1xf32, #tpu.memory_space<vmem>>, vector<64x1xf32>
    %125 = vector.broadcast %124 : vector<64x1xf32> to vector<64x256xf32>
    %126 = arith.addf %123, %125 : vector<64x256xf32>
    %cst_85 = arith.constant 0.000000e+00 : f32
    %127 = vector.broadcast %cst_85 : f32 to vector<64x256xf32>
    %128 = arith.maximumf %126, %127 : vector<64x256xf32>
    %129 = arith.truncf %128 : vector<64x256xf32> to vector<64x256xbf16>
    %c128 = arith.constant 128 : index
    %c0_86 = arith.constant 0 : index
    %130 = vector.load %arg13[%c128, %c0_86] : memref<136x64xbf16, #tpu.memory_space<vmem>>, vector<8x64xbf16>
    %cst_87 = arith.constant dense<0.000000e+00> : vector<8x256xf32>
    %131 = tpu.matmul %130, %129, %cst_87 {dimension_numbers = #tpu.dot_dimension_numbers<[1], [0], [0], [1], [0, 0, 1, 1], [], []>} : vector<8x64xbf16>, vector<64x256xbf16>, vector<8x256xf32> -> vector<8x256xf32>
    %c0_88 = arith.constant 0 : index
    %c0_89 = arith.constant 0 : index
    %132 = vector.load %arg14[%c0_88, %c0_89] : memref<8x1xf32, #tpu.memory_space<vmem>>, vector<8x1xf32>
    %133 = vector.broadcast %132 : vector<8x1xf32> to vector<8x256xf32>
    %134 = arith.addf %131, %133 : vector<8x256xf32>
    %c0_90 = arith.constant 0 : index
    %c48 = arith.constant 48 : index
    %c0_91 = arith.constant 0 : index
    %135 = vector.load %arg15[%c0_90, %c48, %c0_91] : memref<1x56x256xf32, #tpu.memory_space<vmem>>, vector<1x8x256xf32>
    %136 = vector.shape_cast %135 : vector<1x8x256xf32> to vector<8x256xf32>
    %137 = vector.shape_cast %134 : vector<8x256xf32> to vector<1x8x256xf32>
    tpu.vector_store %arg15[%c0_90, %c48, %c0_91], %137 {strides = array<i32>} : memref<1x56x256xf32, #tpu.memory_space<vmem>>, vector<1x8x256xf32>,
    return
  }
  func.func @transform_0(%arg0: i32, %arg1: i32) -> (i32, i32, i32) {
    %c0_i32 = arith.constant 0 : i32
    %c0_i32_0 = arith.constant 0 : i32
    return %arg0, %c0_i32, %arg1 : i32, i32, i32
  }
  func.func @transform_1(%arg0: i32, %arg1: i32) -> (i32, i32) {
    %c0_i32 = arith.constant 0 : i32
    %c0_i32_0 = arith.constant 0 : i32
    %c0_i32_1 = arith.constant 0 : i32
    return %c0_i32, %c0_i32_0 : i32, i32
  }
  func.func @transform_2(%arg0: i32, %arg1: i32) -> (i32, i32) {
    %c0_i32 = arith.constant 0 : i32
    %c0_i32_0 = arith.constant 0 : i32
    %c0_i32_1 = arith.constant 0 : i32
    return %c0_i32, %c0_i32_0 : i32, i32
  }
  func.func @transform_3(%arg0: i32, %arg1: i32) -> (i32, i32) {
    %c0_i32 = arith.constant 0 : i32
    %c0_i32_0 = arith.constant 0 : i32
    %c0_i32_1 = arith.constant 0 : i32
    return %c0_i32, %c0_i32_0 : i32, i32
  }
  func.func @transform_4(%arg0: i32, %arg1: i32) -> (i32, i32) {
    %c0_i32 = arith.constant 0 : i32
    %c0_i32_0 = arith.constant 0 : i32
    %c0_i32_1 = arith.constant 0 : i32
    return %c0_i32, %c0_i32_0 : i32, i32
  }
  func.func @transform_5(%arg0: i32, %arg1: i32) -> (i32, i32) {
    %c0_i32 = arith.constant 0 : i32
    %c0_i32_0 = arith.constant 0 : i32
    %c0_i32_1 = arith.constant 0 : i32
    return %c0_i32, %c0_i32_0 : i32, i32
  }
  func.func @transform_6(%arg0: i32, %arg1: i32) -> (i32, i32) {
    %c0_i32 = arith.constant 0 : i32
    %c0_i32_0 = arith.constant 0 : i32
    %c0_i32_1 = arith.constant 0 : i32
    return %c0_i32, %c0_i32_0 : i32, i32
  }
  func.func @transform_7(%arg0: i32, %arg1: i32) -> (i32, i32) {
    %c0_i32 = arith.constant 0 : i32
    %c0_i32_0 = arith.constant 0 : i32
    %c0_i32_1 = arith.constant 0 : i32
    return %c0_i32, %c0_i32_0 : i32, i32
  }
  func.func @transform_8(%arg0: i32, %arg1: i32) -> (i32, i32) {
    %c0_i32 = arith.constant 0 : i32
    %c0_i32_0 = arith.constant 0 : i32
    %c0_i32_1 = arith.constant 0 : i32
    return %c0_i32, %c0_i32_0 : i32, i32
  }
  func.func @transform_9(%arg0: i32, %arg1: i32) -> (i32, i32) {
    %c0_i32 = arith.constant 0 : i32
    %c0_i32_0 = arith.constant 0 : i32
    %c0_i32_1 = arith.constant 0 : i32
    return %c0_i32, %c0_i32_0 : i32, i32
  }
  func.func @transform_10(%arg0: i32, %arg1: i32) -> (i32, i32) {
    %c0_i32 = arith.constant 0 : i32
    %c0_i32_0 = arith.constant 0 : i32
    %c0_i32_1 = arith.constant 0 : i32
    return %c0_i32, %c0_i32_0 : i32, i32
  }
  func.func @transform_11(%arg0: i32, %arg1: i32) -> (i32, i32) {
    %c0_i32 = arith.constant 0 : i32
    %c0_i32_0 = arith.constant 0 : i32
    %c0_i32_1 = arith.constant 0 : i32
    return %c0_i32, %c0_i32_0 : i32, i32
  }
  func.func @transform_12(%arg0: i32, %arg1: i32) -> (i32, i32) {
    %c0_i32 = arith.constant 0 : i32
    %c0_i32_0 = arith.constant 0 : i32
    %c0_i32_1 = arith.constant 0 : i32
    return %c0_i32, %c0_i32_0 : i32, i32
  }
  func.func @transform_13(%arg0: i32, %arg1: i32) -> (i32, i32, i32) {
    %c0_i32 = arith.constant 0 : i32
    %c0_i32_0 = arith.constant 0 : i32
    return %arg0, %c0_i32, %arg1 : i32, i32, i32
  }
}

</mosaic_0001>

<llo_original>
// kernel: stacked_group_network_forward.1
$region0: #{stacked_group_network_forward.1}
  #allocation0 [shape = 'u32[]', space=smem, size = 0x4, offset = 0x4, fixed_abs, tag = 'smem constant byte address 0x4 - core index']
  #allocation1 [shape = 'u32[144,128]{1,0:T(1,128)}', space=vmem, size = 0x12000, scoped, tag = 'internal scratch']
  %s0 = inlined_call_operand.vmem [shape: bf16[2,8,256], index: 0, kind: input, shape index: {}]
  %s1 = inlined_call_operand.vmem [shape: bf16[32,8], index: 1, kind: input, shape index: {}]
  %s2 = inlined_call_operand.vmem [shape: f32[32,1], index: 2, kind: input, shape index: {}]
  %s3 = inlined_call_operand.vmem [shape: bf16[136,32], index: 3, kind: input, shape index: {}]
  %s4 = inlined_call_operand.vmem [shape: f32[128,1], index: 4, kind: input, shape index: {}]
  %s5 = inlined_call_operand.vmem [shape: f32[8,1], index: 5, kind: input, shape index: {}]
  %s6 = inlined_call_operand.vmem [shape: bf16[72,128], index: 6, kind: input, shape index: {}]
  %s7 = inlined_call_operand.vmem [shape: f32[64,1], index: 7, kind: input, shape index: {}]
  %s8 = inlined_call_operand.vmem [shape: f32[8,1], index: 8, kind: input, shape index: {}]
  %s9 = inlined_call_operand.vmem [shape: bf16[64,64], index: 9, kind: input, shape index: {}]
  %s10 = inlined_call_operand.vmem [shape: f32[64,1], index: 10, kind: input, shape index: {}]
  %s11 = inlined_call_operand.vmem [shape: bf16[136,64], index: 11, kind: input, shape index: {}]
  %s12 = inlined_call_operand.vmem [shape: f32[8,1], index: 12, kind: input, shape index: {}]
  %s13 = inlined_call_operand.vmem [shape: f32[2,56,256], index: 13, kind: output, shape index: {}]
  %s14 = sld [smem:[#allocation0]]
  $region85: #{stacked_group_network_forward.1} parent=0
    _
  %s16 = ssub.s32 1, %s14
  %s17 = scalar_select 0, %s16, %s14
  loop: start=0, step=1, limit=4
  $region2: #{stacked_group_network_forward.1} parent=0 // loop_pre_header
    _
  $region3: #{stacked_group_network_forward.1} parent=0 // loop_header
    %s19 = sphi 0, %s23
    %p20 = scmp.ge.s32.totalorder %s19, 4
    %s26 = sphi 0, %s38
    %s27 = sphi 0, %s34
    %s28 = sphi 0, %s26
    %s29 = sphi 0, %s27
    %s30 = sphi 0, %s28
    %s31 = sphi 0, %s29
    %s43 = sphi 0, %s45
    %s46 = sphi 0, %s43
    %s47 = sphi 0, %s46
    %s63 = sphi 0, %s47
    %s67 = sphi 0, %s67
    %s69 = sphi 0, %s67
    %s70 = sphi 0, %s69
    %s84 = sphi 0, %s70
    %s88 = sphi 0, %s88
    %s90 = sphi 0, %s88
    %s91 = sphi 0, %s90
    %s105 = sphi 0, %s91
    %s109 = sphi 0, %s109
    %s111 = sphi 0, %s109
    %s112 = sphi 0, %s111
    %s126 = sphi 0, %s112
    %s130 = sphi 0, %s130
    %s132 = sphi 0, %s130
    %s133 = sphi 0, %s132
    %s147 = sphi 0, %s133
    %s151 = sphi 0, %s151
    %s153 = sphi 0, %s151
    %s154 = sphi 0, %s153
    %s168 = sphi 0, %s154
    %s172 = sphi 0, %s172
    %s174 = sphi 0, %s172
    %s175 = sphi 0, %s174
    %s189 = sphi 0, %s175
    %s193 = sphi 0, %s193
    %s195 = sphi 0, %s193
    %s196 = sphi 0, %s195
    %s210 = sphi 0, %s196
    %s214 = sphi 0, %s214
    %s216 = sphi 0, %s214
    %s217 = sphi 0, %s216
    %s231 = sphi 0, %s217
    %s235 = sphi 0, %s235
    %s237 = sphi 0, %s235
    %s238 = sphi 0, %s237
    %s252 = sphi 0, %s238
    %s256 = sphi 0, %s256
    %s258 = sphi 0, %s256
    %s259 = sphi 0, %s258
    %s273 = sphi 0, %s259
    %s277 = sphi 0, %s277
    %s279 = sphi 0, %s277
    %s280 = sphi 0, %s279
    %s294 = sphi 0, %s280
    %s298 = sphi 0, %s298
    %s300 = sphi 0, %s298
    %s301 = sphi 0, %s300
    %s315 = sphi 0, %s301
    %s323 = sphi 0, %s325
    %s326 = sphi 0, %s323
    %s327 = sphi 0, %s326
    %s343 = sphi 0, %s327
  $region4: #{stacked_group_network_forward.1} parent=0 // loop_header_branch
    %22 = sbr.rel (%p20) target = $region8
  $region5: #{stacked_group_network_forward.1} parent=0 // loop_body
    %s24 = ssub.s32 %s19, 1
    %s25 = ssub.s32 %s19, 2
    %s32 = sadd.s32 1, %s27
    %p33 = scmp.ge.s32.totalorder %s32, 1
    %s34 = scalar_select %p33, 0, %s32
    %s35 = sadd.s32 1, %s26
    %s36 = scalar_select %p33, %s35, %s26
    %p37 = scmp.ge.s32.totalorder %s36, 2
    %s38 = scalar_select %p37, 0, %s36
    %s39 = ssub.s32 %s26, %s38
    %s40 = ssub.s32 %s27, %s34
    %s41 = sor.u32 %s39, %s40
    %p42 = scmp.eq.s32.totalorder %s41, 0
    %s44 = sadd.s32 %s43, 1
    %s45 = scalar_select %p42, %s43, %s44
    %p48 = pneg %p42
    %p49 = scmp.eq.s32.totalorder %s19, 1
    %p50 = por %p48, %p49
    %p51 = scmp.ne.s32.totalorder %s43, %s46
    %p52 = scmp.eq.s32.totalorder %s19, 0
    %p53 = por %p51, %p52
    %p54 = scmp.ne.s32.totalorder %s43, %s46
    %p55 = scmp.eq.s32.totalorder %s24, 1
    %p56 = por %p54, %p55
    %p57 = scmp.ne.s32.totalorder %s46, %s47
    %p58 = scmp.eq.s32.totalorder %s24, 0
    %p59 = por %p57, %p58
    %p60 = scmp.ne.s32.totalorder %s46, %s47
    %p61 = scmp.eq.s32.totalorder %s25, 1
    %p62 = por %p60, %p61
    %p64 = scmp.ne.s32.totalorder %s47, %s63
    %p65 = scmp.eq.s32.totalorder %s25, 0
    %p66 = por %p64, %p65
    %s68 = sadd.s32 %s67, 1
    %p71 = scmp.eq.s32.totalorder %s19, 1
    %p72 = scmp.ne.s32.totalorder %s67, %s69
    %p73 = scmp.eq.s32.totalorder %s19, 0
    %p74 = por %p72, %p73
    %p75 = scmp.ne.s32.totalorder %s67, %s69
    %p76 = scmp.eq.s32.totalorder %s24, 1
    %p77 = por %p75, %p76
    %p78 = scmp.ne.s32.totalorder %s69, %s70
    %p79 = scmp.eq.s32.totalorder %s24, 0
    %p80 = por %p78, %p79
    %p81 = scmp.ne.s32.totalorder %s69, %s70
    %p82 = scmp.eq.s32.totalorder %s25, 1
    %p83 = por %p81, %p82
    %p85 = scmp.ne.s32.totalorder %s70, %s84
    %p86 = scmp.eq.s32.totalorder %s25, 0
    %p87 = por %p85, %p86
    %s89 = sadd.s32 %s88, 1
    %p92 = scmp.eq.s32.totalorder %s19, 1
    %p93 = scmp.ne.s32.totalorder %s88, %s90
    %p94 = scmp.eq.s32.totalorder %s19, 0
    %p95 = por %p93, %p94
    %p96 = scmp.ne.s32.totalorder %s88, %s90
    %p97 = scmp.eq.s32.totalorder %s24, 1
    %p98 = por %p96, %p97
    %p99 = scmp.ne.s32.totalorder %s90, %s91
    %p100 = scmp.eq.s32.totalorder %s24, 0
    %p101 = por %p99, %p100
    %p102 = scmp.ne.s32.totalorder %s90, %s91
    %p103 = scmp.eq.s32.totalorder %s25, 1
    %p104 = por %p102, %p103
    %p106 = scmp.ne.s32.totalorder %s91, %s105
    %p107 = scmp.eq.s32.totalorder %s25, 0
    %p108 = por %p106, %p107
    %s110 = sadd.s32 %s109, 1
    %p113 = scmp.eq.s32.totalorder %s19, 1
    %p114 = scmp.ne.s32.totalorder %s109, %s111
    %p115 = scmp.eq.s32.totalorder %s19, 0
    %p116 = por %p114, %p115
    %p117 = scmp.ne.s32.totalorder %s109, %s111
    %p118 = scmp.eq.s32.totalorder %s24, 1
    %p119 = por %p117, %p118
    %p120 = scmp.ne.s32.totalorder %s111, %s112
    %p121 = scmp.eq.s32.totalorder %s24, 0
    %p122 = por %p120, %p121
    %p123 = scmp.ne.s32.totalorder %s111, %s112
    %p124 = scmp.eq.s32.totalorder %s25, 1
    %p125 = por %p123, %p124
    %p127 = scmp.ne.s32.totalorder %s112, %s126
    %p128 = scmp.eq.s32.totalorder %s25, 0
    %p129 = por %p127, %p128
    %s131 = sadd.s32 %s130, 1
    %p134 = scmp.eq.s32.totalorder %s19, 1
    %p135 = scmp.ne.s32.totalorder %s130, %s132
    %p136 = scmp.eq.s32.totalorder %s19, 0
    %p137 = por %p135, %p136
    %p138 = scmp.ne.s32.totalorder %s130, %s132
    %p139 = scmp.eq.s32.totalorder %s24, 1
    %p140 = por %p138, %p139
    %p141 = scmp.ne.s32.totalorder %s132, %s133
    %p142 = scmp.eq.s32.totalorder %s24, 0
    %p143 = por %p141, %p142
    %p144 = scmp.ne.s32.totalorder %s132, %s133
    %p145 = scmp.eq.s32.totalorder %s25, 1
    %p146 = por %p144, %p145
    %p148 = scmp.ne.s32.totalorder %s133, %s147
    %p149 = scmp.eq.s32.totalorder %s25, 0
    %p150 = por %p148, %p149
    %s152 = sadd.s32 %s151, 1
    %p155 = scmp.eq.s32.totalorder %s19, 1
    %p156 = scmp.ne.s32.totalorder %s151, %s153
    %p157 = scmp.eq.s32.totalorder %s19, 0
    %p158 = por %p156, %p157
    %p159 = scmp.ne.s32.totalorder %s151, %s153
    %p160 = scmp.eq.s32.totalorder %s24, 1
    %p161 = por %p159, %p160
    %p162 = scmp.ne.s32.totalorder %s153, %s154
    %p163 = scmp.eq.s32.totalorder %s24, 0
    %p164 = por %p162, %p163
    %p165 = scmp.ne.s32.totalorder %s153, %s154
    %p166 = scmp.eq.s32.totalorder %s25, 1
    %p167 = por %p165, %p166
    %p169 = scmp.ne.s32.totalorder %s154, %s168
    %p170 = scmp.eq.s32.totalorder %s25, 0
    %p171 = por %p169, %p170
    %s173 = sadd.s32 %s172, 1
    %p176 = scmp.eq.s32.totalorder %s19, 1
    %p177 = scmp.ne.s32.totalorder %s172, %s174
    %p178 = scmp.eq.s32.totalorder %s19, 0
    %p179 = por %p177, %p178
    %p180 = scmp.ne.s32.totalorder %s172, %s174
    %p181 = scmp.eq.s32.totalorder %s24, 1
    %p182 = por %p180, %p181
    %p183 = scmp.ne.s32.totalorder %s174, %s175
    %p184 = scmp.eq.s32.totalorder %s24, 0
    %p185 = por %p183, %p184
    %p186 = scmp.ne.s32.totalorder %s174, %s175
    %p187 = scmp.eq.s32.totalorder %s25, 1
    %p188 = por %p186, %p187
    %p190 = scmp.ne.s32.totalorder %s175, %s189
    %p191 = scmp.eq.s32.totalorder %s25, 0
    %p192 = por %p190, %p191
    %s194 = sadd.s32 %s193, 1
    %p197 = scmp.eq.s32.totalorder %s19, 1
    %p198 = scmp.ne.s32.totalorder %s193, %s195
    %p199 = scmp.eq.s32.totalorder %s19, 0
    %p200 = por %p198, %p199
    %p201 = scmp.ne.s32.totalorder %s193, %s195
    %p202 = scmp.eq.s32.totalorder %s24, 1
    %p203 = por %p201, %p202
    %p204 = scmp.ne.s32.totalorder %s195, %s196
    %p205 = scmp.eq.s32.totalorder %s24, 0
    %p206 = por %p204, %p205
    %p207 = scmp.ne.s32.totalorder %s195, %s196
    %p208 = scmp.eq.s32.totalorder %s25, 1
    %p209 = por %p207, %p208
    %p211 = scmp.ne.s32.totalorder %s196, %s210
    %p212 = scmp.eq.s32.totalorder %s25, 0
    %p213 = por %p211, %p212
    %s215 = sadd.s32 %s214, 1
    %p218 = scmp.eq.s32.totalorder %s19, 1
    %p219 = scmp.ne.s32.totalorder %s214, %s216
    %p220 = scmp.eq.s32.totalorder %s19, 0
    %p221 = por %p219, %p220
    %p222 = scmp.ne.s32.totalorder %s214, %s216
    %p223 = scmp.eq.s32.totalorder %s24, 1
    %p224 = por %p222, %p223
    %p225 = scmp.ne.s32.totalorder %s216, %s217
    %p226 = scmp.eq.s32.totalorder %s24, 0
    %p227 = por %p225, %p226
    %p228 = scmp.ne.s32.totalorder %s216, %s217
    %p229 = scmp.eq.s32.totalorder %s25, 1
    %p230 = por %p228, %p229
    %p232 = scmp.ne.s32.totalorder %s217, %s231
    %p233 = scmp.eq.s32.totalorder %s25, 0
    %p234 = por %p232, %p233
    %s236 = sadd.s32 %s235, 1
    %p239 = scmp.eq.s32.totalorder %s19, 1
    %p240 = scmp.ne.s32.totalorder %s235, %s237
    %p241 = scmp.eq.s32.totalorder %s19, 0
    %p242 = por %p240, %p241
    %p243 = scmp.ne.s32.totalorder %s235, %s237
    %p244 = scmp.eq.s32.totalorder %s24, 1
    %p245 = por %p243, %p244
    %p246 = scmp.ne.s32.totalorder %s237, %s238
    %p247 = scmp.eq.s32.totalorder %s24, 0
    %p248 = por %p246, %p247
    %p249 = scmp.ne.s32.totalorder %s237, %s238
    %p250 = scmp.eq.s32.totalorder %s25, 1
    %p251 = por %p249, %p250
    %p253 = scmp.ne.s32.totalorder %s238, %s252
    %p254 = scmp.eq.s32.totalorder %s25, 0
    %p255 = por %p253, %p254
    %s257 = sadd.s32 %s256, 1
    %p260 = scmp.eq.s32.totalorder %s19, 1
    %p261 = scmp.ne.s32.totalorder %s256, %s258
    %p262 = scmp.eq.s32.totalorder %s19, 0
    %p263 = por %p261, %p262
    %p264 = scmp.ne.s32.totalorder %s256, %s258
    %p265 = scmp.eq.s32.totalorder %s24, 1
    %p266 = por %p264, %p265
    %p267 = scmp.ne.s32.totalorder %s258, %s259
    %p268 = scmp.eq.s32.totalorder %s24, 0
    %p269 = por %p267, %p268
    %p270 = scmp.ne.s32.totalorder %s258, %s259
    %p271 = scmp.eq.s32.totalorder %s25, 1
    %p272 = por %p270, %p271
    %p274 = scmp.ne.s32.totalorder %s259, %s273
    %p275 = scmp.eq.s32.totalorder %s25, 0
    %p276 = por %p274, %p275
    %s278 = sadd.s32 %s277, 1
    %p281 = scmp.eq.s32.totalorder %s19, 1
    %p282 = scmp.ne.s32.totalorder %s277, %s279
    %p283 = scmp.eq.s32.totalorder %s19, 0
    %p284 = por %p282, %p283
    %p285 = scmp.ne.s32.totalorder %s277, %s279
    %p286 = scmp.eq.s32.totalorder %s24, 1
    %p287 = por %p285, %p286
    %p288 = scmp.ne.s32.totalorder %s279, %s280
    %p289 = scmp.eq.s32.totalorder %s24, 0
    %p290 = por %p288, %p289
    %p291 = scmp.ne.s32.totalorder %s279, %s280
    %p292 = scmp.eq.s32.totalorder %s25, 1
    %p293 = por %p291, %p292
    %p295 = scmp.ne.s32.totalorder %s280, %s294
    %p296 = scmp.eq.s32.totalorder %s25, 0
    %p297 = por %p295, %p296
    %s299 = sadd.s32 %s298, 1
    %p302 = scmp.eq.s32.totalorder %s19, 1
    %p303 = scmp.ne.s32.totalorder %s298, %s300
    %p304 = scmp.eq.s32.totalorder %s19, 0
    %p305 = por %p303, %p304
    %p306 = scmp.ne.s32.totalorder %s298, %s300
    %p307 = scmp.eq.s32.totalorder %s24, 1
    %p308 = por %p306, %p307
    %p309 = scmp.ne.s32.totalorder %s300, %s301
    %p310 = scmp.eq.s32.totalorder %s24, 0
    %p311 = por %p309, %p310
    %p312 = scmp.ne.s32.totalorder %s300, %s301
    %p313 = scmp.eq.s32.totalorder %s25, 1
    %p314 = por %p312, %p313
    %p316 = scmp.ne.s32.totalorder %s301, %s315
    %p317 = scmp.eq.s32.totalorder %s25, 0
    %p318 = por %p316, %p317
    %s319 = ssub.s32 %s26, %s38
    %s320 = ssub.s32 %s27, %s34
    %s321 = sor.u32 %s319, %s320
    %p322 = scmp.eq.s32.totalorder %s321, 0
    %s324 = sadd.s32 %s323, 1
    %s325 = scalar_select %p322, %s323, %s324
    %p328 = pneg %p322
    %p329 = scmp.eq.s32.totalorder %s19, 1
    %p330 = por %p328, %p329
    %p331 = scmp.ne.s32.totalorder %s323, %s326
    %p332 = scmp.eq.s32.totalorder %s19, 0
    %p333 = por %p331, %p332
    %p334 = scmp.ne.s32.totalorder %s323, %s326
    %p335 = scmp.eq.s32.totalorder %s24, 1
    %p336 = por %p334, %p335
    %p337 = scmp.ne.s32.totalorder %s326, %s327
    %p338 = scmp.eq.s32.totalorder %s24, 0
    %p339 = por %p337, %p338
    %p340 = scmp.ne.s32.totalorder %s326, %s327
    %p341 = scmp.eq.s32.totalorder %s25, 1
    %p342 = por %p340, %p341
    %p344 = scmp.ne.s32.totalorder %s327, %s343
    %p345 = scmp.eq.s32.totalorder %s25, 0
    %p346 = por %p344, %p345
    %p347 = scmp.le.s32.totalorder 1, %s19
    %p348 = scmp.lt.s32.totalorder %s19, 3
    %p349 = pnand %p347, %p348
    %p350 = pneg %p349
    // Predicated region
    $region9: #{stacked_group_network_forward.1} parent=5 // pred_check
      _
    $region10: #{stacked_group_network_forward.1} parent=5 // pred_check_branch
      %352 = sbr.rel (%p349) target = $region12
    $region11: #{stacked_group_network_forward.1} parent=5 // pred_region
      %s353 = ssub.s32 %s19, 1
      // Predicated region
      $region13: #{stacked_group_network_forward.1} parent=11 // pred_check
        %p354 = pneg %p80
      $region14: #{stacked_group_network_forward.1} parent=11 // pred_check_branch
        %356 = sbr.rel (%p354) target = $region16
      $region15: #{stacked_group_network_forward.1} parent=11 // pred_region
        _
      $region16: #{stacked_group_network_forward.1} parent=11 // pred_fallthru
        _
      // Predicated region
      $region17: #{stacked_group_network_forward.1} parent=11 // pred_check
        %p357 = pneg %p101
      $region18: #{stacked_group_network_forward.1} parent=11 // pred_check_branch
        %359 = sbr.rel (%p357) target = $region20
      $region19: #{stacked_group_network_forward.1} parent=11 // pred_region
        _
      $region20: #{stacked_group_network_forward.1} parent=11 // pred_fallthru
        _
      // Predicated region
      $region21: #{stacked_group_network_forward.1} parent=11 // pred_check
        %p360 = pneg %p122
      $region22: #{stacked_group_network_forward.1} parent=11 // pred_check_branch
        %362 = sbr.rel (%p360) target = $region24
      $region23: #{stacked_group_network_forward.1} parent=11 // pred_region
        _
      $region24: #{stacked_group_network_forward.1} parent=11 // pred_fallthru
        _
      // Predicated region
      $region25: #{stacked_group_network_forward.1} parent=11 // pred_check
        %p363 = pneg %p143
      $region26: #{stacked_group_network_forward.1} parent=11 // pred_check_branch
        %365 = sbr.rel (%p363) target = $region28
      $region27: #{stacked_group_network_forward.1} parent=11 // pred_region
        _
      $region28: #{stacked_group_network_forward.1} parent=11 // pred_fallthru
        _
      // Predicated region
      $region29: #{stacked_group_network_forward.1} parent=11 // pred_check
        %p366 = pneg %p164
      $region30: #{stacked_group_network_forward.1} parent=11 // pred_check_branch
        %368 = sbr.rel (%p366) target = $region32
      $region31: #{stacked_group_network_forward.1} parent=11 // pred_region
        _
      $region32: #{stacked_group_network_forward.1} parent=11 // pred_fallthru
        _
      // Predicated region
      $region33: #{stacked_group_network_forward.1} parent=11 // pred_check
        %p369 = pneg %p185
      $region34: #{stacked_group_network_forward.1} parent=11 // pred_check_branch
        %371 = sbr.rel (%p369) target = $region36
      $region35: #{stacked_group_network_forward.1} parent=11 // pred_region
        _
      $region36: #{stacked_group_network_forward.1} parent=11 // pred_fallthru
        _
      // Predicated region
      $region37: #{stacked_group_network_forward.1} parent=11 // pred_check
        %p372 = pneg %p206
      $region38: #{stacked_group_network_forward.1} parent=11 // pred_check_branch
        %374 = sbr.rel (%p372) target = $region40
      $region39: #{stacked_group_network_forward.1} parent=11 // pred_region
        _
      $region40: #{stacked_group_network_forward.1} parent=11 // pred_fallthru
        _
      // Predicated region
      $region41: #{stacked_group_network_forward.1} parent=11 // pred_check
        %p375 = pneg %p227
      $region42: #{stacked_group_network_forward.1} parent=11 // pred_check_branch
        %377 = sbr.rel (%p375) target = $region44
      $region43: #{stacked_group_network_forward.1} parent=11 // pred_region
        _
      $region44: #{stacked_group_network_forward.1} parent=11 // pred_fallthru
        _
      // Predicated region
      $region45: #{stacked_group_network_forward.1} parent=11 // pred_check
        %p378 = pneg %p248
      $region46: #{stacked_group_network_forward.1} parent=11 // pred_check_branch
        %380 = sbr.rel (%p378) target = $region48
      $region47: #{stacked_group_network_forward.1} parent=11 // pred_region
        _
      $region48: #{stacked_group_network_forward.1} parent=11 // pred_fallthru
        _
      // Predicated region
      $region49: #{stacked_group_network_forward.1} parent=11 // pred_check
        %p381 = pneg %p269
      $region50: #{stacked_group_network_forward.1} parent=11 // pred_check_branch
        %383 = sbr.rel (%p381) target = $region52
      $region51: #{stacked_group_network_forward.1} parent=11 // pred_region
        _
      $region52: #{stacked_group_network_forward.1} parent=11 // pred_fallthru
        _
      // Predicated region
      $region53: #{stacked_group_network_forward.1} parent=11 // pred_check
        %p384 = pneg %p290
      $region54: #{stacked_group_network_forward.1} parent=11 // pred_check_branch
        %386 = sbr.rel (%p384) target = $region56
      $region55: #{stacked_group_network_forward.1} parent=11 // pred_region
        _
      $region56: #{stacked_group_network_forward.1} parent=11 // pred_fallthru
        _
      // Predicated region
      $region57: #{stacked_group_network_forward.1} parent=11 // pred_check
        %p387 = pneg %p311
      $region58: #{stacked_group_network_forward.1} parent=11 // pred_check_branch
        %389 = sbr.rel (%p387) target = $region60
      $region59: #{stacked_group_network_forward.1} parent=11 // pred_region
        _
      $region60: #{stacked_group_network_forward.1} parent=11 // pred_fallthru
        _
    $region12: #{stacked_group_network_forward.1} parent=5 // pred_fallthru
      _
    %p390 = scmp.lt.s32.totalorder %s19, 2
    // Predicated region
    $region61: #{stacked_group_network_forward.1} parent=5 // pred_check
      %p391 = pneg %p390
    $region62: #{stacked_group_network_forward.1} parent=5 // pred_check_branch
      %393 = sbr.rel (%p391) target = $region64
    $region63: #{stacked_group_network_forward.1} parent=5 // pred_region
      // Predicated region
      $region65: #{stacked_group_network_forward.1} parent=63 // pred_check
        %p394 = pneg %p53
      $region66: #{stacked_group_network_forward.1} parent=63 // pred_check_branch
        %396 = sbr.rel (%p394) target = $region68
      $region67: #{stacked_group_network_forward.1} parent=63 // pred_region
        %s397 = smul.u32 2, %s27
        %p398 = scmp.lt.s32.totalorder %s26, 1
        %s399 = scalar_select %p398, %s26, 1
        %p400 = scmp.lt.s32.totalorder %s397, 1
        %s401 = scalar_select %p400, %s397, 1
        %s402 = smul.addr %s399, 2
        %s403 = sadd.s32 %s401, %s402
        %s404 = smul.addr %s403, 4
        %s405 = scalar_lea.vmem %s0, %s404
        %s406 = smul.u32 2, %s27
      $region68: #{stacked_group_network_forward.1} parent=63 // pred_fallthru
        _
    $region64: #{stacked_group_network_forward.1} parent=5 // pred_fallthru
      _
    %p407 = scmp.le.s32.totalorder 1, %s19
    %p408 = scmp.lt.s32.totalorder %s19, 3
    %p409 = pnand %p407, %p408
    %p410 = pneg %p409
    // Predicated region
    $region69: #{stacked_group_network_forward.1} parent=5 // pred_check
      _
    $region70: #{stacked_group_network_forward.1} parent=5 // pred_check_branch
      %412 = sbr.rel (%p409) target = $region72
    $region71: #{stacked_group_network_forward.1} parent=5 // pred_region
      %s413 = ssub.s32 %s19, 1
      %s414 = smul.u32 2, %s29
      %p415 = scmp.lt.s32.totalorder %s28, 1
      %s416 = scalar_select %p415, %s28, 1
      %p417 = scmp.lt.s32.totalorder %s414, 1
      %s418 = scalar_select %p417, %s414, 1
      %s419 = smul.addr %s416, 2
      %s420 = sadd.s32 %s418, %s419
      %s421 = smul.addr %s420, 4
      %s422 = scalar_lea.vmem %s0, %s421
      %p423 = pneg %p59
      %p424 = pneg %p56
      %p425 = pneg %p80
      %p426 = pneg %p77
      %p427 = pneg %p101
      %p428 = pneg %p98
      %p429 = pneg %p122
      %p430 = pneg %p119
      %p431 = pneg %p143
      %p432 = pneg %p140
      %p433 = pneg %p164
      %p434 = pneg %p161
      %p435 = pneg %p185
      %p436 = pneg %p182
      %p437 = pneg %p206
      %p438 = pneg %p203
      %p439 = pneg %p227
      %p440 = pneg %p224
      %p441 = pneg %p248
      %p442 = pneg %p245
      %p443 = pneg %p269
      %p444 = pneg %p266
      %p445 = pneg %p290
      %p446 = pneg %p287
      %p447 = pneg %p311
      %p448 = pneg %p308
      %p449 = pneg %p339
      %p450 = pneg %p336
      %s451 = smul.u32 2, %s29
      %p452 = scmp.lt.s32.totalorder %s28, 1
      %s453 = scalar_select %p452, %s28, 1
      %p454 = scmp.lt.s32.totalorder %s451, 1
      %s455 = scalar_select %p454, %s451, 1
      %s456 = smul.addr %s453, 14
      %s457 = sadd.s32 %s455, %s456
      %s458 = smul.addr %s457, 8
      %s459 = scalar_lea.vmem %s13, %s458
      %s460 = smul.u32 2, %s29
      %p461 = scmp.lt.s32.totalorder %s28, 1
      %s462 = scalar_select %p461, %s28, 1
      %p463 = scmp.lt.s32.totalorder %s460, 1
      %s464 = scalar_select %p463, %s460, 1
      %s465 = smul.addr %s462, 2
      %s466 = sadd.s32 %s464, %s465
      %s467 = smul.addr %s466, 4
      %s468 = scalar_lea.vmem %s0, %s467
      %s469 = smul.u32 2, %s29
      %s470 = smul.u32 2, %s29
      %p471 = scmp.lt.s32.totalorder %s28, 1
      %s472 = scalar_select %p471, %s28, 1
      %p473 = scmp.lt.s32.totalorder %s470, 1
      %s474 = scalar_select %p473, %s470, 1
      %s475 = smul.addr %s472, 14
      %s476 = sadd.s32 %s474, %s475
      %s477 = smul.addr %s476, 8
      %s478 = scalar_lea.vmem %s13, %s477
      %s479 = smul.u32 2, %s29
      %v481 = vld [vmem:[%s468] sm:$0xff]
      %v482 = vld [vmem:[%s1] sm:$0xf]
      %v483 = vld [vmem:[%s1 + $0x4] sm:$0xf]
      %v484 = vld [vmem:[%s1 + $0x8] sm:$0xf]
      %v485 = vld [vmem:[%s1 + $0xc] sm:$0xf]
      %v486 = vld [vmem:[%s2] sm:$0xff]
      %v487 = vld [vmem:[%s2 + $0x8] sm:$0xff]
      %v488 = vld [vmem:[%s2 + $0x10] sm:$0xff]
      %v489 = vld [vmem:[%s2 + $0x18] sm:$0xff]
      %491 = vset.pattern.permute.xlu0 0
      %492 = vperm.xlu0 %491, %v486
      %v493 = vpop.permute.xlu0 %492
      %496 = vset.pattern.permute.xlu0 0
      %497 = vperm.xlu0 %496, %v487
      %v498 = vpop.permute.xlu0 %497
      %501 = vset.pattern.permute.xlu0 0
      %502 = vperm.xlu0 %501, %v488
      %v503 = vpop.permute.xlu0 %502
      %506 = vset.pattern.permute.xlu0 0
      %507 = vperm.xlu0 %506, %v489
      %v508 = vpop.permute.xlu0 %507
      %v514 = vunpack.c.l.b16 %v482
      %v515 = vunpack.c.l.b16 %v483
      %v516 = vunpack.c.l.b16 %v484
      %v517 = vunpack.c.l.b16 %v485
      %v518 = vpack.c.b16 %v515, %v514
      %v519 = vpack.c.b16 %v517, %v516
      %v521 = vunpack.c.l.b16 %v481
      %v522 = vunpack.c.h.b16 %v481
      %v523 = vpack.c.b16 %v521, %v521
      %v524 = vpack.c.b16 %v522, %v522
      %vm525 = vcmask 64512
      %v527 = vsel %vm525, %v518, 0
      %v530 = vsel %vm525, %v519, 0
      %vm532 = vcmask 1043456
      %v534 = vsel %vm532, %v523, 0
      %v537 = vsel %vm532, %v524, 0
      %539 = vmatprep.subr.bf16.mxu0 %v537
      %540 = vmatpush1.bf16.msra.mxu0 %v534
      %541 = vmatprep.subr.bf16.mxu0 0
      %542 = vmatpush1.bf16.msra.mxu0 0
      %543 = vmatprep.subr.bf16.mxu0 0
      %544 = vmatpush1.bf16.msra.mxu0 0
      %545 = vmatprep.subr.bf16.mxu0 0
      %546 = vmatpush1.bf16.msra.mxu0 0
      %547 = vmatprep.subr.bf16.mxu0 0
      %548 = vmatpush1.bf16.msra.mxu0 0
      %549 = vmatprep.subr.bf16.mxu0 0
      %550 = vmatpush1.bf16.msra.mxu0 0
      %551 = vmatprep.subr.bf16.mxu0 0
      %552 = vmatpush1.bf16.msra.mxu0 0
      %553 = vmatprep.subr.bf16.mxu0 0
      %554 = vmatpush1.bf16.msra.mxu0 0
      %555 = vmatprep.subr.bf16.mxu0 0
      %556 = vmatpush1.bf16.msra.mxu0 0
      %557 = vmatprep.subr.bf16.mxu0 0
      %558 = vmatpush1.bf16.msra.mxu0 0
      %559 = vmatprep.subr.bf16.mxu0 0
      %560 = vmatpush1.bf16.msra.mxu0 0
      %561 = vmatprep.subr.bf16.mxu0 0
      %562 = vmatpush1.bf16.msra.mxu0 0
      %563 = vmatprep.subr.bf16.mxu0 0
      %564 = vmatpush1.bf16.msra.mxu0 0
      %565 = vmatprep.subr.bf16.mxu0 0
      %566 = vmatpush1.bf16.msra.mxu0 0
      %567 = vmatprep.subr.bf16.mxu0 0
      %568 = vmatpush1.bf16.msra.mxu0 0
      %569 = vmatprep.subr.bf16.mxu0 0
      %570 = vmatpush1.bf16.msra.mxu0 0
      %571 = vmatprep.mubr.bf16.mxu0 0
      %572 = vmatmul.mubr.bf16.gmra.mrb[0].mxu0 %v527
      %v573 = vpop.f32.mrb[0].mxu0
      %v574 = vadd.f32 %v493, %v573
      %v575 = vpop.f32.mrb[0].mxu0
      %v576 = vadd.f32 %v493, %v575
      %v577 = vpop.f32.mrb[0].mxu0
      %v578 = vadd.f32 %v498, %v577
      %v579 = vpop.f32.mrb[0].mxu0
      %v580 = vadd.f32 %v498, %v579
      %581 = vmatprep.mubr.bf16.mxu0 0
      %582 = vmatmul.mubr.bf16.gmra.mrb[0].mxu0 %v530
      %v583 = vpop.f32.mrb[0].mxu0
      %v584 = vadd.f32 %v503, %v583
      %v585 = vpop.f32.mrb[0].mxu0
      %v586 = vadd.f32 %v503, %v585
      %v587 = vpop.f32.mrb[0].mxu0
      %v588 = vadd.f32 %v508, %v587
      %v589 = vpop.f32.mrb[0].mxu0
      %v590 = vadd.f32 %v508, %v589
      %591 = vdwg.mxu0
      %v592 = vmax.f32 %v574, 0.0
      %v593 = vmax.f32 %v576, 0.0
      %v594 = vmax.f32 %v578, 0.0
      %v595 = vmax.f32 %v580, 0.0
      %v596 = vmax.f32 %v584, 0.0
      %v597 = vmax.f32 %v586, 0.0
      %v598 = vmax.f32 %v588, 0.0
      %v599 = vmax.f32 %v590, 0.0
      %v600 = vpack.c.bf16 %v594, %v592
      %v601 = vpack.c.bf16 %v595, %v593
      %v602 = vpack.c.bf16 %v598, %v596
      %v603 = vpack.c.bf16 %v599, %v597
      %v604 = vld [vmem:[%s3] sm:$0xf]
      %v605 = vld [vmem:[%s3 + $0x4] sm:$0xf]
      %v606 = vld [vmem:[%s3 + $0x8] sm:$0xf]
      %v607 = vld [vmem:[%s3 + $0xc] sm:$0xf]
      %v608 = vld [vmem:[%s3 + $0x10] sm:$0xf]
      %v609 = vld [vmem:[%s3 + $0x14] sm:$0xf]
      %v610 = vld [vmem:[%s3 + $0x18] sm:$0xf]
      %v611 = vld [vmem:[%s3 + $0x1c] sm:$0xf]
      %v612 = vld [vmem:[%s3 + $0x20] sm:$0xf]
      %v613 = vld [vmem:[%s3 + $0x24] sm:$0xf]
      %v614 = vld [vmem:[%s3 + $0x28] sm:$0xf]
      %v615 = vld [vmem:[%s3 + $0x2c] sm:$0xf]
      %v616 = vld [vmem:[%s3 + $0x30] sm:$0xf]
      %v617 = vld [vmem:[%s3 + $0x34] sm:$0xf]
      %v618 = vld [vmem:[%s3 + $0x38] sm:$0xf]
      %v619 = vld [vmem:[%s3 + $0x3c] sm:$0xf]
      %v620 = vld [vmem:[%s3 + $0x40] sm:$0xf]
      %v638 = vunpack.c.l.b16 %v604
      %v639 = vunpack.c.l.b16 %v605
      %v640 = vunpack.c.l.b16 %v606
      %v641 = vunpack.c.l.b16 %v607
      %v642 = vunpack.c.l.b16 %v608
      %v643 = vunpack.c.l.b16 %v609
      %v644 = vunpack.c.l.b16 %v610
      %v645 = vunpack.c.l.b16 %v611
      %v646 = vunpack.c.l.b16 %v612
      %v647 = vunpack.c.l.b16 %v613
      %v648 = vunpack.c.l.b16 %v614
      %v649 = vunpack.c.l.b16 %v615
      %v650 = vunpack.c.l.b16 %v616
      %v651 = vunpack.c.l.b16 %v617
      %v652 = vunpack.c.l.b16 %v618
      %v653 = vunpack.c.l.b16 %v619
      %v654 = vunpack.c.l.b16 %v620
      %v655 = vpack.c.b16 %v639, %v638
      %v656 = vpack.c.b16 %v641, %v640
      %v657 = vpack.c.b16 %v643, %v642
      %v658 = vpack.c.b16 %v645, %v644
      %v659 = vpack.c.b16 %v647, %v646
      %v660 = vpack.c.b16 %v649, %v648
      %v661 = vpack.c.b16 %v651, %v650
      %v662 = vpack.c.b16 %v653, %v652
      %v663 = vpack.c.b16 %v654, %v654
      %vm664 = vcmask 261120
      %v666 = vsel %vm664, %v655, 0
      %v669 = vsel %vm664, %v656, 0
      %v672 = vsel %vm664, %v657, 0
      %v675 = vsel %vm664, %v658, 0
      %v678 = vsel %vm664, %v659, 0
      %v681 = vsel %vm664, %v660, 0
      %v684 = vsel %vm664, %v661, 0
      %v687 = vsel %vm664, %v662, 0
      %v690 = vsel %vm664, %v663, 0
      %692 = vmatprep.subr.bf16.mxu0 %v601
      %693 = vmatpush1.bf16.msra.mxu0 %v600
      %694 = vmatprep.subr.bf16.mxu0 %v603
      %695 = vmatpush1.bf16.msra.mxu0 %v602
      %696 = vmatprep.subr.bf16.mxu0 0
      %697 = vmatpush1.bf16.msra.mxu0 0
      %698 = vmatprep.subr.bf16.mxu0 0
      %699 = vmatpush1.bf16.msra.mxu0 0
      %700 = vmatprep.subr.bf16.mxu0 0
      %701 = vmatpush1.bf16.msra.mxu0 0
      %702 = vmatprep.subr.bf16.mxu0 0
      %703 = vmatpush1.bf16.msra.mxu0 0
      %704 = vmatprep.subr.bf16.mxu0 0
      %705 = vmatpush1.bf16.msra.mxu0 0
      %706 = vmatprep.subr.bf16.mxu0 0
      %707 = vmatpush1.bf16.msra.mxu0 0
      %708 = vmatprep.subr.bf16.mxu0 0
      %709 = vmatpush1.bf16.msra.mxu0 0
      %710 = vmatprep.subr.bf16.mxu0 0
      %711 = vmatpush1.bf16.msra.mxu0 0
      %712 = vmatprep.subr.bf16.mxu0 0
      %713 = vmatpush1.bf16.msra.mxu0 0
      %714 = vmatprep.subr.bf16.mxu0 0
      %715 = vmatpush1.bf16.msra.mxu0 0
      %716 = vmatprep.subr.bf16.mxu0 0
      %717 = vmatpush1.bf16.msra.mxu0 0
      %718 = vmatprep.subr.bf16.mxu0 0
      %719 = vmatpush1.bf16.msra.mxu0 0
      %720 = vmatprep.subr.bf16.mxu0 0
      %721 = vmatpush1.bf16.msra.mxu0 0
      %722 = vmatprep.subr.bf16.mxu0 0
      %723 = vmatpush1.bf16.msra.mxu0 0
      %724 = vmatprep.mubr.bf16.mxu0 0
      %725 = vmatmul.mubr.bf16.gmra.mrb[0].mxu0 %v666
      %v726 = vpop.f32.mrb[0].mxu0
      %v727 = vadd.f32 0.0, %v726
      %v728 = vpop.f32.mrb[0].mxu0
      %v729 = vadd.f32 0.0, %v728
      %v730 = vpop.f32.mrb[0].mxu0
      %v731 = vadd.f32 0.0, %v730
      %v732 = vpop.f32.mrb[0].mxu0
      %v733 = vadd.f32 0.0, %v732
      %734 = vmatprep.mubr.bf16.mxu0 0
      %735 = vmatmul.mubr.bf16.gmra.mrb[0].mxu0 %v669
      %v736 = vpop.f32.mrb[0].mxu0
      %v737 = vadd.f32 0.0, %v736
      %v738 = vpop.f32.mrb[0].mxu0
      %v739 = vadd.f32 0.0, %v738
      %v740 = vpop.f32.mrb[0].mxu0
      %v741 = vadd.f32 0.0, %v740
      %v742 = vpop.f32.mrb[0].mxu0
      %v743 = vadd.f32 0.0, %v742
      %744 = vmatprep.mubr.bf16.mxu0 0
      %745 = vmatmul.mubr.bf16.gmra.mrb[0].mxu0 %v672
      %v746 = vpop.f32.mrb[0].mxu0
      %v747 = vadd.f32 0.0, %v746
      %v748 = vpop.f32.mrb[0].mxu0
      %v749 = vadd.f32 0.0, %v748
      %v750 = vpop.f32.mrb[0].mxu0
      %v751 = vadd.f32 0.0, %v750
      %v752 = vpop.f32.mrb[0].mxu0
      %v753 = vadd.f32 0.0, %v752
      %754 = vmatprep.mubr.bf16.mxu0 0
      %755 = vmatmul.mubr.bf16.gmra.mrb[0].mxu0 %v675
      %v756 = vpop.f32.mrb[0].mxu0
      %v757 = vadd.f32 0.0, %v756
      %v758 = vpop.f32.mrb[0].mxu0
      %v759 = vadd.f32 0.0, %v758
      %v760 = vpop.f32.mrb[0].mxu0
      %v761 = vadd.f32 0.0, %v760
      %v762 = vpop.f32.mrb[0].mxu0
      %v763 = vadd.f32 0.0, %v762
      %764 = vmatprep.mubr.bf16.mxu0 0
      %765 = vmatmul.mubr.bf16.gmra.mrb[0].mxu0 %v678
      %v766 = vpop.f32.mrb[0].mxu0
      %v767 = vadd.f32 0.0, %v766
      %v768 = vpop.f32.mrb[0].mxu0
      %v769 = vadd.f32 0.0, %v768
      %v770 = vpop.f32.mrb[0].mxu0
      %v771 = vadd.f32 0.0, %v770
      %v772 = vpop.f32.mrb[0].mxu0
      %v773 = vadd.f32 0.0, %v772
      %774 = vmatprep.mubr.bf16.mxu0 0
      %775 = vmatmul.mubr.bf16.gmra.mrb[0].mxu0 %v681
      %v776 = vpop.f32.mrb[0].mxu0
      %v777 = vadd.f32 0.0, %v776
      %v778 = vpop.f32.mrb[0].mxu0
      %v779 = vadd.f32 0.0, %v778
      %v780 = vpop.f32.mrb[0].mxu0
      %v781 = vadd.f32 0.0, %v780
      %v782 = vpop.f32.mrb[0].mxu0
      %v783 = vadd.f32 0.0, %v782
      %784 = vmatprep.mubr.bf16.mxu0 0
      %785 = vmatmul.mubr.bf16.gmra.mrb[0].mxu0 %v684
      %v786 = vpop.f32.mrb[0].mxu0
      %v787 = vadd.f32 0.0, %v786
      %v788 = vpop.f32.mrb[0].mxu0
      %v789 = vadd.f32 0.0, %v788
      %v790 = vpop.f32.mrb[0].mxu0
      %v791 = vadd.f32 0.0, %v790
      %v792 = vpop.f32.mrb[0].mxu0
      %v793 = vadd.f32 0.0, %v792
      %794 = vmatprep.mubr.bf16.mxu0 0
      %795 = vmatmul.mubr.bf16.gmra.mrb[0].mxu0 %v687
      %v796 = vpop.f32.mrb[0].mxu0
      %v797 = vadd.f32 0.0, %v796
      %v798 = vpop.f32.mrb[0].mxu0
      %v799 = vadd.f32 0.0, %v798
      %v800 = vpop.f32.mrb[0].mxu0
      %v801 = vadd.f32 0.0, %v800
      %v802 = vpop.f32.mrb[0].mxu0
      %v803 = vadd.f32 0.0, %v802
      %804 = vmatprep.mubr.bf16.mxu0 0
      %805 = vmatmul.mubr.bf16.gmra.mrb[0].mxu0 %v690
      %v806 = vpop.f32.mrb[0].mxu0
      %v807 = vadd.f32 0.0, %v806
      %v808 = vpop.f32.mrb[0].mxu0
      %v809 = vadd.f32 0.0, %v808
      %v810 = vpop.f32.mrb[0].mxu0
      %v811 = vpop.f32.mrb[0].mxu0
      %812 = vdwg.mxu0
      %v813 = vld [vmem:[%s5] sm:$0xff]
      %815 = vset.pattern.permute.xlu0 0
      %816 = vperm.xlu0 %815, %v813
      %v817 = vpop.permute.xlu0 %816
      %v819 = vadd.f32 %v807, %v817
      %v820 = vadd.f32 %v809, %v817
      %821 = vst [vmem:[%s478] sm:$0xff] %v819
      %822 = vst [vmem:[%s478 + $0x8] sm:$0xff] %v820
      %v823 = vld [vmem:[%s4] sm:$0xff]
      %v824 = vld [vmem:[%s4 + $0x8] sm:$0xff]
      %v825 = vld [vmem:[%s4 + $0x10] sm:$0xff]
      %v826 = vld [vmem:[%s4 + $0x18] sm:$0xff]
      %v827 = vld [vmem:[%s4 + $0x20] sm:$0xff]
      %v828 = vld [vmem:[%s4 + $0x28] sm:$0xff]
      %v829 = vld [vmem:[%s4 + $0x30] sm:$0xff]
      %v830 = vld [vmem:[%s4 + $0x38] sm:$0xff]
      %v831 = vld [vmem:[%s4 + $0x40] sm:$0xff]
      %v832 = vld [vmem:[%s4 + $0x48] sm:$0xff]
      %v833 = vld [vmem:[%s4 + $0x50] sm:$0xff]
      %v834 = vld [vmem:[%s4 + $0x58] sm:$0xff]
      %v835 = vld [vmem:[%s4 + $0x60] sm:$0xff]
      %v836 = vld [vmem:[%s4 + $0x68] sm:$0xff]
      %v837 = vld [vmem:[%s4 + $0x70] sm:$0xff]
      %v838 = vld [vmem:[%s4 + $0x78] sm:$0xff]
      %840 = vset.pattern.permute.xlu0 0
      %841 = vperm.xlu0 %840, %v823
      %v842 = vpop.permute.xlu0 %841
      %845 = vset.pattern.permute.xlu0 0
      %846 = vperm.xlu0 %845, %v824
      %v847 = vpop.permute.xlu0 %846
      %850 = vset.pattern.permute.xlu0 0
      %851 = vperm.xlu0 %850, %v825
      %v852 = vpop.permute.xlu0 %851
      %855 = vset.pattern.permute.xlu0 0
      %856 = vperm.xlu0 %855, %v826
      %v857 = vpop.permute.xlu0 %856
      %860 = vset.pattern.permute.xlu0 0
      %861 = vperm.xlu0 %860, %v827
      %v862 = vpop.permute.xlu0 %861
      %865 = vset.pattern.permute.xlu0 0
      %866 = vperm.xlu0 %865, %v828
      %v867 = vpop.permute.xlu0 %866
      %870 = vset.pattern.permute.xlu0 0
      %871 = vperm.xlu0 %870, %v829
      %v872 = vpop.permute.xlu0 %871
      %875 = vset.pattern.permute.xlu0 0
      %876 = vperm.xlu0 %875, %v830
      %v877 = vpop.permute.xlu0 %876
      %880 = vset.pattern.permute.xlu0 0
      %881 = vperm.xlu0 %880, %v831
      %v882 = vpop.permute.xlu0 %881
      %885 = vset.pattern.permute.xlu0 0
      %886 = vperm.xlu0 %885, %v832
      %v887 = vpop.permute.xlu0 %886
      %890 = vset.pattern.permute.xlu0 0
      %891 = vperm.xlu0 %890, %v833
      %v892 = vpop.permute.xlu0 %891
      %895 = vset.pattern.permute.xlu0 0
      %896 = vperm.xlu0 %895, %v834
      %v897 = vpop.permute.xlu0 %896
      %900 = vset.pattern.permute.xlu0 0
      %901 = vperm.xlu0 %900, %v835
      %v902 = vpop.permute.xlu0 %901
      %905 = vset.pattern.permute.xlu0 0
      %906 = vperm.xlu0 %905, %v836
      %v907 = vpop.permute.xlu0 %906
      %910 = vset.pattern.permute.xlu0 0
      %911 = vperm.xlu0 %910, %v837
      %v912 = vpop.permute.xlu0 %911
      %915 = vset.pattern.permute.xlu0 0
      %916 = vperm.xlu0 %915, %v838
      %v917 = vpop.permute.xlu0 %916
      %v919 = vadd.f32 %v727, %v842
      %v920 = vadd.f32 %v729, %v842
      %v921 = vadd.f32 %v731, %v847
      %v922 = vadd.f32 %v733, %v847
      %v923 = vadd.f32 %v737, %v852
      %v924 = vadd.f32 %v739, %v852
      %v925 = vadd.f32 %v741, %v857
      %v926 = vadd.f32 %v743, %v857
      %v927 = vadd.f32 %v747, %v862
      %v928 = vadd.f32 %v749, %v862
      %v929 = vadd.f32 %v751, %v867
      %v930 = vadd.f32 %v753, %v867
      %v931 = vadd.f32 %v757, %v872
      %v932 = vadd.f32 %v759, %v872
      %v933 = vadd.f32 %v761, %v877
      %v934 = vadd.f32 %v763, %v877
      %v935 = vadd.f32 %v767, %v882
      %v936 = vadd.f32 %v769, %v882
      %v937 = vadd.f32 %v771, %v887
      %v938 = vadd.f32 %v773, %v887
      %v939 = vadd.f32 %v777, %v892
      %v940 = vadd.f32 %v779, %v892
      %v941 = vadd.f32 %v781, %v897
      %v942 = vadd.f32 %v783, %v897
      %v943 = vadd.f32 %v787, %v902
      %v944 = vadd.f32 %v789, %v902
      %v945 = vadd.f32 %v791, %v907
      %v946 = vadd.f32 %v793, %v907
      %v947 = vadd.f32 %v797, %v912
      %v948 = vadd.f32 %v799, %v912
      %v949 = vadd.f32 %v801, %v917
      %v950 = vadd.f32 %v803, %v917
      %v951 = vmax.f32 %v919, 0.0
      %v952 = vmax.f32 %v920, 0.0
      %v953 = vmax.f32 %v921, 0.0
      %v954 = vmax.f32 %v922, 0.0
      %v955 = vmax.f32 %v923, 0.0
      %v956 = vmax.f32 %v924, 0.0
      %v957 = vmax.f32 %v925, 0.0
      %v958 = vmax.f32 %v926, 0.0
      %v959 = vmax.f32 %v927, 0.0
      %v960 = vmax.f32 %v928, 0.0
      %v961 = vmax.f32 %v929, 0.0
      %v962 = vmax.f32 %v930, 0.0
      %v963 = vmax.f32 %v931, 0.0
      %v964 = vmax.f32 %v932, 0.0
      %v965 = vmax.f32 %v933, 0.0
      %v966 = vmax.f32 %v934, 0.0
      %v967 = vmax.f32 %v935, 0.0
      %v968 = vmax.f32 %v936, 0.0
      %v969 = vmax.f32 %v937, 0.0
      %v970 = vmax.f32 %v938, 0.0
      %v971 = vmax.f32 %v939, 0.0
      %v972 = vmax.f32 %v940, 0.0
      %v973 = vmax.f32 %v941, 0.0
      %v974 = vmax.f32 %v942, 0.0
      %v975 = vmax.f32 %v943, 0.0
      %v976 = vmax.f32 %v944, 0.0
      %v977 = vmax.f32 %v945, 0.0
      %v978 = vmax.f32 %v946, 0.0
      %v979 = vmax.f32 %v947, 0.0
      %v980 = vmax.f32 %v948, 0.0
      %v981 = vmax.f32 %v949, 0.0
      %v982 = vmax.f32 %v950, 0.0
      %v983 = vpack.c.bf16 %v953, %v951
      %v984 = vpack.c.bf16 %v954, %v952
      %v985 = vpack.c.bf16 %v957, %v955
      %v986 = vpack.c.bf16 %v958, %v956
      %v987 = vpack.c.bf16 %v961, %v959
      %v988 = vpack.c.bf16 %v962, %v960
      %v989 = vpack.c.bf16 %v965, %v963
      %v990 = vpack.c.bf16 %v966, %v964
      %v991 = vpack.c.bf16 %v969, %v967
      %v992 = vpack.c.bf16 %v970, %v968
      %v993 = vpack.c.bf16 %v973, %v971
      %v994 = vpack.c.bf16 %v974, %v972
      %v995 = vpack.c.bf16 %v977, %v975
      %v996 = vpack.c.bf16 %v978, %v976
      %v997 = vpack.c.bf16 %v981, %v979
      %v998 = vpack.c.bf16 %v982, %v980
      %v999 = vld [vmem:[%s6] sm:$0xf]
      %v1000 = vld [vmem:[%s6 + $0x4] sm:$0xf]
      %v1001 = vld [vmem:[%s6 + $0x8] sm:$0xf]
      %v1002 = vld [vmem:[%s6 + $0xc] sm:$0xf]
      %v1003 = vld [vmem:[%s6 + $0x10] sm:$0xf]
      %v1004 = vld [vmem:[%s6 + $0x14] sm:$0xf]
      %v1005 = vld [vmem:[%s6 + $0x18] sm:$0xf]
      %v1006 = vld [vmem:[%s6 + $0x1c] sm:$0xf]
      %v1007 = vld [vmem:[%s6 + $0x20] sm:$0xf]
      %v1017 = vunpack.c.l.b16 %v999
      %v1018 = vunpack.c.l.b16 %v1000
      %v1019 = vunpack.c.l.b16 %v1001
      %v1020 = vunpack.c.l.b16 %v1002
      %v1021 = vunpack.c.l.b16 %v1003
      %v1022 = vunpack.c.l.b16 %v1004
      %v1023 = vunpack.c.l.b16 %v1005
      %v1024 = vunpack.c.l.b16 %v1006
      %v1025 = vunpack.c.l.b16 %v1007
      %v1026 = vpack.c.b16 %v1018, %v1017
      %v1027 = vpack.c.b16 %v1020, %v1019
      %v1028 = vpack.c.b16 %v1022, %v1021
      %v1029 = vpack.c.b16 %v1024, %v1023
      %v1030 = vpack.c.b16 %v1025, %v1025
      %1036 = vmatprep.subr.bf16.mxu0 %v984
      %1037 = vmatpush1.bf16.msra.mxu0 %v983
      %1038 = vmatprep.subr.bf16.mxu0 %v986
      %1039 = vmatpush1.bf16.msra.mxu0 %v985
      %1040 = vmatprep.subr.bf16.mxu0 %v988
      %1041 = vmatpush1.bf16.msra.mxu0 %v987
      %1042 = vmatprep.subr.bf16.mxu0 %v990
      %1043 = vmatpush1.bf16.msra.mxu0 %v989
      %1044 = vmatprep.subr.bf16.mxu0 %v992
      %1045 = vmatpush1.bf16.msra.mxu0 %v991
      %1046 = vmatprep.subr.bf16.mxu0 %v994
      %1047 = vmatpush1.bf16.msra.mxu0 %v993
      %1048 = vmatprep.subr.bf16.mxu0 %v996
      %1049 = vmatpush1.bf16.msra.mxu0 %v995
      %1050 = vmatprep.subr.bf16.mxu0 %v998
      %1051 = vmatpush1.bf16.msra.mxu0 %v997
      %1052 = vmatprep.subr.bf16.mxu0 0
      %1053 = vmatpush1.bf16.msra.mxu0 0
      %1054 = vmatprep.subr.bf16.mxu0 0
      %1055 = vmatpush1.bf16.msra.mxu0 0
      %1056 = vmatprep.subr.bf16.mxu0 0
      %1057 = vmatpush1.bf16.msra.mxu0 0
      %1058 = vmatprep.subr.bf16.mxu0 0
      %1059 = vmatpush1.bf16.msra.mxu0 0
      %1060 = vmatprep.subr.bf16.mxu0 0
      %1061 = vmatpush1.bf16.msra.mxu0 0
      %1062 = vmatprep.subr.bf16.mxu0 0
      %1063 = vmatpush1.bf16.msra.mxu0 0
      %1064 = vmatprep.subr.bf16.mxu0 0
      %1065 = vmatpush1.bf16.msra.mxu0 0
      %1066 = vmatprep.subr.bf16.mxu0 0
      %1067 = vmatpush1.bf16.msra.mxu0 0
      %1068 = vmatprep.mubr.bf16.mxu0 0
      %1069 = vmatmul.mubr.bf16.gmra.mrb[0].mxu0 %v1026
      %v1070 = vpop.f32.mrb[0].mxu0
      %v1071 = vadd.f32 0.0, %v1070
      %v1072 = vpop.f32.mrb[0].mxu0
      %v1073 = vadd.f32 0.0, %v1072
      %v1074 = vpop.f32.mrb[0].mxu0
      %v1075 = vadd.f32 0.0, %v1074
      %v1076 = vpop.f32.mrb[0].mxu0
      %v1077 = vadd.f32 0.0, %v1076
      %1078 = vmatprep.mubr.bf16.mxu0 0
      %1079 = vmatmul.mubr.bf16.gmra.mrb[0].mxu0 %v1027
      %v1080 = vpop.f32.mrb[0].mxu0
      %v1081 = vadd.f32 0.0, %v1080
      %v1082 = vpop.f32.mrb[0].mxu0
      %v1083 = vadd.f32 0.0, %v1082
      %v1084 = vpop.f32.mrb[0].mxu0
      %v1085 = vadd.f32 0.0, %v1084
      %v1086 = vpop.f32.mrb[0].mxu0
      %v1087 = vadd.f32 0.0, %v1086
      %1088 = vmatprep.mubr.bf16.mxu0 0
      %1089 = vmatmul.mubr.bf16.gmra.mrb[0].mxu0 %v1028
      %v1090 = vpop.f32.mrb[0].mxu0
      %v1091 = vadd.f32 0.0, %v1090
      %v1092 = vpop.f32.mrb[0].mxu0
      %v1093 = vadd.f32 0.0, %v1092
      %v1094 = vpop.f32.mrb[0].mxu0
      %v1095 = vadd.f32 0.0, %v1094
      %v1096 = vpop.f32.mrb[0].mxu0
      %v1097 = vadd.f32 0.0, %v1096
      %1098 = vmatprep.mubr.bf16.mxu0 0
      %1099 = vmatmul.mubr.bf16.gmra.mrb[0].mxu0 %v1029
      %v1100 = vpop.f32.mrb[0].mxu0
      %v1101 = vadd.f32 0.0, %v1100
      %v1102 = vpop.f32.mrb[0].mxu0
      %v1103 = vadd.f32 0.0, %v1102
      %v1104 = vpop.f32.mrb[0].mxu0
      %v1105 = vadd.f32 0.0, %v1104
      %v1106 = vpop.f32.mrb[0].mxu0
      %v1107 = vadd.f32 0.0, %v1106
      %1108 = vmatprep.mubr.bf16.mxu0 0
      %1109 = vmatmul.mubr.bf16.gmra.mrb[0].mxu0 %v1030
      %v1110 = vpop.f32.mrb[0].mxu0
      %v1111 = vadd.f32 0.0, %v1110
      %v1112 = vpop.f32.mrb[0].mxu0
      %v1113 = vadd.f32 0.0, %v1112
      %v1114 = vpop.f32.mrb[0].mxu0
      %v1115 = vpop.f32.mrb[0].mxu0
      %1116 = vdwg.mxu0
      %v1117 = vld [vmem:[%s8] sm:$0xff]
      %1119 = vset.pattern.permute.xlu0 0
      %1120 = vperm.xlu0 %1119, %v1117
      %v1121 = vpop.permute.xlu0 %1120
      %v1123 = vadd.f32 %v1111, %v1121
      %v1124 = vadd.f32 %v1113, %v1121
      %1125 = vst [vmem:[%s478 + $0x10] sm:$0xff] %v1123
      %1126 = vst [vmem:[%s478 + $0x18] sm:$0xff] %v1124
      %v1127 = vld [vmem:[%s7] sm:$0xff]
      %v1128 = vld [vmem:[%s7 + $0x8] sm:$0xff]
      %v1129 = vld [vmem:[%s7 + $0x10] sm:$0xff]
      %v1130 = vld [vmem:[%s7 + $0x18] sm:$0xff]
      %v1131 = vld [vmem:[%s7 + $0x20] sm:$0xff]
      %v1132 = vld [vmem:[%s7 + $0x28] sm:$0xff]
      %v1133 = vld [vmem:[%s7 + $0x30] sm:$0xff]
      %v1134 = vld [vmem:[%s7 + $0x38] sm:$0xff]
      %1136 = vset.pattern.permute.xlu0 0
      %1137 = vperm.xlu0 %1136, %v1127
      %v1138 = vpop.permute.xlu0 %1137
      %1141 = vset.pattern.permute.xlu0 0
      %1142 = vperm.xlu0 %1141, %v1128
      %v1143 = vpop.permute.xlu0 %1142
      %1146 = vset.pattern.permute.xlu0 0
      %1147 = vperm.xlu0 %1146, %v1129
      %v1148 = vpop.permute.xlu0 %1147
      %1151 = vset.pattern.permute.xlu0 0
      %1152 = vperm.xlu0 %1151, %v1130
      %v1153 = vpop.permute.xlu0 %1152
      %1156 = vset.pattern.permute.xlu0 0
      %1157 = vperm.xlu0 %1156, %v1131
      %v1158 = vpop.permute.xlu0 %1157
      %1161 = vset.pattern.permute.xlu0 0
      %1162 = vperm.xlu0 %1161, %v1132
      %v1163 = vpop.permute.xlu0 %1162
      %1166 = vset.pattern.permute.xlu0 0
      %1167 = vperm.xlu0 %1166, %v1133
      %v1168 = vpop.permute.xlu0 %1167
      %1171 = vset.pattern.permute.xlu0 0
      %1172 = vperm.xlu0 %1171, %v1134
      %v1173 = vpop.permute.xlu0 %1172
      %v1175 = vadd.f32 %v1071, %v1138
      %v1176 = vadd.f32 %v1073, %v1138
      %v1177 = vadd.f32 %v1075, %v1143
      %v1178 = vadd.f32 %v1077, %v1143
      %v1179 = vadd.f32 %v1081, %v1148
      %v1180 = vadd.f32 %v1083, %v1148
      %v1181 = vadd.f32 %v1085, %v1153
      %v1182 = vadd.f32 %v1087, %v1153
      %v1183 = vadd.f32 %v1091, %v1158
      %v1184 = vadd.f32 %v1093, %v1158
      %v1185 = vadd.f32 %v1095, %v1163
      %v1186 = vadd.f32 %v1097, %v1163
      %v1187 = vadd.f32 %v1101, %v1168
      %v1188 = vadd.f32 %v1103, %v1168
      %v1189 = vadd.f32 %v1105, %v1173
      %v1190 = vadd.f32 %v1107, %v1173
      %v1191 = vmax.f32 %v1175, 0.0
      %v1192 = vmax.f32 %v1176, 0.0
      %v1193 = vmax.f32 %v1177, 0.0
      %v1194 = vmax.f32 %v1178, 0.0
      %v1195 = vmax.f32 %v1179, 0.0
      %v1196 = vmax.f32 %v1180, 0.0
      %v1197 = vmax.f32 %v1181, 0.0
      %v1198 = vmax.f32 %v1182, 0.0
      %v1199 = vmax.f32 %v1183, 0.0
      %v1200 = vmax.f32 %v1184, 0.0
      %v1201 = vmax.f32 %v1185, 0.0
      %v1202 = vmax.f32 %v1186, 0.0
      %v1203 = vmax.f32 %v1187, 0.0
      %v1204 = vmax.f32 %v1188, 0.0
      %v1205 = vmax.f32 %v1189, 0.0
      %v1206 = vmax.f32 %v1190, 0.0
      %v1207 = vpack.c.bf16 %v1193, %v1191
      %v1208 = vpack.c.bf16 %v1194, %v1192
      %v1209 = vpack.c.bf16 %v1197, %v1195
      %v1210 = vpack.c.bf16 %v1198, %v1196
      %v1211 = vpack.c.bf16 %v1201, %v1199
      %v1212 = vpack.c.bf16 %v1202, %v1200
      %v1213 = vpack.c.bf16 %v1205, %v1203
      %v1214 = vpack.c.bf16 %v1206, %v1204
      %v1215 = vld [vmem:[%s9] sm:$0xf]
      %v1216 = vld [vmem:[%s9 + $0x4] sm:$0xf]
      %v1217 = vld [vmem:[%s9 + $0x8] sm:$0xf]
      %v1218 = vld [vmem:[%s9 + $0xc] sm:$0xf]
      %v1219 = vld [vmem:[%s9 + $0x10] sm:$0xf]
      %v1220 = vld [vmem:[%s9 + $0x14] sm:$0xf]
      %v1221 = vld [vmem:[%s9 + $0x18] sm:$0xf]
      %v1222 = vld [vmem:[%s9 + $0x1c] sm:$0xf]
      %v1223 = vld [vmem:[%s10] sm:$0xff]
      %v1224 = vld [vmem:[%s10 + $0x8] sm:$0xff]
      %v1225 = vld [vmem:[%s10 + $0x10] sm:$0xff]
      %v1226 = vld [vmem:[%s10 + $0x18] sm:$0xff]
      %v1227 = vld [vmem:[%s10 + $0x20] sm:$0xff]
      %v1228 = vld [vmem:[%s10 + $0x28] sm:$0xff]
      %v1229 = vld [vmem:[%s10 + $0x30] sm:$0xff]
      %v1230 = vld [vmem:[%s10 + $0x38] sm:$0xff]
      %1232 = vset.pattern.permute.xlu0 0
      %1233 = vperm.xlu0 %1232, %v1223
      %v1234 = vpop.permute.xlu0 %1233
      %1237 = vset.pattern.permute.xlu0 0
      %1238 = vperm.xlu0 %1237, %v1224
      %v1239 = vpop.permute.xlu0 %1238
      %1242 = vset.pattern.permute.xlu0 0
      %1243 = vperm.xlu0 %1242, %v1225
      %v1244 = vpop.permute.xlu0 %1243
      %1247 = vset.pattern.permute.xlu0 0
      %1248 = vperm.xlu0 %1247, %v1226
      %v1249 = vpop.permute.xlu0 %1248
      %1252 = vset.pattern.permute.xlu0 0
      %1253 = vperm.xlu0 %1252, %v1227
      %v1254 = vpop.permute.xlu0 %1253
      %1257 = vset.pattern.permute.xlu0 0
      %1258 = vperm.xlu0 %1257, %v1228
      %v1259 = vpop.permute.xlu0 %1258
      %1262 = vset.pattern.permute.xlu0 0
      %1263 = vperm.xlu0 %1262, %v1229
      %v1264 = vpop.permute.xlu0 %1263
      %1267 = vset.pattern.permute.xlu0 0
      %1268 = vperm.xlu0 %1267, %v1230
      %v1269 = vpop.permute.xlu0 %1268
      %v1279 = vunpack.c.l.b16 %v1215
      %v1280 = vunpack.c.l.b16 %v1216
      %v1281 = vunpack.c.l.b16 %v1217
      %v1282 = vunpack.c.l.b16 %v1218
      %v1283 = vunpack.c.l.b16 %v1219
      %v1284 = vunpack.c.l.b16 %v1220
      %v1285 = vunpack.c.l.b16 %v1221
      %v1286 = vunpack.c.l.b16 %v1222
      %v1287 = vpack.c.b16 %v1280, %v1279
      %v1288 = vpack.c.b16 %v1282, %v1281
      %v1289 = vpack.c.b16 %v1284, %v1283
      %v1290 = vpack.c.b16 %v1286, %v1285
      %vm1291 = vcmask 523264
      %v1293 = vsel %vm1291, %v1287, 0
      %v1296 = vsel %vm1291, %v1288, 0
      %v1299 = vsel %vm1291, %v1289, 0
      %v1302 = vsel %vm1291, %v1290, 0
      %1304 = vmatprep.subr.bf16.mxu0 %v1208
      %1305 = vmatpush1.bf16.msra.mxu0 %v1207
      %1306 = vmatprep.subr.bf16.mxu0 %v1210
      %1307 = vmatpush1.bf16.msra.mxu0 %v1209
      %1308 = vmatprep.subr.bf16.mxu0 %v1212
      %1309 = vmatpush1.bf16.msra.mxu0 %v1211
      %1310 = vmatprep.subr.bf16.mxu0 %v1214
      %1311 = vmatpush1.bf16.msra.mxu0 %v1213
      %1312 = vmatprep.subr.bf16.mxu0 0
      %1313 = vmatpush1.bf16.msra.mxu0 0
      %1314 = vmatprep.subr.bf16.mxu0 0
      %1315 = vmatpush1.bf16.msra.mxu0 0
      %1316 = vmatprep.subr.bf16.mxu0 0
      %1317 = vmatpush1.bf16.msra.mxu0 0
      %1318 = vmatprep.subr.bf16.mxu0 0
      %1319 = vmatpush1.bf16.msra.mxu0 0
      %1320 = vmatprep.subr.bf16.mxu0 0
      %1321 = vmatpush1.bf16.msra.mxu0 0
      %1322 = vmatprep.subr.bf16.mxu0 0
      %1323 = vmatpush1.bf16.msra.mxu0 0
      %1324 = vmatprep.subr.bf16.mxu0 0
      %1325 = vmatpush1.bf16.msra.mxu0 0
      %1326 = vmatprep.subr.bf16.mxu0 0
      %1327 = vmatpush1.bf16.msra.mxu0 0
      %1328 = vmatprep.subr.bf16.mxu0 0
      %1329 = vmatpush1.bf16.msra.mxu0 0
      %1330 = vmatprep.subr.bf16.mxu0 0
      %1331 = vmatpush1.bf16.msra.mxu0 0
      %1332 = vmatprep.subr.bf16.mxu0 0
      %1333 = vmatpush1.bf16.msra.mxu0 0
      %1334 = vmatprep.subr.bf16.mxu0 0
      %1335 = vmatpush1.bf16.msra.mxu0 0
      %1336 = vmatprep.mubr.bf16.mxu0 0
      %1337 = vmatmul.mubr.bf16.gmra.mrb[0].mxu0 %v1293
      %v1338 = vpop.f32.mrb[0].mxu0
      %v1339 = vadd.f32 %v1234, %v1338
      %v1340 = vpop.f32.mrb[0].mxu0
      %v1341 = vadd.f32 %v1234, %v1340
      %v1342 = vpop.f32.mrb[0].mxu0
      %v1343 = vadd.f32 %v1239, %v1342
      %v1344 = vpop.f32.mrb[0].mxu0
      %v1345 = vadd.f32 %v1239, %v1344
      %1346 = vmatprep.mubr.bf16.mxu0 0
      %1347 = vmatmul.mubr.bf16.gmra.mrb[0].mxu0 %v1296
      %v1348 = vpop.f32.mrb[0].mxu0
      %v1349 = vadd.f32 %v1244, %v1348
      %v1350 = vpop.f32.mrb[0].mxu0
      %v1351 = vadd.f32 %v1244, %v1350
      %v1352 = vpop.f32.mrb[0].mxu0
      %v1353 = vadd.f32 %v1249, %v1352
      %v1354 = vpop.f32.mrb[0].mxu0
      %v1355 = vadd.f32 %v1249, %v1354
      %1356 = vmatprep.mubr.bf16.mxu0 0
      %1357 = vmatmul.mubr.bf16.gmra.mrb[0].mxu0 %v1299
      %v1358 = vpop.f32.mrb[0].mxu0
      %v1359 = vadd.f32 %v1254, %v1358
      %v1360 = vpop.f32.mrb[0].mxu0
      %v1361 = vadd.f32 %v1254, %v1360
      %v1362 = vpop.f32.mrb[0].mxu0
      %v1363 = vadd.f32 %v1259, %v1362
      %v1364 = vpop.f32.mrb[0].mxu0
      %v1365 = vadd.f32 %v1259, %v1364
      %1366 = vmatprep.mubr.bf16.mxu0 0
      %1367 = vmatmul.mubr.bf16.gmra.mrb[0].mxu0 %v1302
      %v1368 = vpop.f32.mrb[0].mxu0
      %v1369 = vadd.f32 %v1264, %v1368
      %v1370 = vpop.f32.mrb[0].mxu0
      %v1371 = vadd.f32 %v1264, %v1370
      %v1372 = vpop.f32.mrb[0].mxu0
      %v1373 = vadd.f32 %v1269, %v1372
      %v1374 = vpop.f32.mrb[0].mxu0
      %v1375 = vadd.f32 %v1269, %v1374
      %1376 = vdwg.mxu0
      %v1377 = vmax.f32 %v1339, 0.0
      %v1378 = vmax.f32 %v1341, 0.0
      %v1379 = vmax.f32 %v1343, 0.0
      %v1380 = vmax.f32 %v1345, 0.0
      %v1381 = vmax.f32 %v1349, 0.0
      %v1382 = vmax.f32 %v1351, 0.0
      %v1383 = vmax.f32 %v1353, 0.0
      %v1384 = vmax.f32 %v1355, 0.0
      %v1385 = vmax.f32 %v1359, 0.0
      %v1386 = vmax.f32 %v1361, 0.0
      %v1387 = vmax.f32 %v1363, 0.0
      %v1388 = vmax.f32 %v1365, 0.0
      %v1389 = vmax.f32 %v1369, 0.0
      %v1390 = vmax.f32 %v1371, 0.0
      %v1391 = vmax.f32 %v1373, 0.0
      %v1392 = vmax.f32 %v1375, 0.0
      %v1393 = vpack.c.bf16 %v1379, %v1377
      %v1394 = vpack.c.bf16 %v1380, %v1378
      %v1395 = vpack.c.bf16 %v1383, %v1381
      %v1396 = vpack.c.bf16 %v1384, %v1382
      %v1397 = vpack.c.bf16 %v1387, %v1385
      %v1398 = vpack.c.bf16 %v1388, %v1386
      %v1399 = vpack.c.bf16 %v1391, %v1389
      %v1400 = vpack.c.bf16 %v1392, %v1390
      %v1401 = vld [vmem:[%s11] sm:$0xf]
      %v1402 = vld [vmem:[%s11 + $0x4] sm:$0xf]
      %v1403 = vld [vmem:[%s11 + $0x8] sm:$0xf]
      %v1404 = vld [vmem:[%s11 + $0xc] sm:$0xf]
      %v1405 = vld [vmem:[%s11 + $0x10] sm:$0xf]
      %v1406 = vld [vmem:[%s11 + $0x14] sm:$0xf]
      %v1407 = vld [vmem:[%s11 + $0x18] sm:$0xf]
      %v1408 = vld [vmem:[%s11 + $0x1c] sm:$0xf]
      %v1409 = vld [vmem:[%s11 + $0x20] sm:$0xf]
      %v1410 = vld [vmem:[%s11 + $0x24] sm:$0xf]
      %v1411 = vld [vmem:[%s11 + $0x28] sm:$0xf]
      %v1412 = vld [vmem:[%s11 + $0x2c] sm:$0xf]
      %v1413 = vld [vmem:[%s11 + $0x30] sm:$0xf]
      %v1414 = vld [vmem:[%s11 + $0x34] sm:$0xf]
      %v1415 = vld [vmem:[%s11 + $0x38] sm:$0xf]
      %v1416 = vld [vmem:[%s11 + $0x3c] sm:$0xf]
      %v1417 = vld [vmem:[%s11 + $0x40] sm:$0xf]
      %v1435 = vunpack.c.l.b16 %v1401
      %v1436 = vunpack.c.l.b16 %v1402
      %v1437 = vunpack.c.l.b16 %v1403
      %v1438 = vunpack.c.l.b16 %v1404
      %v1439 = vunpack.c.l.b16 %v1405
      %v1440 = vunpack.c.l.b16 %v1406
      %v1441 = vunpack.c.l.b16 %v1407
      %v1442 = vunpack.c.l.b16 %v1408
      %v1443 = vunpack.c.l.b16 %v1409
      %v1444 = vunpack.c.l.b16 %v1410
      %v1445 = vunpack.c.l.b16 %v1411
      %v1446 = vunpack.c.l.b16 %v1412
      %v1447 = vunpack.c.l.b16 %v1413
      %v1448 = vunpack.c.l.b16 %v1414
      %v1449 = vunpack.c.l.b16 %v1415
      %v1450 = vunpack.c.l.b16 %v1416
      %v1451 = vunpack.c.l.b16 %v1417
      %v1452 = vpack.c.b16 %v1436, %v1435
      %v1453 = vpack.c.b16 %v1438, %v1437
      %v1454 = vpack.c.b16 %v1440, %v1439
      %v1455 = vpack.c.b16 %v1442, %v1441
      %v1456 = vpack.c.b16 %v1444, %v1443
      %v1457 = vpack.c.b16 %v1446, %v1445
      %v1458 = vpack.c.b16 %v1448, %v1447
      %v1459 = vpack.c.b16 %v1450, %v1449
      %v1460 = vpack.c.b16 %v1451, %v1451
      %v1462 = vsel %vm1291, %v1452, 0
      %v1465 = vsel %vm1291, %v1453, 0
      %v1468 = vsel %vm1291, %v1454, 0
      %v1471 = vsel %vm1291, %v1455, 0
      %v1474 = vsel %vm1291, %v1456, 0
      %v1477 = vsel %vm1291, %v1457, 0
      %v1480 = vsel %vm1291, %v1458, 0
      %v1483 = vsel %vm1291, %v1459, 0
      %v1486 = vsel %vm1291, %v1460, 0
      %1488 = vmatprep.subr.bf16.mxu0 %v1394
      %1489 = vmatpush1.bf16.msra.mxu0 %v1393
      %1490 = vmatprep.subr.bf16.mxu0 %v1396
      %1491 = vmatpush1.bf16.msra.mxu0 %v1395
      %1492 = vmatprep.subr.bf16.mxu0 %v1398
      %1493 = vmatpush1.bf16.msra.mxu0 %v1397
      %1494 = vmatprep.subr.bf16.mxu0 %v1400
      %1495 = vmatpush1.bf16.msra.mxu0 %v1399
      %1496 = vmatprep.subr.bf16.mxu0 0
      %1497 = vmatpush1.bf16.msra.mxu0 0
      %1498 = vmatprep.subr.bf16.mxu0 0
      %1499 = vmatpush1.bf16.msra.mxu0 0
      %1500 = vmatprep.subr.bf16.mxu0 0
      %1501 = vmatpush1.bf16.msra.mxu0 0
      %1502 = vmatprep.subr.bf16.mxu0 0
      %1503 = vmatpush1.bf16.msra.mxu0 0
      %1504 = vmatprep.subr.bf16.mxu0 0
      %1505 = vmatpush1.bf16.msra.mxu0 0
      %1506 = vmatprep.subr.bf16.mxu0 0
      %1507 = vmatpush1.bf16.msra.mxu0 0
      %1508 = vmatprep.subr.bf16.mxu0 0
      %1509 = vmatpush1.bf16.msra.mxu0 0
      %1510 = vmatprep.subr.bf16.mxu0 0
      %1511 = vmatpush1.bf16.msra.mxu0 0
      %1512 = vmatprep.subr.bf16.mxu0 0
      %1513 = vmatpush1.bf16.msra.mxu0 0
      %1514 = vmatprep.subr.bf16.mxu0 0
      %1515 = vmatpush1.bf16.msra.mxu0 0
      %1516 = vmatprep.subr.bf16.mxu0 0
      %1517 = vmatpush1.bf16.msra.mxu0 0
      %1518 = vmatprep.subr.bf16.mxu0 0
      %1519 = vmatpush1.bf16.msra.mxu0 0
      %1520 = vmatprep.mubr.bf16.mxu0 0
      %1521 = vmatmul.mubr.bf16.gmra.mrb[0].mxu0 %v1462
      %v1522 = vpop.f32.mrb[0].mxu0
      %v1523 = vadd.f32 0.0, %v1522
      %v1524 = vpop.f32.mrb[0].mxu0
      %v1525 = vadd.f32 0.0, %v1524
      %v1526 = vpop.f32.mrb[0].mxu0
      %v1527 = vadd.f32 0.0, %v1526
      %v1528 = vpop.f32.mrb[0].mxu0
      %v1529 = vadd.f32 0.0, %v1528
      %1530 = vmatprep.mubr.bf16.mxu0 0
      %1531 = vmatmul.mubr.bf16.gmra.mrb[0].mxu0 %v1465
      %v1532 = vpop.f32.mrb[0].mxu0
      %v1533 = vadd.f32 0.0, %v1532
      %v1534 = vpop.f32.mrb[0].mxu0
      %v1535 = vadd.f32 0.0, %v1534
      %v1536 = vpop.f32.mrb[0].mxu0
      %v1537 = vadd.f32 0.0, %v1536
      %v1538 = vpop.f32.mrb[0].mxu0
      %v1539 = vadd.f32 0.0, %v1538
      %1540 = vmatprep.mubr.bf16.mxu0 0
      %1541 = vmatmul.mubr.bf16.gmra.mrb[0].mxu0 %v1468
      %v1542 = vpop.f32.mrb[0].mxu0
      %v1543 = vadd.f32 0.0, %v1542
      %v1544 = vpop.f32.mrb[0].mxu0
      %v1545 = vadd.f32 0.0, %v1544
      %v1546 = vpop.f32.mrb[0].mxu0
      %v1547 = vadd.f32 0.0, %v1546
      %v1548 = vpop.f32.mrb[0].mxu0
      %v1549 = vadd.f32 0.0, %v1548
      %1550 = vmatprep.mubr.bf16.mxu0 0
      %1551 = vmatmul.mubr.bf16.gmra.mrb[0].mxu0 %v1471
      %v1552 = vpop.f32.mrb[0].mxu0
      %v1553 = vadd.f32 0.0, %v1552
      %v1554 = vpop.f32.mrb[0].mxu0
      %v1555 = vadd.f32 0.0, %v1554
      %v1556 = vpop.f32.mrb[0].mxu0
      %v1557 = vadd.f32 0.0, %v1556
      %v1558 = vpop.f32.mrb[0].mxu0
      %v1559 = vadd.f32 0.0, %v1558
      %1560 = vmatprep.mubr.bf16.mxu0 0
      %1561 = vmatmul.mubr.bf16.gmra.mrb[0].mxu0 %v1474
      %v1562 = vpop.f32.mrb[0].mxu0
      %v1563 = vadd.f32 0.0, %v1562
      %v1564 = vpop.f32.mrb[0].mxu0
      %v1565 = vadd.f32 0.0, %v1564
      %v1566 = vpop.f32.mrb[0].mxu0
      %v1567 = vadd.f32 0.0, %v1566
      %v1568 = vpop.f32.mrb[0].mxu0
      %v1569 = vadd.f32 0.0, %v1568
      %1570 = vmatprep.mubr.bf16.mxu0 0
      %1571 = vmatmul.mubr.bf16.gmra.mrb[0].mxu0 %v1477
      %v1572 = vpop.f32.mrb[0].mxu0
      %v1573 = vadd.f32 0.0, %v1572
      %v1574 = vpop.f32.mrb[0].mxu0
      %v1575 = vadd.f32 0.0, %v1574
      %v1576 = vpop.f32.mrb[0].mxu0
      %v1577 = vadd.f32 0.0, %v1576
      %v1578 = vpop.f32.mrb[0].mxu0
      %v1579 = vadd.f32 0.0, %v1578
      %1580 = vmatprep.mubr.bf16.mxu0 0
      %1581 = vmatmul.mubr.bf16.gmra.mrb[0].mxu0 %v1480
      %v1582 = vpop.f32.mrb[0].mxu0
      %v1583 = vadd.f32 0.0, %v1582
      %v1584 = vpop.f32.mrb[0].mxu0
      %v1585 = vadd.f32 0.0, %v1584
      %v1586 = vpop.f32.mrb[0].mxu0
      %v1587 = vadd.f32 0.0, %v1586
      %v1588 = vpop.f32.mrb[0].mxu0
      %v1589 = vadd.f32 0.0, %v1588
      %1590 = vmatprep.mubr.bf16.mxu0 0
      %1591 = vmatmul.mubr.bf16.gmra.mrb[0].mxu0 %v1483
      %v1592 = vpop.f32.mrb[0].mxu0
      %v1593 = vadd.f32 0.0, %v1592
      %v1594 = vpop.f32.mrb[0].mxu0
      %v1595 = vadd.f32 0.0, %v1594
      %v1596 = vpop.f32.mrb[0].mxu0
      %v1597 = vadd.f32 0.0, %v1596
      %v1598 = vpop.f32.mrb[0].mxu0
      %v1599 = vadd.f32 0.0, %v1598
      %1600 = vmatprep.mubr.bf16.mxu0 0
      %1601 = vmatmul.mubr.bf16.gmra.mrb[0].mxu0 %v1486
      %v1602 = vpop.f32.mrb[0].mxu0
      %v1603 = vadd.f32 0.0, %v1602
      %v1604 = vpop.f32.mrb[0].mxu0
      %v1605 = vadd.f32 0.0, %v1604
      %v1606 = vpop.f32.mrb[0].mxu0
      %v1607 = vpop.f32.mrb[0].mxu0
      %1608 = vdwg.mxu0
      %v1609 = vld [vmem:[%s12] sm:$0xff]
      %1611 = vset.pattern.permute.xlu0 0
      %1612 = vperm.xlu0 %1611, %v1609
      %v1613 = vpop.permute.xlu0 %1612
      %v1615 = vadd.f32 %v1603, %v1613
      %v1616 = vadd.f32 %v1605, %v1613
      %1617 = vst [vmem:[%s478 + $0x20] sm:$0xff] %v1615
      %1618 = vst [vmem:[%s478 + $0x28] sm:$0xff] %v1616
      %v1619 = vld [vmem:[%s4] sm:$0xff]
      %v1620 = vld [vmem:[%s4 + $0x8] sm:$0xff]
      %v1621 = vld [vmem:[%s4 + $0x10] sm:$0xff]
      %v1622 = vld [vmem:[%s4 + $0x18] sm:$0xff]
      %v1623 = vld [vmem:[%s4 + $0x20] sm:$0xff]
      %v1624 = vld [vmem:[%s4 + $0x28] sm:$0xff]
      %v1625 = vld [vmem:[%s4 + $0x30] sm:$0xff]
      %v1626 = vld [vmem:[%s4 + $0x38] sm:$0xff]
      %v1627 = vld [vmem:[%s4 + $0x40] sm:$0xff]
      %v1628 = vld [vmem:[%s4 + $0x48] sm:$0xff]
      %v1629 = vld [vmem:[%s4 + $0x50] sm:$0xff]
      %v1630 = vld [vmem:[%s4 + $0x58] sm:$0xff]
      %v1631 = vld [vmem:[%s4 + $0x60] sm:$0xff]
      %v1632 = vld [vmem:[%s4 + $0x68] sm:$0xff]
      %v1633 = vld [vmem:[%s4 + $0x70] sm:$0xff]
      %v1634 = vld [vmem:[%s4 + $0x78] sm:$0xff]
      %1636 = vset.pattern.permute.xlu0 0
      %1637 = vperm.xlu0 %1636, %v1619
      %v1638 = vpop.permute.xlu0 %1637
      %1641 = vset.pattern.permute.xlu0 0
      %1642 = vperm.xlu0 %1641, %v1620
      %v1643 = vpop.permute.xlu0 %1642
      %1646 = vset.pattern.permute.xlu0 0
      %1647 = vperm.xlu0 %1646, %v1621
      %v1648 = vpop.permute.xlu0 %1647
      %1651 = vset.pattern.permute.xlu0 0
      %1652 = vperm.xlu0 %1651, %v1622
      %v1653 = vpop.permute.xlu0 %1652
      %1656 = vset.pattern.permute.xlu0 0
      %1657 = vperm.xlu0 %1656, %v1623
      %v1658 = vpop.permute.xlu0 %1657
      %1661 = vset.pattern.permute.xlu0 0
      %1662 = vperm.xlu0 %1661, %v1624
      %v1663 = vpop.permute.xlu0 %1662
      %1666 = vset.pattern.permute.xlu0 0
      %1667 = vperm.xlu0 %1666, %v1625
      %v1668 = vpop.permute.xlu0 %1667
      %1671 = vset.pattern.permute.xlu0 0
      %1672 = vperm.xlu0 %1671, %v1626
      %v1673 = vpop.permute.xlu0 %1672
      %1676 = vset.pattern.permute.xlu0 0
      %1677 = vperm.xlu0 %1676, %v1627
      %v1678 = vpop.permute.xlu0 %1677
      %1681 = vset.pattern.permute.xlu0 0
      %1682 = vperm.xlu0 %1681, %v1628
      %v1683 = vpop.permute.xlu0 %1682
      %1686 = vset.pattern.permute.xlu0 0
      %1687 = vperm.xlu0 %1686, %v1629
      %v1688 = vpop.permute.xlu0 %1687
      %1691 = vset.pattern.permute.xlu0 0
      %1692 = vperm.xlu0 %1691, %v1630
      %v1693 = vpop.permute.xlu0 %1692
      %1696 = vset.pattern.permute.xlu0 0
      %1697 = vperm.xlu0 %1696, %v1631
      %v1698 = vpop.permute.xlu0 %1697
      %1701 = vset.pattern.permute.xlu0 0
      %1702 = vperm.xlu0 %1701, %v1632
      %v1703 = vpop.permute.xlu0 %1702
      %1706 = vset.pattern.permute.xlu0 0
      %1707 = vperm.xlu0 %1706, %v1633
      %v1708 = vpop.permute.xlu0 %1707
      %1711 = vset.pattern.permute.xlu0 0
      %1712 = vperm.xlu0 %1711, %v1634
      %v1713 = vpop.permute.xlu0 %1712
      %v1715 = vadd.f32 %v1523, %v1638
      %v1716 = vadd.f32 %v1525, %v1638
      %v1717 = vadd.f32 %v1527, %v1643
      %v1718 = vadd.f32 %v1529, %v1643
      %v1719 = vadd.f32 %v1533, %v1648
      %v1720 = vadd.f32 %v1535, %v1648
      %v1721 = vadd.f32 %v1537, %v1653
      %v1722 = vadd.f32 %v1539, %v1653
      %v1723 = vadd.f32 %v1543, %v1658
      %v1724 = vadd.f32 %v1545, %v1658
      %v1725 = vadd.f32 %v1547, %v1663
      %v1726 = vadd.f32 %v1549, %v1663
      %v1727 = vadd.f32 %v1553, %v1668
      %v1728 = vadd.f32 %v1555, %v1668
      %v1729 = vadd.f32 %v1557, %v1673
      %v1730 = vadd.f32 %v1559, %v1673
      %v1731 = vadd.f32 %v1563, %v1678
      %v1732 = vadd.f32 %v1565, %v1678
      %v1733 = vadd.f32 %v1567, %v1683
      %v1734 = vadd.f32 %v1569, %v1683
      %v1735 = vadd.f32 %v1573, %v1688
      %v1736 = vadd.f32 %v1575, %v1688
      %v1737 = vadd.f32 %v1577, %v1693
      %v1738 = vadd.f32 %v1579, %v1693
      %v1739 = vadd.f32 %v1583, %v1698
      %v1740 = vadd.f32 %v1585, %v1698
      %v1741 = vadd.f32 %v1587, %v1703
      %v1742 = vadd.f32 %v1589, %v1703
      %v1743 = vadd.f32 %v1593, %v1708
      %v1744 = vadd.f32 %v1595, %v1708
      %v1745 = vadd.f32 %v1597, %v1713
      %v1746 = vadd.f32 %v1599, %v1713
      %v1747 = vmax.f32 %v1715, 0.0
      %v1748 = vmax.f32 %v1716, 0.0
      %v1749 = vmax.f32 %v1717, 0.0
      %v1750 = vmax.f32 %v1718, 0.0
      %v1751 = vmax.f32 %v1719, 0.0
      %v1752 = vmax.f32 %v1720, 0.0
      %v1753 = vmax.f32 %v1721, 0.0
      %v1754 = vmax.f32 %v1722, 0.0
      %v1755 = vmax.f32 %v1723, 0.0
      %v1756 = vmax.f32 %v1724, 0.0
      %v1757 = vmax.f32 %v1725, 0.0
      %v1758 = vmax.f32 %v1726, 0.0
      %v1759 = vmax.f32 %v1727, 0.0
      %v1760 = vmax.f32 %v1728, 0.0
      %v1761 = vmax.f32 %v1729, 0.0
      %v1762 = vmax.f32 %v1730, 0.0
      %v1763 = vmax.f32 %v1731, 0.0
      %v1764 = vmax.f32 %v1732, 0.0
      %v1765 = vmax.f32 %v1733, 0.0
      %v1766 = vmax.f32 %v1734, 0.0
      %v1767 = vmax.f32 %v1735, 0.0
      %v1768 = vmax.f32 %v1736, 0.0
      %v1769 = vmax.f32 %v1737, 0.0
      %v1770 = vmax.f32 %v1738, 0.0
      %v1771 = vmax.f32 %v1739, 0.0
      %v1772 = vmax.f32 %v1740, 0.0
      %v1773 = vmax.f32 %v1741, 0.0
      %v1774 = vmax.f32 %v1742, 0.0
      %v1775 = vmax.f32 %v1743, 0.0
      %v1776 = vmax.f32 %v1744, 0.0
      %v1777 = vmax.f32 %v1745, 0.0
      %v1778 = vmax.f32 %v1746, 0.0
      %v1779 = vpack.c.bf16 %v1749, %v1747
      %v1780 = vpack.c.bf16 %v1750, %v1748
      %v1781 = vpack.c.bf16 %v1753, %v1751
      %v1782 = vpack.c.bf16 %v1754, %v1752
      %v1783 = vpack.c.bf16 %v1757, %v1755
      %v1784 = vpack.c.bf16 %v1758, %v1756
      %v1785 = vpack.c.bf16 %v1761, %v1759
      %v1786 = vpack.c.bf16 %v1762, %v1760
      %v1787 = vpack.c.bf16 %v1765, %v1763
      %v1788 = vpack.c.bf16 %v1766, %v1764
      %v1789 = vpack.c.bf16 %v1769, %v1767
      %v1790 = vpack.c.bf16 %v1770, %v1768
      %v1791 = vpack.c.bf16 %v1773, %v1771
      %v1792 = vpack.c.bf16 %v1774, %v1772
      %v1793 = vpack.c.bf16 %v1777, %v1775
      %v1794 = vpack.c.bf16 %v1778, %v1776
      %v1795 = vld [vmem:[%s6] sm:$0xf]
      %v1796 = vld [vmem:[%s6 + $0x4] sm:$0xf]
      %v1797 = vld [vmem:[%s6 + $0x8] sm:$0xf]
      %v1798 = vld [vmem:[%s6 + $0xc] sm:$0xf]
      %v1799 = vld [vmem:[%s6 + $0x10] sm:$0xf]
      %v1800 = vld [vmem:[%s6 + $0x14] sm:$0xf]
      %v1801 = vld [vmem:[%s6 + $0x18] sm:$0xf]
      %v1802 = vld [vmem:[%s6 + $0x1c] sm:$0xf]
      %v1803 = vld [vmem:[%s6 + $0x20] sm:$0xf]
      %v1813 = vunpack.c.l.b16 %v1795
      %v1814 = vunpack.c.l.b16 %v1796
      %v1815 = vunpack.c.l.b16 %v1797
      %v1816 = vunpack.c.l.b16 %v1798
      %v1817 = vunpack.c.l.b16 %v1799
      %v1818 = vunpack.c.l.b16 %v1800
      %v1819 = vunpack.c.l.b16 %v1801
      %v1820 = vunpack.c.l.b16 %v1802
      %v1821 = vunpack.c.l.b16 %v1803
      %v1822 = vpack.c.b16 %v1814, %v1813
      %v1823 = vpack.c.b16 %v1816, %v1815
      %v1824 = vpack.c.b16 %v1818, %v1817
      %v1825 = vpack.c.b16 %v1820, %v1819
      %v1826 = vpack.c.b16 %v1821, %v1821
      %1832 = vmatprep.subr.bf16.mxu0 %v1780
      %1833 = vmatpush1.bf16.msra.mxu0 %v1779
      %1834 = vmatprep.subr.bf16.mxu0 %v1782
      %1835 = vmatpush1.bf16.msra.mxu0 %v1781
      %1836 = vmatprep.subr.bf16.mxu0 %v1784
      %1837 = vmatpush1.bf16.msra.mxu0 %v1783
      %1838 = vmatprep.subr.bf16.mxu0 %v1786
      %1839 = vmatpush1.bf16.msra.mxu0 %v1785
      %1840 = vmatprep.subr.bf16.mxu0 %v1788
      %1841 = vmatpush1.bf16.msra.mxu0 %v1787
      %1842 = vmatprep.subr.bf16.mxu0 %v1790
      %1843 = vmatpush1.bf16.msra.mxu0 %v1789
      %1844 = vmatprep.subr.bf16.mxu0 %v1792
      %1845 = vmatpush1.bf16.msra.mxu0 %v1791
      %1846 = vmatprep.subr.bf16.mxu0 %v1794
      %1847 = vmatpush1.bf16.msra.mxu0 %v1793
      %1848 = vmatprep.subr.bf16.mxu0 0
      %1849 = vmatpush1.bf16.msra.mxu0 0
      %1850 = vmatprep.subr.bf16.mxu0 0
      %1851 = vmatpush1.bf16.msra.mxu0 0
      %1852 = vmatprep.subr.bf16.mxu0 0
      %1853 = vmatpush1.bf16.msra.mxu0 0
      %1854 = vmatprep.subr.bf16.mxu0 0
      %1855 = vmatpush1.bf16.msra.mxu0 0
      %1856 = vmatprep.subr.bf16.mxu0 0
      %1857 = vmatpush1.bf16.msra.mxu0 0
      %1858 = vmatprep.subr.bf16.mxu0 0
      %1859 = vmatpush1.bf16.msra.mxu0 0
      %1860 = vmatprep.subr.bf16.mxu0 0
      %1861 = vmatpush1.bf16.msra.mxu0 0
      %1862 = vmatprep.subr.bf16.mxu0 0
      %1863 = vmatpush1.bf16.msra.mxu0 0
      %1864 = vmatprep.mubr.bf16.mxu0 0
      %1865 = vmatmul.mubr.bf16.gmra.mrb[0].mxu0 %v1822
      %v1866 = vpop.f32.mrb[0].mxu0
      %v1867 = vadd.f32 0.0, %v1866
      %v1868 = vpop.f32.mrb[0].mxu0
      %v1869 = vadd.f32 0.0, %v1868
      %v1870 = vpop.f32.mrb[0].mxu0
      %v1871 = vadd.f32 0.0, %v1870
      %v1872 = vpop.f32.mrb[0].mxu0
      %v1873 = vadd.f32 0.0, %v1872
      %1874 = vmatprep.mubr.bf16.mxu0 0
      %1875 = vmatmul.mubr.bf16.gmra.mrb[0].mxu0 %v1823
      %v1876 = vpop.f32.mrb[0].mxu0
      %v1877 = vadd.f32 0.0, %v1876
      %v1878 = vpop.f32.mrb[0].mxu0
      %v1879 = vadd.f32 0.0, %v1878
      %v1880 = vpop.f32.mrb[0].mxu0
      %v1881 = vadd.f32 0.0, %v1880
      %v1882 = vpop.f32.mrb[0].mxu0
      %v1883 = vadd.f32 0.0, %v1882
      %1884 = vmatprep.mubr.bf16.mxu0 0
      %1885 = vmatmul.mubr.bf16.gmra.mrb[0].mxu0 %v1824
      %v1886 = vpop.f32.mrb[0].mxu0
      %v1887 = vadd.f32 0.0, %v1886
      %v1888 = vpop.f32.mrb[0].mxu0
      %v1889 = vadd.f32 0.0, %v1888
      %v1890 = vpop.f32.mrb[0].mxu0
      %v1891 = vadd.f32 0.0, %v1890
      %v1892 = vpop.f32.mrb[0].mxu0
      %v1893 = vadd.f32 0.0, %v1892
      %1894 = vmatprep.mubr.bf16.mxu0 0
      %1895 = vmatmul.mubr.bf16.gmra.mrb[0].mxu0 %v1825
      %v1896 = vpop.f32.mrb[0].mxu0
      %v1897 = vadd.f32 0.0, %v1896
      %v1898 = vpop.f32.mrb[0].mxu0
      %v1899 = vadd.f32 0.0, %v1898
      %v1900 = vpop.f32.mrb[0].mxu0
      %v1901 = vadd.f32 0.0, %v1900
      %v1902 = vpop.f32.mrb[0].mxu0
      %v1903 = vadd.f32 0.0, %v1902
      %1904 = vmatprep.mubr.bf16.mxu0 0
      %1905 = vmatmul.mubr.bf16.gmra.mrb[0].mxu0 %v1826
      %v1906 = vpop.f32.mrb[0].mxu0
      %v1907 = vadd.f32 0.0, %v1906
      %v1908 = vpop.f32.mrb[0].mxu0
      %v1909 = vadd.f32 0.0, %v1908
      %v1910 = vpop.f32.mrb[0].mxu0
      %v1911 = vpop.f32.mrb[0].mxu0
      %1912 = vdwg.mxu0
      %v1913 = vld [vmem:[%s8] sm:$0xff]
      %1915 = vset.pattern.permute.xlu0 0
      %1916 = vperm.xlu0 %1915, %v1913
      %v1917 = vpop.permute.xlu0 %1916
      %v1919 = vadd.f32 %v1907, %v1917
      %v1920 = vadd.f32 %v1909, %v1917
      %1921 = vst [vmem:[%s478 + $0x30] sm:$0xff] %v1919
      %1922 = vst [vmem:[%s478 + $0x38] sm:$0xff] %v1920
      %v1923 = vld [vmem:[%s7] sm:$0xff]
      %v1924 = vld [vmem:[%s7 + $0x8] sm:$0xff]
      %v1925 = vld [vmem:[%s7 + $0x10] sm:$0xff]
      %v1926 = vld [vmem:[%s7 + $0x18] sm:$0xff]
      %v1927 = vld [vmem:[%s7 + $0x20] sm:$0xff]
      %v1928 = vld [vmem:[%s7 + $0x28] sm:$0xff]
      %v1929 = vld [vmem:[%s7 + $0x30] sm:$0xff]
      %v1930 = vld [vmem:[%s7 + $0x38] sm:$0xff]
      %1932 = vset.pattern.permute.xlu0 0
      %1933 = vperm.xlu0 %1932, %v1923
      %v1934 = vpop.permute.xlu0 %1933
      %1937 = vset.pattern.permute.xlu0 0
      %1938 = vperm.xlu0 %1937, %v1924
      %v1939 = vpop.permute.xlu0 %1938
      %1942 = vset.pattern.permute.xlu0 0
      %1943 = vperm.xlu0 %1942, %v1925
      %v1944 = vpop.permute.xlu0 %1943
      %1947 = vset.pattern.permute.xlu0 0
      %1948 = vperm.xlu0 %1947, %v1926
      %v1949 = vpop.permute.xlu0 %1948
      %1952 = vset.pattern.permute.xlu0 0
      %1953 = vperm.xlu0 %1952, %v1927
      %v1954 = vpop.permute.xlu0 %1953
      %1957 = vset.pattern.permute.xlu0 0
      %1958 = vperm.xlu0 %1957, %v1928
      %v1959 = vpop.permute.xlu0 %1958
      %1962 = vset.pattern.permute.xlu0 0
      %1963 = vperm.xlu0 %1962, %v1929
      %v1964 = vpop.permute.xlu0 %1963
      %1967 = vset.pattern.permute.xlu0 0
      %1968 = vperm.xlu0 %1967, %v1930
      %v1969 = vpop.permute.xlu0 %1968
      %v1971 = vadd.f32 %v1867, %v1934
      %v1972 = vadd.f32 %v1869, %v1934
      %v1973 = vadd.f32 %v1871, %v1939
      %v1974 = vadd.f32 %v1873, %v1939
      %v1975 = vadd.f32 %v1877, %v1944
      %v1976 = vadd.f32 %v1879, %v1944
      %v1977 = vadd.f32 %v1881, %v1949
      %v1978 = vadd.f32 %v1883, %v1949
      %v1979 = vadd.f32 %v1887, %v1954
      %v1980 = vadd.f32 %v1889, %v1954
      %v1981 = vadd.f32 %v1891, %v1959
      %v1982 = vadd.f32 %v1893, %v1959
      %v1983 = vadd.f32 %v1897, %v1964
      %v1984 = vadd.f32 %v1899, %v1964
      %v1985 = vadd.f32 %v1901, %v1969
      %v1986 = vadd.f32 %v1903, %v1969
      %v1987 = vmax.f32 %v1971, 0.0
      %v1988 = vmax.f32 %v1972, 0.0
      %v1989 = vmax.f32 %v1973, 0.0
      %v1990 = vmax.f32 %v1974, 0.0
      %v1991 = vmax.f32 %v1975, 0.0
      %v1992 = vmax.f32 %v1976, 0.0
      %v1993 = vmax.f32 %v1977, 0.0
      %v1994 = vmax.f32 %v1978, 0.0
      %v1995 = vmax.f32 %v1979, 0.0
      %v1996 = vmax.f32 %v1980, 0.0
      %v1997 = vmax.f32 %v1981, 0.0
      %v1998 = vmax.f32 %v1982, 0.0
      %v1999 = vmax.f32 %v1983, 0.0
      %v2000 = vmax.f32 %v1984, 0.0
      %v2001 = vmax.f32 %v1985, 0.0
      %v2002 = vmax.f32 %v1986, 0.0
      %v2003 = vpack.c.bf16 %v1989, %v1987
      %v2004 = vpack.c.bf16 %v1990, %v1988
      %v2005 = vpack.c.bf16 %v1993, %v1991
      %v2006 = vpack.c.bf16 %v1994, %v1992
      %v2007 = vpack.c.bf16 %v1997, %v1995
      %v2008 = vpack.c.bf16 %v1998, %v1996
      %v2009 = vpack.c.bf16 %v2001, %v1999
      %v2010 = vpack.c.bf16 %v2002, %v2000
      %v2011 = vld [vmem:[%s9] sm:$0xf]
      %v2012 = vld [vmem:[%s9 + $0x4] sm:$0xf]
      %v2013 = vld [vmem:[%s9 + $0x8] sm:$0xf]
      %v2014 = vld [vmem:[%s9 + $0xc] sm:$0xf]
      %v2015 = vld [vmem:[%s9 + $0x10] sm:$0xf]
      %v2016 = vld [vmem:[%s9 + $0x14] sm:$0xf]
      %v2017 = vld [vmem:[%s9 + $0x18] sm:$0xf]
      %v2018 = vld [vmem:[%s9 + $0x1c] sm:$0xf]
      %v2019 = vld [vmem:[%s10] sm:$0xff]
      %v2020 = vld [vmem:[%s10 + $0x8] sm:$0xff]
      %v2021 = vld [vmem:[%s10 + $0x10] sm:$0xff]
      %v2022 = vld [vmem:[%s10 + $0x18] sm:$0xff]
      %v2023 = vld [vmem:[%s10 + $0x20] sm:$0xff]
      %v2024 = vld [vmem:[%s10 + $0x28] sm:$0xff]
      %v2025 = vld [vmem:[%s10 + $0x30] sm:$0xff]
      %v2026 = vld [vmem:[%s10 + $0x38] sm:$0xff]
      %2028 = vset.pattern.permute.xlu0 0
      %2029 = vperm.xlu0 %2028, %v2019
      %v2030 = vpop.permute.xlu0 %2029
      %2033 = vset.pattern.permute.xlu0 0
      %2034 = vperm.xlu0 %2033, %v2020
      %v2035 = vpop.permute.xlu0 %2034
      %2038 = vset.pattern.permute.xlu0 0
      %2039 = vperm.xlu0 %2038, %v2021
      %v2040 = vpop.permute.xlu0 %2039
      %2043 = vset.pattern.permute.xlu0 0
      %2044 = vperm.xlu0 %2043, %v2022
      %v2045 = vpop.permute.xlu0 %2044
      %2048 = vset.pattern.permute.xlu0 0
      %2049 = vperm.xlu0 %2048, %v2023
      %v2050 = vpop.permute.xlu0 %2049
      %2053 = vset.pattern.permute.xlu0 0
      %2054 = vperm.xlu0 %2053, %v2024
      %v2055 = vpop.permute.xlu0 %2054
      %2058 = vset.pattern.permute.xlu0 0
      %2059 = vperm.xlu0 %2058, %v2025
      %v2060 = vpop.permute.xlu0 %2059
      %2063 = vset.pattern.permute.xlu0 0
      %2064 = vperm.xlu0 %2063, %v2026
      %v2065 = vpop.permute.xlu0 %2064
      %v2075 = vunpack.c.l.b16 %v2011
      %v2076 = vunpack.c.l.b16 %v2012
      %v2077 = vunpack.c.l.b16 %v2013
      %v2078 = vunpack.c.l.b16 %v2014
      %v2079 = vunpack.c.l.b16 %v2015
      %v2080 = vunpack.c.l.b16 %v2016
      %v2081 = vunpack.c.l.b16 %v2017
      %v2082 = vunpack.c.l.b16 %v2018
      %v2083 = vpack.c.b16 %v2076, %v2075
      %v2084 = vpack.c.b16 %v2078, %v2077
      %v2085 = vpack.c.b16 %v2080, %v2079
      %v2086 = vpack.c.b16 %v2082, %v2081
      %v2088 = vsel %vm1291, %v2083, 0
      %v2091 = vsel %vm1291, %v2084, 0
      %v2094 = vsel %vm1291, %v2085, 0
      %v2097 = vsel %vm1291, %v2086, 0
      %2099 = vmatprep.subr.bf16.mxu0 %v2004
      %2100 = vmatpush1.bf16.msra.mxu0 %v2003
      %2101 = vmatprep.subr.bf16.mxu0 %v2006
      %2102 = vmatpush1.bf16.msra.mxu0 %v2005
      %2103 = vmatprep.subr.bf16.mxu0 %v2008
      %2104 = vmatpush1.bf16.msra.mxu0 %v2007
      %2105 = vmatprep.subr.bf16.mxu0 %v2010
      %2106 = vmatpush1.bf16.msra.mxu0 %v2009
      %2107 = vmatprep.subr.bf16.mxu0 0
      %2108 = vmatpush1.bf16.msra.mxu0 0
      %2109 = vmatprep.subr.bf16.mxu0 0
      %2110 = vmatpush1.bf16.msra.mxu0 0
      %2111 = vmatprep.subr.bf16.mxu0 0
      %2112 = vmatpush1.bf16.msra.mxu0 0
      %2113 = vmatprep.subr.bf16.mxu0 0
      %2114 = vmatpush1.bf16.msra.mxu0 0
      %2115 = vmatprep.subr.bf16.mxu0 0
      %2116 = vmatpush1.bf16.msra.mxu0 0
      %2117 = vmatprep.subr.bf16.mxu0 0
      %2118 = vmatpush1.bf16.msra.mxu0 0
      %2119 = vmatprep.subr.bf16.mxu0 0
      %2120 = vmatpush1.bf16.msra.mxu0 0
      %2121 = vmatprep.subr.bf16.mxu0 0
      %2122 = vmatpush1.bf16.msra.mxu0 0
      %2123 = vmatprep.subr.bf16.mxu0 0
      %2124 = vmatpush1.bf16.msra.mxu0 0
      %2125 = vmatprep.subr.bf16.mxu0 0
      %2126 = vmatpush1.bf16.msra.mxu0 0
      %2127 = vmatprep.subr.bf16.mxu0 0
      %2128 = vmatpush1.bf16.msra.mxu0 0
      %2129 = vmatprep.subr.bf16.mxu0 0
      %2130 = vmatpush1.bf16.msra.mxu0 0
      %2131 = vmatprep.mubr.bf16.mxu0 0
      %2132 = vmatmul.mubr.bf16.gmra.mrb[0].mxu0 %v2088
      %v2133 = vpop.f32.mrb[0].mxu0
      %v2134 = vadd.f32 %v2030, %v2133
      %v2135 = vpop.f32.mrb[0].mxu0
      %v2136 = vadd.f32 %v2030, %v2135
      %v2137 = vpop.f32.mrb[0].mxu0
      %v2138 = vadd.f32 %v2035, %v2137
      %v2139 = vpop.f32.mrb[0].mxu0
      %v2140 = vadd.f32 %v2035, %v2139
      %2141 = vmatprep.mubr.bf16.mxu0 0
      %2142 = vmatmul.mubr.bf16.gmra.mrb[0].mxu0 %v2091
      %v2143 = vpop.f32.mrb[0].mxu0
      %v2144 = vadd.f32 %v2040, %v2143
      %v2145 = vpop.f32.mrb[0].mxu0
      %v2146 = vadd.f32 %v2040, %v2145
      %v2147 = vpop.f32.mrb[0].mxu0
      %v2148 = vadd.f32 %v2045, %v2147
      %v2149 = vpop.f32.mrb[0].mxu0
      %v2150 = vadd.f32 %v2045, %v2149
      %2151 = vmatprep.mubr.bf16.mxu0 0
      %2152 = vmatmul.mubr.bf16.gmra.mrb[0].mxu0 %v2094
      %v2153 = vpop.f32.mrb[0].mxu0
      %v2154 = vadd.f32 %v2050, %v2153
      %v2155 = vpop.f32.mrb[0].mxu0
      %v2156 = vadd.f32 %v2050, %v2155
      %v2157 = vpop.f32.mrb[0].mxu0
      %v2158 = vadd.f32 %v2055, %v2157
      %v2159 = vpop.f32.mrb[0].mxu0
      %v2160 = vadd.f32 %v2055, %v2159
      %2161 = vmatprep.mubr.bf16.mxu0 0
      %2162 = vmatmul.mubr.bf16.gmra.mrb[0].mxu0 %v2097
      %v2163 = vpop.f32.mrb[0].mxu0
      %v2164 = vadd.f32 %v2060, %v2163
      %v2165 = vpop.f32.mrb[0].mxu0
      %v2166 = vadd.f32 %v2060, %v2165
      %v2167 = vpop.f32.mrb[0].mxu0
      %v2168 = vadd.f32 %v2065, %v2167
      %v2169 = vpop.f32.mrb[0].mxu0
      %v2170 = vadd.f32 %v2065, %v2169
      %2171 = vdwg.mxu0
      %v2172 = vmax.f32 %v2134, 0.0
      %v2173 = vmax.f32 %v2136, 0.0
      %v2174 = vmax.f32 %v2138, 0.0
      %v2175 = vmax.f32 %v2140, 0.0
      %v2176 = vmax.f32 %v2144, 0.0
      %v2177 = vmax.f32 %v2146, 0.0
      %v2178 = vmax.f32 %v2148, 0.0
      %v2179 = vmax.f32 %v2150, 0.0
      %v2180 = vmax.f32 %v2154, 0.0
      %v2181 = vmax.f32 %v2156, 0.0
      %v2182 = vmax.f32 %v2158, 0.0
      %v2183 = vmax.f32 %v2160, 0.0
      %v2184 = vmax.f32 %v2164, 0.0
      %v2185 = vmax.f32 %v2166, 0.0
      %v2186 = vmax.f32 %v2168, 0.0
      %v2187 = vmax.f32 %v2170, 0.0
      %v2188 = vpack.c.bf16 %v2174, %v2172
      %v2189 = vpack.c.bf16 %v2175, %v2173
      %v2190 = vpack.c.bf16 %v2178, %v2176
      %v2191 = vpack.c.bf16 %v2179, %v2177
      %v2192 = vpack.c.bf16 %v2182, %v2180
      %v2193 = vpack.c.bf16 %v2183, %v2181
      %v2194 = vpack.c.bf16 %v2186, %v2184
      %v2195 = vpack.c.bf16 %v2187, %v2185
      %v2196 = vld [vmem:[%s11] sm:$0xf]
      %v2197 = vld [vmem:[%s11 + $0x4] sm:$0xf]
      %v2198 = vld [vmem:[%s11 + $0x8] sm:$0xf]
      %v2199 = vld [vmem:[%s11 + $0xc] sm:$0xf]
      %v2200 = vld [vmem:[%s11 + $0x10] sm:$0xf]
      %v2201 = vld [vmem:[%s11 + $0x14] sm:$0xf]
      %v2202 = vld [vmem:[%s11 + $0x18] sm:$0xf]
      %v2203 = vld [vmem:[%s11 + $0x1c] sm:$0xf]
      %v2204 = vld [vmem:[%s11 + $0x20] sm:$0xf]
      %v2205 = vld [vmem:[%s11 + $0x24] sm:$0xf]
      %v2206 = vld [vmem:[%s11 + $0x28] sm:$0xf]
      %v2207 = vld [vmem:[%s11 + $0x2c] sm:$0xf]
      %v2208 = vld [vmem:[%s11 + $0x30] sm:$0xf]
      %v2209 = vld [vmem:[%s11 + $0x34] sm:$0xf]
      %v2210 = vld [vmem:[%s11 + $0x38] sm:$0xf]
      %v2211 = vld [vmem:[%s11 + $0x3c] sm:$0xf]
      %v2212 = vld [vmem:[%s11 + $0x40] sm:$0xf]
      %v2230 = vunpack.c.l.b16 %v2196
      %v2231 = vunpack.c.l.b16 %v2197
      %v2232 = vunpack.c.l.b16 %v2198
      %v2233 = vunpack.c.l.b16 %v2199
      %v2234 = vunpack.c.l.b16 %v2200
      %v2235 = vunpack.c.l.b16 %v2201
      %v2236 = vunpack.c.l.b16 %v2202
      %v2237 = vunpack.c.l.b16 %v2203
      %v2238 = vunpack.c.l.b16 %v2204
      %v2239 = vunpack.c.l.b16 %v2205
      %v2240 = vunpack.c.l.b16 %v2206
      %v2241 = vunpack.c.l.b16 %v2207
      %v2242 = vunpack.c.l.b16 %v2208
      %v2243 = vunpack.c.l.b16 %v2209
      %v2244 = vunpack.c.l.b16 %v2210
      %v2245 = vunpack.c.l.b16 %v2211
      %v2246 = vunpack.c.l.b16 %v2212
      %v2247 = vpack.c.b16 %v2231, %v2230
      %v2248 = vpack.c.b16 %v2233, %v2232
      %v2249 = vpack.c.b16 %v2235, %v2234
      %v2250 = vpack.c.b16 %v2237, %v2236
      %v2251 = vpack.c.b16 %v2239, %v2238
      %v2252 = vpack.c.b16 %v2241, %v2240
      %v2253 = vpack.c.b16 %v2243, %v2242
      %v2254 = vpack.c.b16 %v2245, %v2244
      %v2255 = vpack.c.b16 %v2246, %v2246
      %v2257 = vsel %vm1291, %v2247, 0
      %v2260 = vsel %vm1291, %v2248, 0
      %v2263 = vsel %vm1291, %v2249, 0
      %v2266 = vsel %vm1291, %v2250, 0
      %v2269 = vsel %vm1291, %v2251, 0
      %v2272 = vsel %vm1291, %v2252, 0
      %v2275 = vsel %vm1291, %v2253, 0
      %v2278 = vsel %vm1291, %v2254, 0
      %v2281 = vsel %vm1291, %v2255, 0
      %2283 = vmatprep.subr.bf16.mxu0 %v2189
      %2284 = vmatpush1.bf16.msra.mxu0 %v2188
      %2285 = vmatprep.subr.bf16.mxu0 %v2191
      %2286 = vmatpush1.bf16.msra.mxu0 %v2190
      %2287 = vmatprep.subr.bf16.mxu0 %v2193
      %2288 = vmatpush1.bf16.msra.mxu0 %v2192
      %2289 = vmatprep.subr.bf16.mxu0 %v2195
      %2290 = vmatpush1.bf16.msra.mxu0 %v2194
      %2291 = vmatprep.subr.bf16.mxu0 0
      %2292 = vmatpush1.bf16.msra.mxu0 0
      %2293 = vmatprep.subr.bf16.mxu0 0
      %2294 = vmatpush1.bf16.msra.mxu0 0
      %2295 = vmatprep.subr.bf16.mxu0 0
      %2296 = vmatpush1.bf16.msra.mxu0 0
      %2297 = vmatprep.subr.bf16.mxu0 0
      %2298 = vmatpush1.bf16.msra.mxu0 0
      %2299 = vmatprep.subr.bf16.mxu0 0
      %2300 = vmatpush1.bf16.msra.mxu0 0
      %2301 = vmatprep.subr.bf16.mxu0 0
      %2302 = vmatpush1.bf16.msra.mxu0 0
      %2303 = vmatprep.subr.bf16.mxu0 0
      %2304 = vmatpush1.bf16.msra.mxu0 0
      %2305 = vmatprep.subr.bf16.mxu0 0
      %2306 = vmatpush1.bf16.msra.mxu0 0
      %2307 = vmatprep.subr.bf16.mxu0 0
      %2308 = vmatpush1.bf16.msra.mxu0 0
      %2309 = vmatprep.subr.bf16.mxu0 0
      %2310 = vmatpush1.bf16.msra.mxu0 0
      %2311 = vmatprep.subr.bf16.mxu0 0
      %2312 = vmatpush1.bf16.msra.mxu0 0
      %2313 = vmatprep.subr.bf16.mxu0 0
      %2314 = vmatpush1.bf16.msra.mxu0 0
      %2315 = vmatprep.mubr.bf16.mxu0 0
      %2316 = vmatmul.mubr.bf16.gmra.mrb[0].mxu0 %v2257
      %v2317 = vpop.f32.mrb[0].mxu0
      %v2318 = vadd.f32 0.0, %v2317
      %v2319 = vpop.f32.mrb[0].mxu0
      %v2320 = vadd.f32 0.0, %v2319
      %v2321 = vpop.f32.mrb[0].mxu0
      %v2322 = vadd.f32 0.0, %v2321
      %v2323 = vpop.f32.mrb[0].mxu0
      %v2324 = vadd.f32 0.0, %v2323
      %2325 = vmatprep.mubr.bf16.mxu0 0
      %2326 = vmatmul.mubr.bf16.gmra.mrb[0].mxu0 %v2260
      %v2327 = vpop.f32.mrb[0].mxu0
      %v2328 = vadd.f32 0.0, %v2327
      %v2329 = vpop.f32.mrb[0].mxu0
      %v2330 = vadd.f32 0.0, %v2329
      %v2331 = vpop.f32.mrb[0].mxu0
      %v2332 = vadd.f32 0.0, %v2331
      %v2333 = vpop.f32.mrb[0].mxu0
      %v2334 = vadd.f32 0.0, %v2333
      %2335 = vmatprep.mubr.bf16.mxu0 0
      %2336 = vmatmul.mubr.bf16.gmra.mrb[0].mxu0 %v2263
      %v2337 = vpop.f32.mrb[0].mxu0
      %v2338 = vadd.f32 0.0, %v2337
      %v2339 = vpop.f32.mrb[0].mxu0
      %v2340 = vadd.f32 0.0, %v2339
      %v2341 = vpop.f32.mrb[0].mxu0
      %v2342 = vadd.f32 0.0, %v2341
      %v2343 = vpop.f32.mrb[0].mxu0
      %v2344 = vadd.f32 0.0, %v2343
      %2345 = vmatprep.mubr.bf16.mxu0 0
      %2346 = vmatmul.mubr.bf16.gmra.mrb[0].mxu0 %v2266
      %v2347 = vpop.f32.mrb[0].mxu0
      %v2348 = vadd.f32 0.0, %v2347
      %v2349 = vpop.f32.mrb[0].mxu0
      %v2350 = vadd.f32 0.0, %v2349
      %v2351 = vpop.f32.mrb[0].mxu0
      %v2352 = vadd.f32 0.0, %v2351
      %v2353 = vpop.f32.mrb[0].mxu0
      %v2354 = vadd.f32 0.0, %v2353
      %2355 = vmatprep.mubr.bf16.mxu0 0
      %2356 = vmatmul.mubr.bf16.gmra.mrb[0].mxu0 %v2269
      %v2357 = vpop.f32.mrb[0].mxu0
      %v2358 = vadd.f32 0.0, %v2357
      %v2359 = vpop.f32.mrb[0].mxu0
      %v2360 = vadd.f32 0.0, %v2359
      %v2361 = vpop.f32.mrb[0].mxu0
      %v2362 = vadd.f32 0.0, %v2361
      %v2363 = vpop.f32.mrb[0].mxu0
      %v2364 = vadd.f32 0.0, %v2363
      %2365 = vmatprep.mubr.bf16.mxu0 0
      %2366 = vmatmul.mubr.bf16.gmra.mrb[0].mxu0 %v2272
      %v2367 = vpop.f32.mrb[0].mxu0
      %v2368 = vadd.f32 0.0, %v2367
      %v2369 = vpop.f32.mrb[0].mxu0
      %v2370 = vadd.f32 0.0, %v2369
      %v2371 = vpop.f32.mrb[0].mxu0
      %v2372 = vadd.f32 0.0, %v2371
      %v2373 = vpop.f32.mrb[0].mxu0
      %v2374 = vadd.f32 0.0, %v2373
      %2375 = vmatprep.mubr.bf16.mxu0 0
      %2376 = vmatmul.mubr.bf16.gmra.mrb[0].mxu0 %v2275
      %v2377 = vpop.f32.mrb[0].mxu0
      %v2378 = vadd.f32 0.0, %v2377
      %v2379 = vpop.f32.mrb[0].mxu0
      %v2380 = vadd.f32 0.0, %v2379
      %v2381 = vpop.f32.mrb[0].mxu0
      %v2382 = vadd.f32 0.0, %v2381
      %v2383 = vpop.f32.mrb[0].mxu0
      %v2384 = vadd.f32 0.0, %v2383
      %2385 = vmatprep.mubr.bf16.mxu0 0
      %2386 = vmatmul.mubr.bf16.gmra.mrb[0].mxu0 %v2278
      %v2387 = vpop.f32.mrb[0].mxu0
      %v2388 = vadd.f32 0.0, %v2387
      %v2389 = vpop.f32.mrb[0].mxu0
      %v2390 = vadd.f32 0.0, %v2389
      %v2391 = vpop.f32.mrb[0].mxu0
      %v2392 = vadd.f32 0.0, %v2391
      %v2393 = vpop.f32.mrb[0].mxu0
      %v2394 = vadd.f32 0.0, %v2393
      %2395 = vmatprep.mubr.bf16.mxu0 0
      %2396 = vmatmul.mubr.bf16.gmra.mrb[0].mxu0 %v2281
      %v2397 = vpop.f32.mrb[0].mxu0
      %v2398 = vadd.f32 0.0, %v2397
      %v2399 = vpop.f32.mrb[0].mxu0
      %v2400 = vadd.f32 0.0, %v2399
      %v2401 = vpop.f32.mrb[0].mxu0
      %v2402 = vpop.f32.mrb[0].mxu0
      %2403 = vdwg.mxu0
      %v2404 = vld [vmem:[%s12] sm:$0xff]
      %2406 = vset.pattern.permute.xlu0 0
      %2407 = vperm.xlu0 %2406, %v2404
      %v2408 = vpop.permute.xlu0 %2407
      %v2410 = vadd.f32 %v2398, %v2408
      %v2411 = vadd.f32 %v2400, %v2408
      %2412 = vst [vmem:[%s478 + $0x40] sm:$0xff] %v2410
      %2413 = vst [vmem:[%s478 + $0x48] sm:$0xff] %v2411
      %v2414 = vld [vmem:[%s4] sm:$0xff]
      %v2415 = vld [vmem:[%s4 + $0x8] sm:$0xff]
      %v2416 = vld [vmem:[%s4 + $0x10] sm:$0xff]
      %v2417 = vld [vmem:[%s4 + $0x18] sm:$0xff]
      %v2418 = vld [vmem:[%s4 + $0x20] sm:$0xff]
      %v2419 = vld [vmem:[%s4 + $0x28] sm:$0xff]
      %v2420 = vld [vmem:[%s4 + $0x30] sm:$0xff]
      %v2421 = vld [vmem:[%s4 + $0x38] sm:$0xff]
      %v2422 = vld [vmem:[%s4 + $0x40] sm:$0xff]
      %v2423 = vld [vmem:[%s4 + $0x48] sm:$0xff]
      %v2424 = vld [vmem:[%s4 + $0x50] sm:$0xff]
      %v2425 = vld [vmem:[%s4 + $0x58] sm:$0xff]
      %v2426 = vld [vmem:[%s4 + $0x60] sm:$0xff]
      %v2427 = vld [vmem:[%s4 + $0x68] sm:$0xff]
      %v2428 = vld [vmem:[%s4 + $0x70] sm:$0xff]
      %v2429 = vld [vmem:[%s4 + $0x78] sm:$0xff]
      %2431 = vset.pattern.permute.xlu0 0
      %2432 = vperm.xlu0 %2431, %v2414
      %v2433 = vpop.permute.xlu0 %2432
      %2436 = vset.pattern.permute.xlu0 0
      %2437 = vperm.xlu0 %2436, %v2415
      %v2438 = vpop.permute.xlu0 %2437
      %2441 = vset.pattern.permute.xlu0 0
      %2442 = vperm.xlu0 %2441, %v2416
      %v2443 = vpop.permute.xlu0 %2442
      %2446 = vset.pattern.permute.xlu0 0
      %2447 = vperm.xlu0 %2446, %v2417
      %v2448 = vpop.permute.xlu0 %2447
      %2451 = vset.pattern.permute.xlu0 0
      %2452 = vperm.xlu0 %2451, %v2418
      %v2453 = vpop.permute.xlu0 %2452
      %2456 = vset.pattern.permute.xlu0 0
      %2457 = vperm.xlu0 %2456, %v2419
      %v2458 = vpop.permute.xlu0 %2457
      %2461 = vset.pattern.permute.xlu0 0
      %2462 = vperm.xlu0 %2461, %v2420
      %v2463 = vpop.permute.xlu0 %2462
      %2466 = vset.pattern.permute.xlu0 0
      %2467 = vperm.xlu0 %2466, %v2421
      %v2468 = vpop.permute.xlu0 %2467
      %2471 = vset.pattern.permute.xlu0 0
      %2472 = vperm.xlu0 %2471, %v2422
      %v2473 = vpop.permute.xlu0 %2472
      %2476 = vset.pattern.permute.xlu0 0
      %2477 = vperm.xlu0 %2476, %v2423
      %v2478 = vpop.permute.xlu0 %2477
      %2481 = vset.pattern.permute.xlu0 0
      %2482 = vperm.xlu0 %2481, %v2424
      %v2483 = vpop.permute.xlu0 %2482
      %2486 = vset.pattern.permute.xlu0 0
      %2487 = vperm.xlu0 %2486, %v2425
      %v2488 = vpop.permute.xlu0 %2487
      %2491 = vset.pattern.permute.xlu0 0
      %2492 = vperm.xlu0 %2491, %v2426
      %v2493 = vpop.permute.xlu0 %2492
      %2496 = vset.pattern.permute.xlu0 0
      %2497 = vperm.xlu0 %2496, %v2427
      %v2498 = vpop.permute.xlu0 %2497
      %2501 = vset.pattern.permute.xlu0 0
      %2502 = vperm.xlu0 %2501, %v2428
      %v2503 = vpop.permute.xlu0 %2502
      %2506 = vset.pattern.permute.xlu0 0
      %2507 = vperm.xlu0 %2506, %v2429
      %v2508 = vpop.permute.xlu0 %2507
      %v2510 = vadd.f32 %v2318, %v2433
      %v2511 = vadd.f32 %v2320, %v2433
      %v2512 = vadd.f32 %v2322, %v2438
      %v2513 = vadd.f32 %v2324, %v2438
      %v2514 = vadd.f32 %v2328, %v2443
      %v2515 = vadd.f32 %v2330, %v2443
      %v2516 = vadd.f32 %v2332, %v2448
      %v2517 = vadd.f32 %v2334, %v2448
      %v2518 = vadd.f32 %v2338, %v2453
      %v2519 = vadd.f32 %v2340, %v2453
      %v2520 = vadd.f32 %v2342, %v2458
      %v2521 = vadd.f32 %v2344, %v2458
      %v2522 = vadd.f32 %v2348, %v2463
      %v2523 = vadd.f32 %v2350, %v2463
      %v2524 = vadd.f32 %v2352, %v2468
      %v2525 = vadd.f32 %v2354, %v2468
      %v2526 = vadd.f32 %v2358, %v2473
      %v2527 = vadd.f32 %v2360, %v2473
      %v2528 = vadd.f32 %v2362, %v2478
      %v2529 = vadd.f32 %v2364, %v2478
      %v2530 = vadd.f32 %v2368, %v2483
      %v2531 = vadd.f32 %v2370, %v2483
      %v2532 = vadd.f32 %v2372, %v2488
      %v2533 = vadd.f32 %v2374, %v2488
      %v2534 = vadd.f32 %v2378, %v2493
      %v2535 = vadd.f32 %v2380, %v2493
      %v2536 = vadd.f32 %v2382, %v2498
      %v2537 = vadd.f32 %v2384, %v2498
      %v2538 = vadd.f32 %v2388, %v2503
      %v2539 = vadd.f32 %v2390, %v2503
      %v2540 = vadd.f32 %v2392, %v2508
      %v2541 = vadd.f32 %v2394, %v2508
      %v2542 = vmax.f32 %v2510, 0.0
      %v2543 = vmax.f32 %v2511, 0.0
      %v2544 = vmax.f32 %v2512, 0.0
      %v2545 = vmax.f32 %v2513, 0.0
      %v2546 = vmax.f32 %v2514, 0.0
      %v2547 = vmax.f32 %v2515, 0.0
      %v2548 = vmax.f32 %v2516, 0.0
      %v2549 = vmax.f32 %v2517, 0.0
      %v2550 = vmax.f32 %v2518, 0.0
      %v2551 = vmax.f32 %v2519, 0.0
      %v2552 = vmax.f32 %v2520, 0.0
      %v2553 = vmax.f32 %v2521, 0.0
      %v2554 = vmax.f32 %v2522, 0.0
      %v2555 = vmax.f32 %v2523, 0.0
      %v2556 = vmax.f32 %v2524, 0.0
      %v2557 = vmax.f32 %v2525, 0.0
      %v2558 = vmax.f32 %v2526, 0.0
      %v2559 = vmax.f32 %v2527, 0.0
      %v2560 = vmax.f32 %v2528, 0.0
      %v2561 = vmax.f32 %v2529, 0.0
      %v2562 = vmax.f32 %v2530, 0.0
      %v2563 = vmax.f32 %v2531, 0.0
      %v2564 = vmax.f32 %v2532, 0.0
      %v2565 = vmax.f32 %v2533, 0.0
      %v2566 = vmax.f32 %v2534, 0.0
      %v2567 = vmax.f32 %v2535, 0.0
      %v2568 = vmax.f32 %v2536, 0.0
      %v2569 = vmax.f32 %v2537, 0.0
      %v2570 = vmax.f32 %v2538, 0.0
      %v2571 = vmax.f32 %v2539, 0.0
      %v2572 = vmax.f32 %v2540, 0.0
      %v2573 = vmax.f32 %v2541, 0.0
      %v2574 = vpack.c.bf16 %v2544, %v2542
      %v2575 = vpack.c.bf16 %v2545, %v2543
      %v2576 = vpack.c.bf16 %v2548, %v2546
      %v2577 = vpack.c.bf16 %v2549, %v2547
      %v2578 = vpack.c.bf16 %v2552, %v2550
      %v2579 = vpack.c.bf16 %v2553, %v2551
      %v2580 = vpack.c.bf16 %v2556, %v2554
      %v2581 = vpack.c.bf16 %v2557, %v2555
      %v2582 = vpack.c.bf16 %v2560, %v2558
      %v2583 = vpack.c.bf16 %v2561, %v2559
      %v2584 = vpack.c.bf16 %v2564, %v2562
      %v2585 = vpack.c.bf16 %v2565, %v2563
      %v2586 = vpack.c.bf16 %v2568, %v2566
      %v2587 = vpack.c.bf16 %v2569, %v2567
      %v2588 = vpack.c.bf16 %v2572, %v2570
      %v2589 = vpack.c.bf16 %v2573, %v2571
      %v2590 = vld [vmem:[%s6] sm:$0xf]
      %v2591 = vld [vmem:[%s6 + $0x4] sm:$0xf]
      %v2592 = vld [vmem:[%s6 + $0x8] sm:$0xf]
      %v2593 = vld [vmem:[%s6 + $0xc] sm:$0xf]
      %v2594 = vld [vmem:[%s6 + $0x10] sm:$0xf]
      %v2595 = vld [vmem:[%s6 + $0x14] sm:$0xf]
      %v2596 = vld [vmem:[%s6 + $0x18] sm:$0xf]
      %v2597 = vld [vmem:[%s6 + $0x1c] sm:$0xf]
      %v2598 = vld [vmem:[%s6 + $0x20] sm:$0xf]
      %v2608 = vunpack.c.l.b16 %v2590
      %v2609 = vunpack.c.l.b16 %v2591
      %v2610 = vunpack.c.l.b16 %v2592
      %v2611 = vunpack.c.l.b16 %v2593
      %v2612 = vunpack.c.l.b16 %v2594
      %v2613 = vunpack.c.l.b16 %v2595
      %v2614 = vunpack.c.l.b16 %v2596
      %v2615 = vunpack.c.l.b16 %v2597
      %v2616 = vunpack.c.l.b16 %v2598
      %v2617 = vpack.c.b16 %v2609, %v2608
      %v2618 = vpack.c.b16 %v2611, %v2610
      %v2619 = vpack.c.b16 %v2613, %v2612
      %v2620 = vpack.c.b16 %v2615, %v2614
      %v2621 = vpack.c.b16 %v2616, %v2616
      %2627 = vmatprep.subr.bf16.mxu0 %v2575
      %2628 = vmatpush1.bf16.msra.mxu0 %v2574
      %2629 = vmatprep.subr.bf16.mxu0 %v2577
      %2630 = vmatpush1.bf16.msra.mxu0 %v2576
      %2631 = vmatprep.subr.bf16.mxu0 %v2579
      %2632 = vmatpush1.bf16.msra.mxu0 %v2578
      %2633 = vmatprep.subr.bf16.mxu0 %v2581
      %2634 = vmatpush1.bf16.msra.mxu0 %v2580
      %2635 = vmatprep.subr.bf16.mxu0 %v2583
      %2636 = vmatpush1.bf16.msra.mxu0 %v2582
      %2637 = vmatprep.subr.bf16.mxu0 %v2585
      %2638 = vmatpush1.bf16.msra.mxu0 %v2584
      %2639 = vmatprep.subr.bf16.mxu0 %v2587
      %2640 = vmatpush1.bf16.msra.mxu0 %v2586
      %2641 = vmatprep.subr.bf16.mxu0 %v2589
      %2642 = vmatpush1.bf16.msra.mxu0 %v2588
      %2643 = vmatprep.subr.bf16.mxu0 0
      %2644 = vmatpush1.bf16.msra.mxu0 0
      %2645 = vmatprep.subr.bf16.mxu0 0
      %2646 = vmatpush1.bf16.msra.mxu0 0
      %2647 = vmatprep.subr.bf16.mxu0 0
      %2648 = vmatpush1.bf16.msra.mxu0 0
      %2649 = vmatprep.subr.bf16.mxu0 0
      %2650 = vmatpush1.bf16.msra.mxu0 0
      %2651 = vmatprep.subr.bf16.mxu0 0
      %2652 = vmatpush1.bf16.msra.mxu0 0
      %2653 = vmatprep.subr.bf16.mxu0 0
      %2654 = vmatpush1.bf16.msra.mxu0 0
      %2655 = vmatprep.subr.bf16.mxu0 0
      %2656 = vmatpush1.bf16.msra.mxu0 0
      %2657 = vmatprep.subr.bf16.mxu0 0
      %2658 = vmatpush1.bf16.msra.mxu0 0
      %2659 = vmatprep.mubr.bf16.mxu0 0
      %2660 = vmatmul.mubr.bf16.gmra.mrb[0].mxu0 %v2617
      %v2661 = vpop.f32.mrb[0].mxu0
      %v2662 = vadd.f32 0.0, %v2661
      %v2663 = vpop.f32.mrb[0].mxu0
      %v2664 = vadd.f32 0.0, %v2663
      %v2665 = vpop.f32.mrb[0].mxu0
      %v2666 = vadd.f32 0.0, %v2665
      %v2667 = vpop.f32.mrb[0].mxu0
      %v2668 = vadd.f32 0.0, %v2667
      %2669 = vmatprep.mubr.bf16.mxu0 0
      %2670 = vmatmul.mubr.bf16.gmra.mrb[0].mxu0 %v2618
      %v2671 = vpop.f32.mrb[0].mxu0
      %v2672 = vadd.f32 0.0, %v2671
      %v2673 = vpop.f32.mrb[0].mxu0
      %v2674 = vadd.f32 0.0, %v2673
      %v2675 = vpop.f32.mrb[0].mxu0
      %v2676 = vadd.f32 0.0, %v2675
      %v2677 = vpop.f32.mrb[0].mxu0
      %v2678 = vadd.f32 0.0, %v2677
      %2679 = vmatprep.mubr.bf16.mxu0 0
      %2680 = vmatmul.mubr.bf16.gmra.mrb[0].mxu0 %v2619
      %v2681 = vpop.f32.mrb[0].mxu0
      %v2682 = vadd.f32 0.0, %v2681
      %v2683 = vpop.f32.mrb[0].mxu0
      %v2684 = vadd.f32 0.0, %v2683
      %v2685 = vpop.f32.mrb[0].mxu0
      %v2686 = vadd.f32 0.0, %v2685
      %v2687 = vpop.f32.mrb[0].mxu0
      %v2688 = vadd.f32 0.0, %v2687
      %2689 = vmatprep.mubr.bf16.mxu0 0
      %2690 = vmatmul.mubr.bf16.gmra.mrb[0].mxu0 %v2620
      %v2691 = vpop.f32.mrb[0].mxu0
      %v2692 = vadd.f32 0.0, %v2691
      %v2693 = vpop.f32.mrb[0].mxu0
      %v2694 = vadd.f32 0.0, %v2693
      %v2695 = vpop.f32.mrb[0].mxu0
      %v2696 = vadd.f32 0.0, %v2695
      %v2697 = vpop.f32.mrb[0].mxu0
      %v2698 = vadd.f32 0.0, %v2697
      %2699 = vmatprep.mubr.bf16.mxu0 0
      %2700 = vmatmul.mubr.bf16.gmra.mrb[0].mxu0 %v2621
      %v2701 = vpop.f32.mrb[0].mxu0
      %v2702 = vadd.f32 0.0, %v2701
      %v2703 = vpop.f32.mrb[0].mxu0
      %v2704 = vadd.f32 0.0, %v2703
      %v2705 = vpop.f32.mrb[0].mxu0
      %v2706 = vpop.f32.mrb[0].mxu0
      %2707 = vdwg.mxu0
      %v2708 = vld [vmem:[%s8] sm:$0xff]
      %2710 = vset.pattern.permute.xlu0 0
      %2711 = vperm.xlu0 %2710, %v2708
      %v2712 = vpop.permute.xlu0 %2711
      %v2714 = vadd.f32 %v2702, %v2712
      %v2715 = vadd.f32 %v2704, %v2712
      %2716 = vst [vmem:[%s478 + $0x50] sm:$0xff] %v2714
      %2717 = vst [vmem:[%s478 + $0x58] sm:$0xff] %v2715
      %v2718 = vld [vmem:[%s7] sm:$0xff]
      %v2719 = vld [vmem:[%s7 + $0x8] sm:$0xff]
      %v2720 = vld [vmem:[%s7 + $0x10] sm:$0xff]
      %v2721 = vld [vmem:[%s7 + $0x18] sm:$0xff]
      %v2722 = vld [vmem:[%s7 + $0x20] sm:$0xff]
      %v2723 = vld [vmem:[%s7 + $0x28] sm:$0xff]
      %v2724 = vld [vmem:[%s7 + $0x30] sm:$0xff]
      %v2725 = vld [vmem:[%s7 + $0x38] sm:$0xff]
      %2727 = vset.pattern.permute.xlu0 0
      %2728 = vperm.xlu0 %2727, %v2718
      %v2729 = vpop.permute.xlu0 %2728
      %2732 = vset.pattern.permute.xlu0 0
      %2733 = vperm.xlu0 %2732, %v2719
      %v2734 = vpop.permute.xlu0 %2733
      %2737 = vset.pattern.permute.xlu0 0
      %2738 = vperm.xlu0 %2737, %v2720
      %v2739 = vpop.permute.xlu0 %2738
      %2742 = vset.pattern.permute.xlu0 0
      %2743 = vperm.xlu0 %2742, %v2721
      %v2744 = vpop.permute.xlu0 %2743
      %2747 = vset.pattern.permute.xlu0 0
      %2748 = vperm.xlu0 %2747, %v2722
      %v2749 = vpop.permute.xlu0 %2748
      %2752 = vset.pattern.permute.xlu0 0
      %2753 = vperm.xlu0 %2752, %v2723
      %v2754 = vpop.permute.xlu0 %2753
      %2757 = vset.pattern.permute.xlu0 0
      %2758 = vperm.xlu0 %2757, %v2724
      %v2759 = vpop.permute.xlu0 %2758
      %2762 = vset.pattern.permute.xlu0 0
      %2763 = vperm.xlu0 %2762, %v2725
      %v2764 = vpop.permute.xlu0 %2763
      %v2766 = vadd.f32 %v2662, %v2729
      %v2767 = vadd.f32 %v2664, %v2729
      %v2768 = vadd.f32 %v2666, %v2734
      %v2769 = vadd.f32 %v2668, %v2734
      %v2770 = vadd.f32 %v2672, %v2739
      %v2771 = vadd.f32 %v2674, %v2739
      %v2772 = vadd.f32 %v2676, %v2744
      %v2773 = vadd.f32 %v2678, %v2744
      %v2774 = vadd.f32 %v2682, %v2749
      %v2775 = vadd.f32 %v2684, %v2749
      %v2776 = vadd.f32 %v2686, %v2754
      %v2777 = vadd.f32 %v2688, %v2754
      %v2778 = vadd.f32 %v2692, %v2759
      %v2779 = vadd.f32 %v2694, %v2759
      %v2780 = vadd.f32 %v2696, %v2764
      %v2781 = vadd.f32 %v2698, %v2764
      %v2782 = vmax.f32 %v2766, 0.0
      %v2783 = vmax.f32 %v2767, 0.0
      %v2784 = vmax.f32 %v2768, 0.0
      %v2785 = vmax.f32 %v2769, 0.0
      %v2786 = vmax.f32 %v2770, 0.0
      %v2787 = vmax.f32 %v2771, 0.0
      %v2788 = vmax.f32 %v2772, 0.0
      %v2789 = vmax.f32 %v2773, 0.0
      %v2790 = vmax.f32 %v2774, 0.0
      %v2791 = vmax.f32 %v2775, 0.0
      %v2792 = vmax.f32 %v2776, 0.0
      %v2793 = vmax.f32 %v2777, 0.0
      %v2794 = vmax.f32 %v2778, 0.0
      %v2795 = vmax.f32 %v2779, 0.0
      %v2796 = vmax.f32 %v2780, 0.0
      %v2797 = vmax.f32 %v2781, 0.0
      %v2798 = vpack.c.bf16 %v2784, %v2782
      %v2799 = vpack.c.bf16 %v2785, %v2783
      %v2800 = vpack.c.bf16 %v2788, %v2786
      %v2801 = vpack.c.bf16 %v2789, %v2787
      %v2802 = vpack.c.bf16 %v2792, %v2790
      %v2803 = vpack.c.bf16 %v2793, %v2791
      %v2804 = vpack.c.bf16 %v2796, %v2794
      %v2805 = vpack.c.bf16 %v2797, %v2795
      %v2806 = vld [vmem:[%s9] sm:$0xf]
      %v2807 = vld [vmem:[%s9 + $0x4] sm:$0xf]
      %v2808 = vld [vmem:[%s9 + $0x8] sm:$0xf]
      %v2809 = vld [vmem:[%s9 + $0xc] sm:$0xf]
      %v2810 = vld [vmem:[%s9 + $0x10] sm:$0xf]
      %v2811 = vld [vmem:[%s9 + $0x14] sm:$0xf]
      %v2812 = vld [vmem:[%s9 + $0x18] sm:$0xf]
      %v2813 = vld [vmem:[%s9 + $0x1c] sm:$0xf]
      %v2814 = vld [vmem:[%s10] sm:$0xff]
      %v2815 = vld [vmem:[%s10 + $0x8] sm:$0xff]
      %v2816 = vld [vmem:[%s10 + $0x10] sm:$0xff]
      %v2817 = vld [vmem:[%s10 + $0x18] sm:$0xff]
      %v2818 = vld [vmem:[%s10 + $0x20] sm:$0xff]
      %v2819 = vld [vmem:[%s10 + $0x28] sm:$0xff]
      %v2820 = vld [vmem:[%s10 + $0x30] sm:$0xff]
      %v2821 = vld [vmem:[%s10 + $0x38] sm:$0xff]
      %2823 = vset.pattern.permute.xlu0 0
      %2824 = vperm.xlu0 %2823, %v2814
      %v2825 = vpop.permute.xlu0 %2824
      %2828 = vset.pattern.permute.xlu0 0
      %2829 = vperm.xlu0 %2828, %v2815
      %v2830 = vpop.permute.xlu0 %2829
      %2833 = vset.pattern.permute.xlu0 0
      %2834 = vperm.xlu0 %2833, %v2816
      %v2835 = vpop.permute.xlu0 %2834
      %2838 = vset.pattern.permute.xlu0 0
      %2839 = vperm.xlu0 %2838, %v2817
      %v2840 = vpop.permute.xlu0 %2839
      %2843 = vset.pattern.permute.xlu0 0
      %2844 = vperm.xlu0 %2843, %v2818
      %v2845 = vpop.permute.xlu0 %2844
      %2848 = vset.pattern.permute.xlu0 0
      %2849 = vperm.xlu0 %2848, %v2819
      %v2850 = vpop.permute.xlu0 %2849
      %2853 = vset.pattern.permute.xlu0 0
      %2854 = vperm.xlu0 %2853, %v2820
      %v2855 = vpop.permute.xlu0 %2854
      %2858 = vset.pattern.permute.xlu0 0
      %2859 = vperm.xlu0 %2858, %v2821
      %v2860 = vpop.permute.xlu0 %2859
      %v2870 = vunpack.c.l.b16 %v2806
      %v2871 = vunpack.c.l.b16 %v2807
      %v2872 = vunpack.c.l.b16 %v2808
      %v2873 = vunpack.c.l.b16 %v2809
      %v2874 = vunpack.c.l.b16 %v2810
      %v2875 = vunpack.c.l.b16 %v2811
      %v2876 = vunpack.c.l.b16 %v2812
      %v2877 = vunpack.c.l.b16 %v2813
      %v2878 = vpack.c.b16 %v2871, %v2870
      %v2879 = vpack.c.b16 %v2873, %v2872
      %v2880 = vpack.c.b16 %v2875, %v2874
      %v2881 = vpack.c.b16 %v2877, %v2876
      %v2883 = vsel %vm1291, %v2878, 0
      %v2886 = vsel %vm1291, %v2879, 0
      %v2889 = vsel %vm1291, %v2880, 0
      %v2892 = vsel %vm1291, %v2881, 0
      %2894 = vmatprep.subr.bf16.mxu0 %v2799
      %2895 = vmatpush1.bf16.msra.mxu0 %v2798
      %2896 = vmatprep.subr.bf16.mxu0 %v2801
      %2897 = vmatpush1.bf16.msra.mxu0 %v2800
      %2898 = vmatprep.subr.bf16.mxu0 %v2803
      %2899 = vmatpush1.bf16.msra.mxu0 %v2802
      %2900 = vmatprep.subr.bf16.mxu0 %v2805
      %2901 = vmatpush1.bf16.msra.mxu0 %v2804
      %2902 = vmatprep.subr.bf16.mxu0 0
      %2903 = vmatpush1.bf16.msra.mxu0 0
      %2904 = vmatprep.subr.bf16.mxu0 0
      %2905 = vmatpush1.bf16.msra.mxu0 0
      %2906 = vmatprep.subr.bf16.mxu0 0
      %2907 = vmatpush1.bf16.msra.mxu0 0
      %2908 = vmatprep.subr.bf16.mxu0 0
      %2909 = vmatpush1.bf16.msra.mxu0 0
      %2910 = vmatprep.subr.bf16.mxu0 0
      %2911 = vmatpush1.bf16.msra.mxu0 0
      %2912 = vmatprep.subr.bf16.mxu0 0
      %2913 = vmatpush1.bf16.msra.mxu0 0
      %2914 = vmatprep.subr.bf16.mxu0 0
      %2915 = vmatpush1.bf16.msra.mxu0 0
      %2916 = vmatprep.subr.bf16.mxu0 0
      %2917 = vmatpush1.bf16.msra.mxu0 0
      %2918 = vmatprep.subr.bf16.mxu0 0
      %2919 = vmatpush1.bf16.msra.mxu0 0
      %2920 = vmatprep.subr.bf16.mxu0 0
      %2921 = vmatpush1.bf16.msra.mxu0 0
      %2922 = vmatprep.subr.bf16.mxu0 0
      %2923 = vmatpush1.bf16.msra.mxu0 0
      %2924 = vmatprep.subr.bf16.mxu0 0
      %2925 = vmatpush1.bf16.msra.mxu0 0
      %2926 = vmatprep.mubr.bf16.mxu0 0
      %2927 = vmatmul.mubr.bf16.gmra.mrb[0].mxu0 %v2883
      %v2928 = vpop.f32.mrb[0].mxu0
      %v2929 = vadd.f32 %v2825, %v2928
      %v2930 = vpop.f32.mrb[0].mxu0
      %v2931 = vadd.f32 %v2825, %v2930
      %v2932 = vpop.f32.mrb[0].mxu0
      %v2933 = vadd.f32 %v2830, %v2932
      %v2934 = vpop.f32.mrb[0].mxu0
      %v2935 = vadd.f32 %v2830, %v2934
      %2936 = vmatprep.mubr.bf16.mxu0 0
      %2937 = vmatmul.mubr.bf16.gmra.mrb[0].mxu0 %v2886
      %v2938 = vpop.f32.mrb[0].mxu0
      %v2939 = vadd.f32 %v2835, %v2938
      %v2940 = vpop.f32.mrb[0].mxu0
      %v2941 = vadd.f32 %v2835, %v2940
      %v2942 = vpop.f32.mrb[0].mxu0
      %v2943 = vadd.f32 %v2840, %v2942
      %v2944 = vpop.f32.mrb[0].mxu0
      %v2945 = vadd.f32 %v2840, %v2944
      %2946 = vmatprep.mubr.bf16.mxu0 0
      %2947 = vmatmul.mubr.bf16.gmra.mrb[0].mxu0 %v2889
      %v2948 = vpop.f32.mrb[0].mxu0
      %v2949 = vadd.f32 %v2845, %v2948
      %v2950 = vpop.f32.mrb[0].mxu0
      %v2951 = vadd.f32 %v2845, %v2950
      %v2952 = vpop.f32.mrb[0].mxu0
      %v2953 = vadd.f32 %v2850, %v2952
      %v2954 = vpop.f32.mrb[0].mxu0
      %v2955 = vadd.f32 %v2850, %v2954
      %2956 = vmatprep.mubr.bf16.mxu0 0
      %2957 = vmatmul.mubr.bf16.gmra.mrb[0].mxu0 %v2892
      %v2958 = vpop.f32.mrb[0].mxu0
      %v2959 = vadd.f32 %v2855, %v2958
      %v2960 = vpop.f32.mrb[0].mxu0
      %v2961 = vadd.f32 %v2855, %v2960
      %v2962 = vpop.f32.mrb[0].mxu0
      %v2963 = vadd.f32 %v2860, %v2962
      %v2964 = vpop.f32.mrb[0].mxu0
      %v2965 = vadd.f32 %v2860, %v2964
      %2966 = vdwg.mxu0
      %v2967 = vmax.f32 %v2929, 0.0
      %v2968 = vmax.f32 %v2931, 0.0
      %v2969 = vmax.f32 %v2933, 0.0
      %v2970 = vmax.f32 %v2935, 0.0
      %v2971 = vmax.f32 %v2939, 0.0
      %v2972 = vmax.f32 %v2941, 0.0
      %v2973 = vmax.f32 %v2943, 0.0
      %v2974 = vmax.f32 %v2945, 0.0
      %v2975 = vmax.f32 %v2949, 0.0
      %v2976 = vmax.f32 %v2951, 0.0
      %v2977 = vmax.f32 %v2953, 0.0
      %v2978 = vmax.f32 %v2955, 0.0
      %v2979 = vmax.f32 %v2959, 0.0
      %v2980 = vmax.f32 %v2961, 0.0
      %v2981 = vmax.f32 %v2963, 0.0
      %v2982 = vmax.f32 %v2965, 0.0
      %v2983 = vpack.c.bf16 %v2969, %v2967
      %v2984 = vpack.c.bf16 %v2970, %v2968
      %v2985 = vpack.c.bf16 %v2973, %v2971
      %v2986 = vpack.c.bf16 %v2974, %v2972
      %v2987 = vpack.c.bf16 %v2977, %v2975
      %v2988 = vpack.c.bf16 %v2978, %v2976
      %v2989 = vpack.c.bf16 %v2981, %v2979
      %v2990 = vpack.c.bf16 %v2982, %v2980
      %v2991 = vld [vmem:[%s11 + $0x40] sm:$0xf]
      %v2992 = vld [vmem:[%s12] sm:$0xff]
      %2994 = vset.pattern.permute.xlu0 0
      %2995 = vperm.xlu0 %2994, %v2992
      %v2996 = vpop.permute.xlu0 %2995
      %v2999 = vsel %vm1291, %v2991, 0
      %3001 = vmatprep.subr.bf16.mxu0 %v2984
      %3002 = vmatpush1.bf16.msra.mxu0 %v2983
      %3003 = vmatprep.subr.bf16.mxu0 %v2986
      %3004 = vmatpush1.bf16.msra.mxu0 %v2985
      %3005 = vmatprep.subr.bf16.mxu0 %v2988
      %3006 = vmatpush1.bf16.msra.mxu0 %v2987
      %3007 = vmatprep.subr.bf16.mxu0 %v2990
      %3008 = vmatpush1.bf16.msra.mxu0 %v2989
      %3009 = vmatprep.subr.bf16.mxu0 0
      %3010 = vmatpush1.bf16.msra.mxu0 0
      %3011 = vmatprep.subr.bf16.mxu0 0
      %3012 = vmatpush1.bf16.msra.mxu0 0
      %3013 = vmatprep.subr.bf16.mxu0 0
      %3014 = vmatpush1.bf16.msra.mxu0 0
      %3015 = vmatprep.subr.bf16.mxu0 0
      %3016 = vmatpush1.bf16.msra.mxu0 0
      %3017 = vmatprep.subr.bf16.mxu0 0
      %3018 = vmatpush1.bf16.msra.mxu0 0
      %3019 = vmatprep.subr.bf16.mxu0 0
      %3020 = vmatpush1.bf16.msra.mxu0 0
      %3021 = vmatprep.subr.bf16.mxu0 0
      %3022 = vmatpush1.bf16.msra.mxu0 0
      %3023 = vmatprep.subr.bf16.mxu0 0
      %3024 = vmatpush1.bf16.msra.mxu0 0
      %3025 = vmatprep.subr.bf16.mxu0 0
      %3026 = vmatpush1.bf16.msra.mxu0 0
      %3027 = vmatprep.subr.bf16.mxu0 0
      %3028 = vmatpush1.bf16.msra.mxu0 0
      %3029 = vmatprep.subr.bf16.mxu0 0
      %3030 = vmatpush1.bf16.msra.mxu0 0
      %3031 = vmatprep.subr.bf16.mxu0 0
      %3032 = vmatpush1.bf16.msra.mxu0 0
      %3033 = vmatprep.mubr.bf16.mxu0 0
      %3034 = vmatmul.mubr.bf16.gmra.mrb[0].mxu0 %v2999
      %v3035 = vpop.f32.mrb[0].mxu0
      %v3036 = vadd.f32 %v2996, %v3035
      %v3037 = vpop.f32.mrb[0].mxu0
      %v3038 = vadd.f32 %v2996, %v3037
      %v3039 = vpop.f32.mrb[0].mxu0
      %v3040 = vpop.f32.mrb[0].mxu0
      %3041 = vdwg.mxu0
      %3042 = vst [vmem:[%s478 + $0x60] sm:$0xff] %v3036
      %3043 = vst [vmem:[%s478 + $0x68] sm:$0xff] %v3038
      %s3044 = smul.u32 2, %s29
      %p3045 = scmp.lt.s32.totalorder %s28, 1
      %s3046 = scalar_select %p3045, %s28, 1
      %p3047 = scmp.lt.s32.totalorder %s3044, 1
      %s3048 = scalar_select %p3047, %s3044, 1
      %s3049 = smul.addr %s3046, 14
      %s3050 = sadd.s32 %s3048, %s3049
      %s3051 = smul.addr %s3050, 8
      %s3052 = scalar_lea.vmem %s13, %s3051
      // Predicated region
      $region73: #{stacked_group_network_forward.1} parent=71 // pred_check
        %p3053 = pneg %p336
      $region74: #{stacked_group_network_forward.1} parent=71 // pred_check_branch
        %3055 = sbr.rel (%p3053) target = $region76
      $region75: #{stacked_group_network_forward.1} parent=71 // pred_region
        %s3056 = smul.u32 2, %s29
      $region76: #{stacked_group_network_forward.1} parent=71 // pred_fallthru
        _
    $region72: #{stacked_group_network_forward.1} parent=5 // pred_fallthru
      _
    %p3057 = scmp.le.s32.totalorder 2, %s19
    // Predicated region
    $region77: #{stacked_group_network_forward.1} parent=5 // pred_check
      %p3058 = pneg %p3057
    $region78: #{stacked_group_network_forward.1} parent=5 // pred_check_branch
      %3060 = sbr.rel (%p3058) target = $region80
    $region79: #{stacked_group_network_forward.1} parent=5 // pred_region
      %s3061 = ssub.s32 %s19, 2
      // Predicated region
      $region81: #{stacked_group_network_forward.1} parent=79 // pred_check
        %p3062 = pneg %p342
      $region82: #{stacked_group_network_forward.1} parent=79 // pred_check_branch
        %3064 = sbr.rel (%p3062) target = $region84
      $region83: #{stacked_group_network_forward.1} parent=79 // pred_region
        %s3065 = smul.u32 2, %s31
        %p3066 = scmp.lt.s32.totalorder %s30, 1
        %s3067 = scalar_select %p3066, %s30, 1
        %p3068 = scmp.lt.s32.totalorder %s3065, 1
        %s3069 = scalar_select %p3068, %s3065, 1
        %s3070 = smul.addr %s3067, 14
        %s3071 = sadd.s32 %s3069, %s3070
        %s3072 = smul.addr %s3071, 8
        %s3073 = scalar_lea.vmem %s13, %s3072
      $region84: #{stacked_group_network_forward.1} parent=79 // pred_fallthru
        _
    $region80: #{stacked_group_network_forward.1} parent=5 // pred_fallthru
      _
  $region6: #{stacked_group_network_forward.1} parent=0 // loop_footer
    %s23 = sadd.s32 1, %s19
  $region7: #{stacked_group_network_forward.1} parent=0 // loop_footer_branch
    %18 = sbr.rel target = $region3
  $region8: #{stacked_group_network_forward.1} parent=0 // loop_exit
    _

</llo_original>
